<compile_context>
chip_gen: v7x
topology: tpu7x:2x2x1
jax: 0.10.0
libtpu: 0.0.40
codegen_flags: <defaults>
</compile_context>

<pallas_src>
import functools

import numpy as np

import jax
import jax.numpy as jnp
from jax import lax
from jax.experimental import pallas as pl
from jax.experimental.pallas import tpu as pltpu

_OUT_LANES = 128  # lane-dense fused fc2 output width


# ----------------------------------------------------------------------------
# The fused Pallas kernel (one batch element per grid step)
# ----------------------------------------------------------------------------

def _dueling_dqn_kernel(x_ref,
                        s1_ref, w1_ref, b1_ref,
                        s2_ref, w2_ref, b2_ref,
                        s3_ref, w3_ref, b3_ref,
                        wf1_ref, bf1_ref,
                        wf2_ref, bf2_ref,
                        o_ref, *, num_actions):
    """Whole Dueling_DQN forward for one batch element, fully VMEM-resident."""

    def conv(x, sel_ref, w_ref, b_ref):
        # out = relu( sum_t (sel[t] @ x) @ w[t] + b )
        #   sel[t]: constant 0/1 row-gather (im2col incl. zero padding)
        #   w[t]  : per-tap weight slice (CI, CO)
        xc = x.astype(w_ref.dtype)
        acc = jnp.zeros((sel_ref.shape[1], w_ref.shape[2]), jnp.float32)
        for t in range(w_ref.shape[0]):                 # static unroll (<= 9 taps)
            g = jnp.dot(sel_ref[t], xc)                 # gather (exact, 0/1 matrix)
            acc = acc + jnp.dot(g, w_ref[t], preferred_element_type=jnp.float32)
        return jnp.maximum(acc + b_ref[...], 0.0)

    x = x_ref[0]                                        # (H*W, C) pixel-major
    y1 = conv(x, s1_ref, w1_ref, b1_ref)                # (16, 32)
    y2 = conv(y1, s2_ref, w2_ref, b2_ref)               # (16, 64)  rows >= 9 padding
    y3 = conv(y2, s3_ref, w3_ref, b3_ref)               # (8, 64)   rows >= 4 padding

    # Flatten (PyTorch NCHW order, folded into wf1's row grouping) + fused
    # fc1 (adv | val): h = relu( sum_p y3[p] @ wf1[p] + bfc1 ).
    h = jnp.zeros((1, wf1_ref.shape[2]), jnp.float32)
    for p in range(wf1_ref.shape[0]):                   # static unroll (4 positions)
        yp = y3[p:p + 1, :].astype(wf1_ref.dtype)       # (1, 64)
        h = h + jnp.dot(yp, wf1_ref[p], preferred_element_type=jnp.float32)
    h = jnp.maximum(h + bf1_ref[...], 0.0)              # (1, 256)

    # Lane-dense fused fc2: lanes [0..A-1] = advantage, lane [A] = value.
    y = jnp.dot(h.astype(wf2_ref.dtype), wf2_ref[...],
                preferred_element_type=jnp.float32) + bf2_ref[...]   # (1, 128)

    lane = lax.broadcasted_iota(jnp.int32, y.shape, 1)
    adv_mask = (lane < num_actions).astype(jnp.float32)
    adv = y * adv_mask
    val = jnp.sum(jnp.where(lane == num_actions, y, 0.0), axis=-1, keepdims=True)
    mean_adv = jnp.sum(adv, axis=-1, keepdims=True) * (1.0 / num_actions)
    o_ref[0] = adv_mask * (adv + val - mean_adv)        # padded lanes stay 0


def dueling_dqn_forward(x, packed, num_actions):
    """x: (B, C, H, W) float32 NCHW -> (B, num_actions)."""
    B, C, H, W = x.shape
    cdt = packed["w1"].dtype
    # Only wrapper-side runtime glue: channels onto lanes, pixel-major rows.
    x2 = jnp.transpose(x, (0, 2, 3, 1)).reshape(B, H * W, C).astype(cdt)

    const_names = ["s1", "w1", "b1", "s2", "w2", "b2", "s3", "w3", "b3",
                   "wfc1", "bfc1", "wfc2", "bfc2"]
    consts = [packed[k] for k in const_names]

    def const_spec(a):
        # Whole-array VMEM block, constant index -> fetched once, resident.
        return pl.BlockSpec(a.shape, lambda b, _n=a.ndim: (0,) * _n)

    in_specs = ([pl.BlockSpec((1, H * W, C), lambda b: (b, 0, 0))]
                + [const_spec(a) for a in consts])

    out3 = pl.pallas_call(
        functools.partial(_dueling_dqn_kernel, num_actions=num_actions),
        out_shape=jax.ShapeDtypeStruct((B, 1, _OUT_LANES), jnp.float32),
        grid=(B,),
        in_specs=in_specs,
        out_specs=pl.BlockSpec((1, 1, _OUT_LANES), lambda b: (b, 0, 0)),
        compiler_params=pltpu.CompilerParams(
            dimension_semantics=("parallel",)),
    )(x2, *consts)
    return out3[:, 0, :num_actions]


# ----------------------------------------------------------------------------
# One-time, batch-independent parameter packing (zero runtime cost)
# ----------------------------------------------------------------------------

def _round_up(n, m):
    return ((n + m - 1) // m) * m


def _conv_out(n, k, s, p):
    return (n + 2 * p - k) // s + 1


def _conv_selection(ih, iw, kh, kw, stride, pad, in_rows):
    """Per-tap 0/1 row-gather matrices (im2col + padding), batch-independent.

    Output rows are padded up to a multiple of 8 (sublane tile); padded rows
    are all-zero and never referenced downstream.
    """
    oh, ow = _conv_out(ih, kh, stride, pad), _conv_out(iw, kw, stride, pad)
    orows = _round_up(oh * ow, 8)
    sel = np.zeros((kh * kw, orows, in_rows), np.float32)
    for i in range(oh):
        for j in range(ow):
            r = i * ow + j
            for dh in range(kh):
                for dw in range(kw):
                    ii, jj = i * stride - pad + dh, j * stride - pad + dw
                    if 0 <= ii < ih and 0 <= jj < iw:
                        sel[dh * kw + dw, r, ii * iw + jj] = 1.0
    return sel, oh, ow, orows


def _conv_weight_taps(w):
    # PyTorch (CO, CI, KH, KW) -> per-tap (KH*KW, CI, CO), tap index = kh*KW+kw
    co, ci, kh, kw = w.shape
    return jnp.transpose(w, (2, 3, 1, 0)).reshape(kh * kw, ci, co)


def prepack_params(params, num_actions, in_hw=8, compute_dtype=jnp.float32):
    A = num_actions
    assert A + 1 <= _OUT_LANES, "fused fc2 needs num_actions + 1 <= 128"

    s1, oh1, ow1, r1 = _conv_selection(in_hw, in_hw, 3, 3, 2, 1, in_rows=in_hw * in_hw)
    s2, oh2, ow2, r2 = _conv_selection(oh1, ow1, 2, 2, 1, 0, in_rows=r1)
    s3, oh3, ow3, r3 = _conv_selection(oh2, ow2, 2, 2, 1, 0, in_rows=r2)

    co3 = params["conv3_w"].shape[0]
    npos = oh3 * ow3
    assert co3 * npos == params["fc1_adv_w"].shape[1], "flatten size must match fc1"

    # fc1 (adv | val) fused; rows regrouped per spatial position so the PyTorch
    # NCHW flatten order (index = c*npos + p) is reproduced exactly.
    wf1 = jnp.concatenate([params["fc1_adv_w"].T, params["fc1_val_w"].T], axis=1)  # (256, 256)
    wf1 = wf1.reshape(co3, npos, wf1.shape[1]).transpose(1, 0, 2)                  # (npos, co3, 256)
    bf1 = jnp.concatenate([params["fc1_adv_b"], params["fc1_val_b"]]).reshape(1, -1)

    # Lane-dense fused fc2: 128 output lanes; lanes [0..A-1] adv, lane [A] val.
    hdim = params["fc2_adv_w"].shape[1]
    wf2 = np.zeros((2 * hdim, _OUT_LANES), np.float32)
    wf2[:hdim, :A] = np.asarray(params["fc2_adv_w"]).T
    wf2[hdim:, A] = np.asarray(params["fc2_val_w"])[0]
    bf2 = np.zeros((1, _OUT_LANES), np.float32)
    bf2[0, :A] = np.asarray(params["fc2_adv_b"])
    bf2[0, A] = np.asarray(params["fc2_val_b"])[0]

    c = lambda a: jnp.asarray(a, compute_dtype)   # matmul operands
    f = lambda a: jnp.asarray(a, jnp.float32)     # biases (added post f32 accum)
    return dict(
        s1=c(s1), w1=c(_conv_weight_taps(params["conv1_w"])), b1=f(params["conv1_b"].reshape(1, -1)),
        s2=c(s2), w2=c(_conv_weight_taps(params["conv2_w"])), b2=f(params["conv2_b"].reshape(1, -1)),
        s3=c(s3), w3=c(_conv_weight_taps(params["conv3_w"])), b3=f(params["conv3_b"].reshape(1, -1)),
        wfc1=c(wf1), bfc1=f(bf1), wfc2=c(wf2), bfc2=f(bf2),
    )


# ----------------------------------------------------------------------------
# Canonical (PyTorch-layout) parameters + pure-JAX reference
# ----------------------------------------------------------------------------

def init_params(key, num_actions, in_channels=4):
    ks = jax.random.split(key, 14)

    def u(k, shape, fan_in):
        bound = 1.0 / np.sqrt(float(fan_in))
        return jax.random.uniform(k, shape, jnp.float32, -bound, bound)

    return {
        "conv1_w": u(ks[0], (32, in_channels, 3, 3), in_channels * 9),
        "conv1_b": u(ks[1], (32,), in_channels * 9),
        "conv2_w": u(ks[2], (64, 32, 2, 2), 32 * 4),
        "conv2_b": u(ks[3], (64,), 32 * 4),
        "conv3_w": u(ks[4], (64, 64, 2, 2), 64 * 4),
        "conv3_b": u(ks[5], (64,), 64 * 4),
        "fc1_adv_w": u(ks[6], (128, 256), 256),
        "fc1_adv_b": u(ks[7], (128,), 256),
        "fc1_val_w": u(ks[8], (128, 256), 256),
        "fc1_val_b": u(ks[9], (128,), 256),
        "fc2_adv_w": u(ks[10], (num_actions, 128), 128),
        "fc2_adv_b": u(ks[11], (num_actions,), 128),
        "fc2_val_w": u(ks[12], (1, 128), 128),
        "fc2_val_b": u(ks[13], (1,), 128),
    }


def reference_forward(x, params):
    def conv(x, w, b, stride, pad):
        y = lax.conv_general_dilated(
            x, w, window_strides=(stride, stride),
            padding=[(pad, pad), (pad, pad)],
            dimension_numbers=("NCHW", "OIHW", "NCHW"))
        return jnp.maximum(y + b.reshape(1, -1, 1, 1), 0.0)

    B = x.shape[0]
    x = conv(x, params["conv1_w"], params["conv1_b"], 2, 1)
    x = conv(x, params["conv2_w"], params["conv2_b"], 1, 0)
    x = conv(x, params["conv3_w"], params["conv3_b"], 1, 0)
    x = x.reshape(B, -1)
    adv = jnp.maximum(x @ params["fc1_adv_w"].T + params["fc1_adv_b"], 0.0)
    val = jnp.maximum(x @ params["fc1_val_w"].T + params["fc1_val_b"], 0.0)
    adv = adv @ params["fc2_adv_w"].T + params["fc2_adv_b"]
    val = val @ params["fc2_val_w"].T + params["fc2_val_b"]
    return val + adv - jnp.mean(adv, axis=1, keepdims=True)


# ----------------------------------------------------------------------------
# Main
# ----------------------------------------------------------------------------

if __name__ == "__main__":
    NUM_ACTIONS = 6
    IN_CHANNELS = 4
    BATCH = 2
    # 8x8 input: conv1(k3,s2,p1)->4x4, conv2(k2,s1)->3x3, conv3(k2,s1)->2x2,
    # so the flatten is 64*2*2 = 256 = fc1 in_features (as the module requires).
    key = jax.random.PRNGKey(0)
    kx, kp = jax.random.split(key)
    x = jax.random.normal(kx, (BATCH, IN_CHANNELS, 8, 8), dtype=jnp.float32)

    params = init_params(kp, NUM_ACTIONS, IN_CHANNELS)
    ref = jax.block_until_ready(reference_forward(x, params))

    fwd = jax.jit(functools.partial(dueling_dqn_forward, num_actions=NUM_ACTIONS))

    # f32 path (strict correctness check; preferred on v5e).
    packed_f32 = prepack_params(params, NUM_ACTIONS, in_hw=8,
                                compute_dtype=jnp.float32)
    out_f32 = jax.block_until_ready(fwd(x, packed_f32))
    assert out_f32.shape == (BATCH, NUM_ACTIONS), out_f32.shape
    assert float(jnp.max(jnp.abs(out_f32 - ref))) < 1e-4, "f32 mismatch vs reference"

    # bf16-weights path (v6e / v7x MXU); f32 accumulation, looser tolerance.
    packed_bf16 = prepack_params(params, NUM_ACTIONS, in_hw=8,
                                 compute_dtype=jnp.bfloat16)
    out_bf16 = jax.block_until_ready(fwd(x, packed_bf16))
    assert out_bf16.shape == (BATCH, NUM_ACTIONS), out_bf16.shape
    assert float(jnp.max(jnp.abs(out_bf16 - ref))) < 1e-1, "bf16 mismatch vs reference"

    print("KERNEL_OK")
</pallas_src>

<mosaic_0001>
module attributes {stable_mosaic.version = 11 : i64} {
  func.func @_dueling_dqn_kernel(%arg0: i32, %arg1: memref<1x64x4xf32, #tpu.memory_space<vmem>>, %arg2: memref<9x16x64xf32, #tpu.memory_space<vmem>>, %arg3: memref<9x4x32xf32, #tpu.memory_space<vmem>>, %arg4: memref<1x32xf32, #tpu.memory_space<vmem>>, %arg5: memref<4x16x16xf32, #tpu.memory_space<vmem>>, %arg6: memref<4x32x64xf32, #tpu.memory_space<vmem>>, %arg7: memref<1x64xf32, #tpu.memory_space<vmem>>, %arg8: memref<4x8x16xf32, #tpu.memory_space<vmem>>, %arg9: memref<4x64x64xf32, #tpu.memory_space<vmem>>, %arg10: memref<1x64xf32, #tpu.memory_space<vmem>>, %arg11: memref<4x64x256xf32, #tpu.memory_space<vmem>>, %arg12: memref<1x256xf32, #tpu.memory_space<vmem>>, %arg13: memref<256x128xf32, #tpu.memory_space<vmem>>, %arg14: memref<1x128xf32, #tpu.memory_space<vmem>>, %arg15: memref<1x1x128xf32, #tpu.memory_space<vmem>>) attributes {dimension_semantics = [#tpu.dimension_semantics<parallel>], iteration_bounds = array<i64: 2>, scalar_prefetch = 0 : i64, scratch_operands = 0 : i64, tpu.core_type = #tpu.core_type<tc>, window_params = [{transform_indices = @transform_0, window_bounds = array<i64: 1, 64, 4>}, {pipeline_mode = #tpu.pipeline_mode<synchronous>, transform_indices = @transform_1, window_bounds = array<i64: 9, 16, 64>}, {pipeline_mode = #tpu.pipeline_mode<synchronous>, transform_indices = @transform_2, window_bounds = array<i64: 9, 4, 32>}, {pipeline_mode = #tpu.pipeline_mode<synchronous>, transform_indices = @transform_3, window_bounds = array<i64: 1, 32>}, {pipeline_mode = #tpu.pipeline_mode<synchronous>, transform_indices = @transform_4, window_bounds = array<i64: 4, 16, 16>}, {pipeline_mode = #tpu.pipeline_mode<synchronous>, transform_indices = @transform_5, window_bounds = array<i64: 4, 32, 64>}, {pipeline_mode = #tpu.pipeline_mode<synchronous>, transform_indices = @transform_6, window_bounds = array<i64: 1, 64>}, {pipeline_mode = #tpu.pipeline_mode<synchronous>, transform_indices = @transform_7, window_bounds = array<i64: 4, 8, 16>}, {pipeline_mode = #tpu.pipeline_mode<synchronous>, transform_indices = @transform_8, window_bounds = array<i64: 4, 64, 64>}, {pipeline_mode = #tpu.pipeline_mode<synchronous>, transform_indices = @transform_9, window_bounds = array<i64: 1, 64>}, {pipeline_mode = #tpu.pipeline_mode<synchronous>, transform_indices = @transform_10, window_bounds = array<i64: 4, 64, 256>}, {pipeline_mode = #tpu.pipeline_mode<synchronous>, transform_indices = @transform_11, window_bounds = array<i64: 1, 256>}, {pipeline_mode = #tpu.pipeline_mode<synchronous>, transform_indices = @transform_12, window_bounds = array<i64: 256, 128>}, {pipeline_mode = #tpu.pipeline_mode<synchronous>, transform_indices = @transform_13, window_bounds = array<i64: 1, 128>}, {transform_indices = @transform_14, window_bounds = array<i64: 1, 1, 128>}]} {
    %c0 = arith.constant 0 : index
    %c0_0 = arith.constant 0 : index
    %c0_1 = arith.constant 0 : index
    %0 = vector.load %arg1[%c0, %c0_0, %c0_1] : memref<1x64x4xf32, #tpu.memory_space<vmem>>, vector<1x64x4xf32>
    %1 = vector.shape_cast %0 : vector<1x64x4xf32> to vector<64x4xf32>
    %cst = arith.constant 0.000000e+00 : f32
    %2 = vector.broadcast %cst : f32 to vector<16x32xf32>
    %c0_2 = arith.constant 0 : index
    %c0_3 = arith.constant 0 : index
    %c0_4 = arith.constant 0 : index
    %3 = vector.load %arg2[%c0_2, %c0_3, %c0_4] : memref<9x16x64xf32, #tpu.memory_space<vmem>>, vector<1x16x64xf32>
    %4 = vector.shape_cast %3 : vector<1x16x64xf32> to vector<16x64xf32>
    %cst_5 = arith.constant dense<0.000000e+00> : vector<16x4xf32>
    %5 = tpu.matmul %4, %1, %cst_5 {dimension_numbers = #tpu.dot_dimension_numbers<[1], [0], [0], [1], [0, 0, 1, 1], [], []>} : vector<16x64xf32>, vector<64x4xf32>, vector<16x4xf32> -> vector<16x4xf32>
    %c0_6 = arith.constant 0 : index
    %c0_7 = arith.constant 0 : index
    %c0_8 = arith.constant 0 : index
    %6 = vector.load %arg3[%c0_6, %c0_7, %c0_8] : memref<9x4x32xf32, #tpu.memory_space<vmem>>, vector<1x4x32xf32>
    %7 = vector.shape_cast %6 : vector<1x4x32xf32> to vector<4x32xf32>
    %cst_9 = arith.constant dense<0.000000e+00> : vector<16x32xf32>
    %8 = tpu.matmul %5, %7, %cst_9 {dimension_numbers = #tpu.dot_dimension_numbers<[1], [0], [0], [1], [0, 0, 1, 1], [], []>} : vector<16x4xf32>, vector<4x32xf32>, vector<16x32xf32> -> vector<16x32xf32>
    %9 = arith.addf %2, %8 : vector<16x32xf32>
    %c1 = arith.constant 1 : index
    %c0_10 = arith.constant 0 : index
    %c0_11 = arith.constant 0 : index
    %10 = vector.load %arg2[%c1, %c0_10, %c0_11] : memref<9x16x64xf32, #tpu.memory_space<vmem>>, vector<1x16x64xf32>
    %11 = vector.shape_cast %10 : vector<1x16x64xf32> to vector<16x64xf32>
    %cst_12 = arith.constant dense<0.000000e+00> : vector<16x4xf32>
    %12 = tpu.matmul %11, %1, %cst_12 {dimension_numbers = #tpu.dot_dimension_numbers<[1], [0], [0], [1], [0, 0, 1, 1], [], []>} : vector<16x64xf32>, vector<64x4xf32>, vector<16x4xf32> -> vector<16x4xf32>
    %c1_13 = arith.constant 1 : index
    %c0_14 = arith.constant 0 : index
    %c0_15 = arith.constant 0 : index
    %13 = vector.load %arg3[%c1_13, %c0_14, %c0_15] : memref<9x4x32xf32, #tpu.memory_space<vmem>>, vector<1x4x32xf32>
    %14 = vector.shape_cast %13 : vector<1x4x32xf32> to vector<4x32xf32>
    %cst_16 = arith.constant dense<0.000000e+00> : vector<16x32xf32>
    %15 = tpu.matmul %12, %14, %cst_16 {dimension_numbers = #tpu.dot_dimension_numbers<[1], [0], [0], [1], [0, 0, 1, 1], [], []>} : vector<16x4xf32>, vector<4x32xf32>, vector<16x32xf32> -> vector<16x32xf32>
    %16 = arith.addf %9, %15 : vector<16x32xf32>
    %c2 = arith.constant 2 : index
    %c0_17 = arith.constant 0 : index
    %c0_18 = arith.constant 0 : index
    %17 = vector.load %arg2[%c2, %c0_17, %c0_18] : memref<9x16x64xf32, #tpu.memory_space<vmem>>, vector<1x16x64xf32>
    %18 = vector.shape_cast %17 : vector<1x16x64xf32> to vector<16x64xf32>
    %cst_19 = arith.constant dense<0.000000e+00> : vector<16x4xf32>
    %19 = tpu.matmul %18, %1, %cst_19 {dimension_numbers = #tpu.dot_dimension_numbers<[1], [0], [0], [1], [0, 0, 1, 1], [], []>} : vector<16x64xf32>, vector<64x4xf32>, vector<16x4xf32> -> vector<16x4xf32>
    %c2_20 = arith.constant 2 : index
    %c0_21 = arith.constant 0 : index
    %c0_22 = arith.constant 0 : index
    %20 = vector.load %arg3[%c2_20, %c0_21, %c0_22] : memref<9x4x32xf32, #tpu.memory_space<vmem>>, vector<1x4x32xf32>
    %21 = vector.shape_cast %20 : vector<1x4x32xf32> to vector<4x32xf32>
    %cst_23 = arith.constant dense<0.000000e+00> : vector<16x32xf32>
    %22 = tpu.matmul %19, %21, %cst_23 {dimension_numbers = #tpu.dot_dimension_numbers<[1], [0], [0], [1], [0, 0, 1, 1], [], []>} : vector<16x4xf32>, vector<4x32xf32>, vector<16x32xf32> -> vector<16x32xf32>
    %23 = arith.addf %16, %22 : vector<16x32xf32>
    %c3 = arith.constant 3 : index
    %c0_24 = arith.constant 0 : index
    %c0_25 = arith.constant 0 : index
    %24 = vector.load %arg2[%c3, %c0_24, %c0_25] : memref<9x16x64xf32, #tpu.memory_space<vmem>>, vector<1x16x64xf32>
    %25 = vector.shape_cast %24 : vector<1x16x64xf32> to vector<16x64xf32>
    %cst_26 = arith.constant dense<0.000000e+00> : vector<16x4xf32>
    %26 = tpu.matmul %25, %1, %cst_26 {dimension_numbers = #tpu.dot_dimension_numbers<[1], [0], [0], [1], [0, 0, 1, 1], [], []>} : vector<16x64xf32>, vector<64x4xf32>, vector<16x4xf32> -> vector<16x4xf32>
    %c3_27 = arith.constant 3 : index
    %c0_28 = arith.constant 0 : index
    %c0_29 = arith.constant 0 : index
    %27 = vector.load %arg3[%c3_27, %c0_28, %c0_29] : memref<9x4x32xf32, #tpu.memory_space<vmem>>, vector<1x4x32xf32>
    %28 = vector.shape_cast %27 : vector<1x4x32xf32> to vector<4x32xf32>
    %cst_30 = arith.constant dense<0.000000e+00> : vector<16x32xf32>
    %29 = tpu.matmul %26, %28, %cst_30 {dimension_numbers = #tpu.dot_dimension_numbers<[1], [0], [0], [1], [0, 0, 1, 1], [], []>} : vector<16x4xf32>, vector<4x32xf32>, vector<16x32xf32> -> vector<16x32xf32>
    %30 = arith.addf %23, %29 : vector<16x32xf32>
    %c4 = arith.constant 4 : index
    %c0_31 = arith.constant 0 : index
    %c0_32 = arith.constant 0 : index
    %31 = vector.load %arg2[%c4, %c0_31, %c0_32] : memref<9x16x64xf32, #tpu.memory_space<vmem>>, vector<1x16x64xf32>
    %32 = vector.shape_cast %31 : vector<1x16x64xf32> to vector<16x64xf32>
    %cst_33 = arith.constant dense<0.000000e+00> : vector<16x4xf32>
    %33 = tpu.matmul %32, %1, %cst_33 {dimension_numbers = #tpu.dot_dimension_numbers<[1], [0], [0], [1], [0, 0, 1, 1], [], []>} : vector<16x64xf32>, vector<64x4xf32>, vector<16x4xf32> -> vector<16x4xf32>
    %c4_34 = arith.constant 4 : index
    %c0_35 = arith.constant 0 : index
    %c0_36 = arith.constant 0 : index
    %34 = vector.load %arg3[%c4_34, %c0_35, %c0_36] : memref<9x4x32xf32, #tpu.memory_space<vmem>>, vector<1x4x32xf32>
    %35 = vector.shape_cast %34 : vector<1x4x32xf32> to vector<4x32xf32>
    %cst_37 = arith.constant dense<0.000000e+00> : vector<16x32xf32>
    %36 = tpu.matmul %33, %35, %cst_37 {dimension_numbers = #tpu.dot_dimension_numbers<[1], [0], [0], [1], [0, 0, 1, 1], [], []>} : vector<16x4xf32>, vector<4x32xf32>, vector<16x32xf32> -> vector<16x32xf32>
    %37 = arith.addf %30, %36 : vector<16x32xf32>
    %c5 = arith.constant 5 : index
    %c0_38 = arith.constant 0 : index
    %c0_39 = arith.constant 0 : index
    %38 = vector.load %arg2[%c5, %c0_38, %c0_39] : memref<9x16x64xf32, #tpu.memory_space<vmem>>, vector<1x16x64xf32>
    %39 = vector.shape_cast %38 : vector<1x16x64xf32> to vector<16x64xf32>
    %cst_40 = arith.constant dense<0.000000e+00> : vector<16x4xf32>
    %40 = tpu.matmul %39, %1, %cst_40 {dimension_numbers = #tpu.dot_dimension_numbers<[1], [0], [0], [1], [0, 0, 1, 1], [], []>} : vector<16x64xf32>, vector<64x4xf32>, vector<16x4xf32> -> vector<16x4xf32>
    %c5_41 = arith.constant 5 : index
    %c0_42 = arith.constant 0 : index
    %c0_43 = arith.constant 0 : index
    %41 = vector.load %arg3[%c5_41, %c0_42, %c0_43] : memref<9x4x32xf32, #tpu.memory_space<vmem>>, vector<1x4x32xf32>
    %42 = vector.shape_cast %41 : vector<1x4x32xf32> to vector<4x32xf32>
    %cst_44 = arith.constant dense<0.000000e+00> : vector<16x32xf32>
    %43 = tpu.matmul %40, %42, %cst_44 {dimension_numbers = #tpu.dot_dimension_numbers<[1], [0], [0], [1], [0, 0, 1, 1], [], []>} : vector<16x4xf32>, vector<4x32xf32>, vector<16x32xf32> -> vector<16x32xf32>
    %44 = arith.addf %37, %43 : vector<16x32xf32>
    %c6 = arith.constant 6 : index
    %c0_45 = arith.constant 0 : index
    %c0_46 = arith.constant 0 : index
    %45 = vector.load %arg2[%c6, %c0_45, %c0_46] : memref<9x16x64xf32, #tpu.memory_space<vmem>>, vector<1x16x64xf32>
    %46 = vector.shape_cast %45 : vector<1x16x64xf32> to vector<16x64xf32>
    %cst_47 = arith.constant dense<0.000000e+00> : vector<16x4xf32>
    %47 = tpu.matmul %46, %1, %cst_47 {dimension_numbers = #tpu.dot_dimension_numbers<[1], [0], [0], [1], [0, 0, 1, 1], [], []>} : vector<16x64xf32>, vector<64x4xf32>, vector<16x4xf32> -> vector<16x4xf32>
    %c6_48 = arith.constant 6 : index
    %c0_49 = arith.constant 0 : index
    %c0_50 = arith.constant 0 : index
    %48 = vector.load %arg3[%c6_48, %c0_49, %c0_50] : memref<9x4x32xf32, #tpu.memory_space<vmem>>, vector<1x4x32xf32>
    %49 = vector.shape_cast %48 : vector<1x4x32xf32> to vector<4x32xf32>
    %cst_51 = arith.constant dense<0.000000e+00> : vector<16x32xf32>
    %50 = tpu.matmul %47, %49, %cst_51 {dimension_numbers = #tpu.dot_dimension_numbers<[1], [0], [0], [1], [0, 0, 1, 1], [], []>} : vector<16x4xf32>, vector<4x32xf32>, vector<16x32xf32> -> vector<16x32xf32>
    %51 = arith.addf %44, %50 : vector<16x32xf32>
    %c7 = arith.constant 7 : index
    %c0_52 = arith.constant 0 : index
    %c0_53 = arith.constant 0 : index
    %52 = vector.load %arg2[%c7, %c0_52, %c0_53] : memref<9x16x64xf32, #tpu.memory_space<vmem>>, vector<1x16x64xf32>
    %53 = vector.shape_cast %52 : vector<1x16x64xf32> to vector<16x64xf32>
    %cst_54 = arith.constant dense<0.000000e+00> : vector<16x4xf32>
    %54 = tpu.matmul %53, %1, %cst_54 {dimension_numbers = #tpu.dot_dimension_numbers<[1], [0], [0], [1], [0, 0, 1, 1], [], []>} : vector<16x64xf32>, vector<64x4xf32>, vector<16x4xf32> -> vector<16x4xf32>
    %c7_55 = arith.constant 7 : index
    %c0_56 = arith.constant 0 : index
    %c0_57 = arith.constant 0 : index
    %55 = vector.load %arg3[%c7_55, %c0_56, %c0_57] : memref<9x4x32xf32, #tpu.memory_space<vmem>>, vector<1x4x32xf32>
    %56 = vector.shape_cast %55 : vector<1x4x32xf32> to vector<4x32xf32>
    %cst_58 = arith.constant dense<0.000000e+00> : vector<16x32xf32>
    %57 = tpu.matmul %54, %56, %cst_58 {dimension_numbers = #tpu.dot_dimension_numbers<[1], [0], [0], [1], [0, 0, 1, 1], [], []>} : vector<16x4xf32>, vector<4x32xf32>, vector<16x32xf32> -> vector<16x32xf32>
    %58 = arith.addf %51, %57 : vector<16x32xf32>
    %c8 = arith.constant 8 : index
    %c0_59 = arith.constant 0 : index
    %c0_60 = arith.constant 0 : index
    %59 = vector.load %arg2[%c8, %c0_59, %c0_60] : memref<9x16x64xf32, #tpu.memory_space<vmem>>, vector<1x16x64xf32>
    %60 = vector.shape_cast %59 : vector<1x16x64xf32> to vector<16x64xf32>
    %cst_61 = arith.constant dense<0.000000e+00> : vector<16x4xf32>
    %61 = tpu.matmul %60, %1, %cst_61 {dimension_numbers = #tpu.dot_dimension_numbers<[1], [0], [0], [1], [0, 0, 1, 1], [], []>} : vector<16x64xf32>, vector<64x4xf32>, vector<16x4xf32> -> vector<16x4xf32>
    %c8_62 = arith.constant 8 : index
    %c0_63 = arith.constant 0 : index
    %c0_64 = arith.constant 0 : index
    %62 = vector.load %arg3[%c8_62, %c0_63, %c0_64] : memref<9x4x32xf32, #tpu.memory_space<vmem>>, vector<1x4x32xf32>
    %63 = vector.shape_cast %62 : vector<1x4x32xf32> to vector<4x32xf32>
    %cst_65 = arith.constant dense<0.000000e+00> : vector<16x32xf32>
    %64 = tpu.matmul %61, %63, %cst_65 {dimension_numbers = #tpu.dot_dimension_numbers<[1], [0], [0], [1], [0, 0, 1, 1], [], []>} : vector<16x4xf32>, vector<4x32xf32>, vector<16x32xf32> -> vector<16x32xf32>
    %65 = arith.addf %58, %64 : vector<16x32xf32>
    %c0_66 = arith.constant 0 : index
    %c0_67 = arith.constant 0 : index
    %66 = vector.load %arg4[%c0_66, %c0_67] : memref<1x32xf32, #tpu.memory_space<vmem>>, vector<1x32xf32>
    %67 = vector.broadcast %66 : vector<1x32xf32> to vector<16x32xf32>
    %68 = arith.addf %65, %67 : vector<16x32xf32>
    %cst_68 = arith.constant 0.000000e+00 : f32
    %69 = vector.broadcast %cst_68 : f32 to vector<16x32xf32>
    %70 = arith.maximumf %68, %69 : vector<16x32xf32>
    %cst_69 = arith.constant 0.000000e+00 : f32
    %71 = vector.broadcast %cst_69 : f32 to vector<16x64xf32>
    %c0_70 = arith.constant 0 : index
    %c0_71 = arith.constant 0 : index
    %c0_72 = arith.constant 0 : index
    %72 = vector.load %arg5[%c0_70, %c0_71, %c0_72] : memref<4x16x16xf32, #tpu.memory_space<vmem>>, vector<1x16x16xf32>
    %73 = vector.shape_cast %72 : vector<1x16x16xf32> to vector<16x16xf32>
    %cst_73 = arith.constant dense<0.000000e+00> : vector<16x32xf32>
    %74 = tpu.matmul %73, %70, %cst_73 {dimension_numbers = #tpu.dot_dimension_numbers<[1], [0], [0], [1], [0, 0, 1, 1], [], []>} : vector<16x16xf32>, vector<16x32xf32>, vector<16x32xf32> -> vector<16x32xf32>
    %c0_74 = arith.constant 0 : index
    %c0_75 = arith.constant 0 : index
    %c0_76 = arith.constant 0 : index
    %75 = vector.load %arg6[%c0_74, %c0_75, %c0_76] : memref<4x32x64xf32, #tpu.memory_space<vmem>>, vector<1x32x64xf32>
    %76 = vector.shape_cast %75 : vector<1x32x64xf32> to vector<32x64xf32>
    %cst_77 = arith.constant dense<0.000000e+00> : vector<16x64xf32>
    %77 = tpu.matmul %74, %76, %cst_77 {dimension_numbers = #tpu.dot_dimension_numbers<[1], [0], [0], [1], [0, 0, 1, 1], [], []>} : vector<16x32xf32>, vector<32x64xf32>, vector<16x64xf32> -> vector<16x64xf32>
    %78 = arith.addf %71, %77 : vector<16x64xf32>
    %c1_78 = arith.constant 1 : index
    %c0_79 = arith.constant 0 : index
    %c0_80 = arith.constant 0 : index
    %79 = vector.load %arg5[%c1_78, %c0_79, %c0_80] : memref<4x16x16xf32, #tpu.memory_space<vmem>>, vector<1x16x16xf32>
    %80 = vector.shape_cast %79 : vector<1x16x16xf32> to vector<16x16xf32>
    %cst_81 = arith.constant dense<0.000000e+00> : vector<16x32xf32>
    %81 = tpu.matmul %80, %70, %cst_81 {dimension_numbers = #tpu.dot_dimension_numbers<[1], [0], [0], [1], [0, 0, 1, 1], [], []>} : vector<16x16xf32>, vector<16x32xf32>, vector<16x32xf32> -> vector<16x32xf32>
    %c1_82 = arith.constant 1 : index
    %c0_83 = arith.constant 0 : index
    %c0_84 = arith.constant 0 : index
    %82 = vector.load %arg6[%c1_82, %c0_83, %c0_84] : memref<4x32x64xf32, #tpu.memory_space<vmem>>, vector<1x32x64xf32>
    %83 = vector.shape_cast %82 : vector<1x32x64xf32> to vector<32x64xf32>
    %cst_85 = arith.constant dense<0.000000e+00> : vector<16x64xf32>
    %84 = tpu.matmul %81, %83, %cst_85 {dimension_numbers = #tpu.dot_dimension_numbers<[1], [0], [0], [1], [0, 0, 1, 1], [], []>} : vector<16x32xf32>, vector<32x64xf32>, vector<16x64xf32> -> vector<16x64xf32>
    %85 = arith.addf %78, %84 : vector<16x64xf32>
    %c2_86 = arith.constant 2 : index
    %c0_87 = arith.constant 0 : index
    %c0_88 = arith.constant 0 : index
    %86 = vector.load %arg5[%c2_86, %c0_87, %c0_88] : memref<4x16x16xf32, #tpu.memory_space<vmem>>, vector<1x16x16xf32>
    %87 = vector.shape_cast %86 : vector<1x16x16xf32> to vector<16x16xf32>
    %cst_89 = arith.constant dense<0.000000e+00> : vector<16x32xf32>
    %88 = tpu.matmul %87, %70, %cst_89 {dimension_numbers = #tpu.dot_dimension_numbers<[1], [0], [0], [1], [0, 0, 1, 1], [], []>} : vector<16x16xf32>, vector<16x32xf32>, vector<16x32xf32> -> vector<16x32xf32>
    %c2_90 = arith.constant 2 : index
    %c0_91 = arith.constant 0 : index
    %c0_92 = arith.constant 0 : index
    %89 = vector.load %arg6[%c2_90, %c0_91, %c0_92] : memref<4x32x64xf32, #tpu.memory_space<vmem>>, vector<1x32x64xf32>
    %90 = vector.shape_cast %89 : vector<1x32x64xf32> to vector<32x64xf32>
    %cst_93 = arith.constant dense<0.000000e+00> : vector<16x64xf32>
    %91 = tpu.matmul %88, %90, %cst_93 {dimension_numbers = #tpu.dot_dimension_numbers<[1], [0], [0], [1], [0, 0, 1, 1], [], []>} : vector<16x32xf32>, vector<32x64xf32>, vector<16x64xf32> -> vector<16x64xf32>
    %92 = arith.addf %85, %91 : vector<16x64xf32>
    %c3_94 = arith.constant 3 : index
    %c0_95 = arith.constant 0 : index
    %c0_96 = arith.constant 0 : index
    %93 = vector.load %arg5[%c3_94, %c0_95, %c0_96] : memref<4x16x16xf32, #tpu.memory_space<vmem>>, vector<1x16x16xf32>
    %94 = vector.shape_cast %93 : vector<1x16x16xf32> to vector<16x16xf32>
    %cst_97 = arith.constant dense<0.000000e+00> : vector<16x32xf32>
    %95 = tpu.matmul %94, %70, %cst_97 {dimension_numbers = #tpu.dot_dimension_numbers<[1], [0], [0], [1], [0, 0, 1, 1], [], []>} : vector<16x16xf32>, vector<16x32xf32>, vector<16x32xf32> -> vector<16x32xf32>
    %c3_98 = arith.constant 3 : index
    %c0_99 = arith.constant 0 : index
    %c0_100 = arith.constant 0 : index
    %96 = vector.load %arg6[%c3_98, %c0_99, %c0_100] : memref<4x32x64xf32, #tpu.memory_space<vmem>>, vector<1x32x64xf32>
    %97 = vector.shape_cast %96 : vector<1x32x64xf32> to vector<32x64xf32>
    %cst_101 = arith.constant dense<0.000000e+00> : vector<16x64xf32>
    %98 = tpu.matmul %95, %97, %cst_101 {dimension_numbers = #tpu.dot_dimension_numbers<[1], [0], [0], [1], [0, 0, 1, 1], [], []>} : vector<16x32xf32>, vector<32x64xf32>, vector<16x64xf32> -> vector<16x64xf32>
    %99 = arith.addf %92, %98 : vector<16x64xf32>
    %c0_102 = arith.constant 0 : index
    %c0_103 = arith.constant 0 : index
    %100 = vector.load %arg7[%c0_102, %c0_103] : memref<1x64xf32, #tpu.memory_space<vmem>>, vector<1x64xf32>
    %101 = vector.broadcast %100 : vector<1x64xf32> to vector<16x64xf32>
    %102 = arith.addf %99, %101 : vector<16x64xf32>
    %cst_104 = arith.constant 0.000000e+00 : f32
    %103 = vector.broadcast %cst_104 : f32 to vector<16x64xf32>
    %104 = arith.maximumf %102, %103 : vector<16x64xf32>
    %cst_105 = arith.constant 0.000000e+00 : f32
    %105 = vector.broadcast %cst_105 : f32 to vector<8x64xf32>
    %c0_106 = arith.constant 0 : index
    %c0_107 = arith.constant 0 : index
    %c0_108 = arith.constant 0 : index
    %106 = vector.load %arg8[%c0_106, %c0_107, %c0_108] : memref<4x8x16xf32, #tpu.memory_space<vmem>>, vector<1x8x16xf32>
    %107 = vector.shape_cast %106 : vector<1x8x16xf32> to vector<8x16xf32>
    %cst_109 = arith.constant dense<0.000000e+00> : vector<8x64xf32>
    %108 = tpu.matmul %107, %104, %cst_109 {dimension_numbers = #tpu.dot_dimension_numbers<[1], [0], [0], [1], [0, 0, 1, 1], [], []>} : vector<8x16xf32>, vector<16x64xf32>, vector<8x64xf32> -> vector<8x64xf32>
    %c0_110 = arith.constant 0 : index
    %c0_111 = arith.constant 0 : index
    %c0_112 = arith.constant 0 : index
    %109 = vector.load %arg9[%c0_110, %c0_111, %c0_112] : memref<4x64x64xf32, #tpu.memory_space<vmem>>, vector<1x64x64xf32>
    %110 = vector.shape_cast %109 : vector<1x64x64xf32> to vector<64x64xf32>
    %cst_113 = arith.constant dense<0.000000e+00> : vector<8x64xf32>
    %111 = tpu.matmul %108, %110, %cst_113 {dimension_numbers = #tpu.dot_dimension_numbers<[1], [0], [0], [1], [0, 0, 1, 1], [], []>} : vector<8x64xf32>, vector<64x64xf32>, vector<8x64xf32> -> vector<8x64xf32>
    %112 = arith.addf %105, %111 : vector<8x64xf32>
    %c1_114 = arith.constant 1 : index
    %c0_115 = arith.constant 0 : index
    %c0_116 = arith.constant 0 : index
    %113 = vector.load %arg8[%c1_114, %c0_115, %c0_116] : memref<4x8x16xf32, #tpu.memory_space<vmem>>, vector<1x8x16xf32>
    %114 = vector.shape_cast %113 : vector<1x8x16xf32> to vector<8x16xf32>
    %cst_117 = arith.constant dense<0.000000e+00> : vector<8x64xf32>
    %115 = tpu.matmul %114, %104, %cst_117 {dimension_numbers = #tpu.dot_dimension_numbers<[1], [0], [0], [1], [0, 0, 1, 1], [], []>} : vector<8x16xf32>, vector<16x64xf32>, vector<8x64xf32> -> vector<8x64xf32>
    %c1_118 = arith.constant 1 : index
    %c0_119 = arith.constant 0 : index
    %c0_120 = arith.constant 0 : index
    %116 = vector.load %arg9[%c1_118, %c0_119, %c0_120] : memref<4x64x64xf32, #tpu.memory_space<vmem>>, vector<1x64x64xf32>
    %117 = vector.shape_cast %116 : vector<1x64x64xf32> to vector<64x64xf32>
    %cst_121 = arith.constant dense<0.000000e+00> : vector<8x64xf32>
    %118 = tpu.matmul %115, %117, %cst_121 {dimension_numbers = #tpu.dot_dimension_numbers<[1], [0], [0], [1], [0, 0, 1, 1], [], []>} : vector<8x64xf32>, vector<64x64xf32>, vector<8x64xf32> -> vector<8x64xf32>
    %119 = arith.addf %112, %118 : vector<8x64xf32>
    %c2_122 = arith.constant 2 : index
    %c0_123 = arith.constant 0 : index
    %c0_124 = arith.constant 0 : index
    %120 = vector.load %arg8[%c2_122, %c0_123, %c0_124] : memref<4x8x16xf32, #tpu.memory_space<vmem>>, vector<1x8x16xf32>
    %121 = vector.shape_cast %120 : vector<1x8x16xf32> to vector<8x16xf32>
    %cst_125 = arith.constant dense<0.000000e+00> : vector<8x64xf32>
    %122 = tpu.matmul %121, %104, %cst_125 {dimension_numbers = #tpu.dot_dimension_numbers<[1], [0], [0], [1], [0, 0, 1, 1], [], []>} : vector<8x16xf32>, vector<16x64xf32>, vector<8x64xf32> -> vector<8x64xf32>
    %c2_126 = arith.constant 2 : index
    %c0_127 = arith.constant 0 : index
    %c0_128 = arith.constant 0 : index
    %123 = vector.load %arg9[%c2_126, %c0_127, %c0_128] : memref<4x64x64xf32, #tpu.memory_space<vmem>>, vector<1x64x64xf32>
    %124 = vector.shape_cast %123 : vector<1x64x64xf32> to vector<64x64xf32>
    %cst_129 = arith.constant dense<0.000000e+00> : vector<8x64xf32>
    %125 = tpu.matmul %122, %124, %cst_129 {dimension_numbers = #tpu.dot_dimension_numbers<[1], [0], [0], [1], [0, 0, 1, 1], [], []>} : vector<8x64xf32>, vector<64x64xf32>, vector<8x64xf32> -> vector<8x64xf32>
    %126 = arith.addf %119, %125 : vector<8x64xf32>
    %c3_130 = arith.constant 3 : index
    %c0_131 = arith.constant 0 : index
    %c0_132 = arith.constant 0 : index
    %127 = vector.load %arg8[%c3_130, %c0_131, %c0_132] : memref<4x8x16xf32, #tpu.memory_space<vmem>>, vector<1x8x16xf32>
    %128 = vector.shape_cast %127 : vector<1x8x16xf32> to vector<8x16xf32>
    %cst_133 = arith.constant dense<0.000000e+00> : vector<8x64xf32>
    %129 = tpu.matmul %128, %104, %cst_133 {dimension_numbers = #tpu.dot_dimension_numbers<[1], [0], [0], [1], [0, 0, 1, 1], [], []>} : vector<8x16xf32>, vector<16x64xf32>, vector<8x64xf32> -> vector<8x64xf32>
    %c3_134 = arith.constant 3 : index
    %c0_135 = arith.constant 0 : index
    %c0_136 = arith.constant 0 : index
    %130 = vector.load %arg9[%c3_134, %c0_135, %c0_136] : memref<4x64x64xf32, #tpu.memory_space<vmem>>, vector<1x64x64xf32>
    %131 = vector.shape_cast %130 : vector<1x64x64xf32> to vector<64x64xf32>
    %cst_137 = arith.constant dense<0.000000e+00> : vector<8x64xf32>
    %132 = tpu.matmul %129, %131, %cst_137 {dimension_numbers = #tpu.dot_dimension_numbers<[1], [0], [0], [1], [0, 0, 1, 1], [], []>} : vector<8x64xf32>, vector<64x64xf32>, vector<8x64xf32> -> vector<8x64xf32>
    %133 = arith.addf %126, %132 : vector<8x64xf32>
    %c0_138 = arith.constant 0 : index
    %c0_139 = arith.constant 0 : index
    %134 = vector.load %arg10[%c0_138, %c0_139] : memref<1x64xf32, #tpu.memory_space<vmem>>, vector<1x64xf32>
    %135 = vector.broadcast %134 : vector<1x64xf32> to vector<8x64xf32>
    %136 = arith.addf %133, %135 : vector<8x64xf32>
    %cst_140 = arith.constant 0.000000e+00 : f32
    %137 = vector.broadcast %cst_140 : f32 to vector<8x64xf32>
    %138 = arith.maximumf %136, %137 : vector<8x64xf32>
    %cst_141 = arith.constant 0.000000e+00 : f32
    %139 = vector.broadcast %cst_141 : f32 to vector<1x256xf32>
    %140 = vector.extract_strided_slice %138 {offsets = [0, 0], sizes = [1, 64], strides = [1, 1]} : vector<8x64xf32> to vector<1x64xf32>
    %c0_142 = arith.constant 0 : index
    %c0_143 = arith.constant 0 : index
    %c0_144 = arith.constant 0 : index
    %141 = vector.load %arg11[%c0_142, %c0_143, %c0_144] : memref<4x64x256xf32, #tpu.memory_space<vmem>>, vector<1x64x256xf32>
    %142 = vector.shape_cast %141 : vector<1x64x256xf32> to vector<64x256xf32>
    %cst_145 = arith.constant dense<0.000000e+00> : vector<1x256xf32>
    %143 = tpu.matmul %140, %142, %cst_145 {dimension_numbers = #tpu.dot_dimension_numbers<[1], [0], [0], [1], [0, 0, 1, 1], [], []>} : vector<1x64xf32>, vector<64x256xf32>, vector<1x256xf32> -> vector<1x256xf32>
    %144 = arith.addf %139, %143 : vector<1x256xf32>
    %145 = vector.extract_strided_slice %138 {offsets = [1, 0], sizes = [1, 64], strides = [1, 1]} : vector<8x64xf32> to vector<1x64xf32>
    %c1_146 = arith.constant 1 : index
    %c0_147 = arith.constant 0 : index
    %c0_148 = arith.constant 0 : index
    %146 = vector.load %arg11[%c1_146, %c0_147, %c0_148] : memref<4x64x256xf32, #tpu.memory_space<vmem>>, vector<1x64x256xf32>
    %147 = vector.shape_cast %146 : vector<1x64x256xf32> to vector<64x256xf32>
    %cst_149 = arith.constant dense<0.000000e+00> : vector<1x256xf32>
    %148 = tpu.matmul %145, %147, %cst_149 {dimension_numbers = #tpu.dot_dimension_numbers<[1], [0], [0], [1], [0, 0, 1, 1], [], []>} : vector<1x64xf32>, vector<64x256xf32>, vector<1x256xf32> -> vector<1x256xf32>
    %149 = arith.addf %144, %148 : vector<1x256xf32>
    %150 = vector.extract_strided_slice %138 {offsets = [2, 0], sizes = [1, 64], strides = [1, 1]} : vector<8x64xf32> to vector<1x64xf32>
    %c2_150 = arith.constant 2 : index
    %c0_151 = arith.constant 0 : index
    %c0_152 = arith.constant 0 : index
    %151 = vector.load %arg11[%c2_150, %c0_151, %c0_152] : memref<4x64x256xf32, #tpu.memory_space<vmem>>, vector<1x64x256xf32>
    %152 = vector.shape_cast %151 : vector<1x64x256xf32> to vector<64x256xf32>
    %cst_153 = arith.constant dense<0.000000e+00> : vector<1x256xf32>
    %153 = tpu.matmul %150, %152, %cst_153 {dimension_numbers = #tpu.dot_dimension_numbers<[1], [0], [0], [1], [0, 0, 1, 1], [], []>} : vector<1x64xf32>, vector<64x256xf32>, vector<1x256xf32> -> vector<1x256xf32>
    %154 = arith.addf %149, %153 : vector<1x256xf32>
    %155 = vector.extract_strided_slice %138 {offsets = [3, 0], sizes = [1, 64], strides = [1, 1]} : vector<8x64xf32> to vector<1x64xf32>
    %c3_154 = arith.constant 3 : index
    %c0_155 = arith.constant 0 : index
    %c0_156 = arith.constant 0 : index
    %156 = vector.load %arg11[%c3_154, %c0_155, %c0_156] : memref<4x64x256xf32, #tpu.memory_space<vmem>>, vector<1x64x256xf32>
    %157 = vector.shape_cast %156 : vector<1x64x256xf32> to vector<64x256xf32>
    %cst_157 = arith.constant dense<0.000000e+00> : vector<1x256xf32>
    %158 = tpu.matmul %155, %157, %cst_157 {dimension_numbers = #tpu.dot_dimension_numbers<[1], [0], [0], [1], [0, 0, 1, 1], [], []>} : vector<1x64xf32>, vector<64x256xf32>, vector<1x256xf32> -> vector<1x256xf32>
    %159 = arith.addf %154, %158 : vector<1x256xf32>
    %c0_158 = arith.constant 0 : index
    %c0_159 = arith.constant 0 : index
    %160 = vector.load %arg12[%c0_158, %c0_159] : memref<1x256xf32, #tpu.memory_space<vmem>>, vector<1x256xf32>
    %161 = arith.addf %159, %160 : vector<1x256xf32>
    %cst_160 = arith.constant 0.000000e+00 : f32
    %162 = vector.broadcast %cst_160 : f32 to vector<1x256xf32>
    %163 = arith.maximumf %161, %162 : vector<1x256xf32>
    %c0_161 = arith.constant 0 : index
    %c0_162 = arith.constant 0 : index
    %164 = vector.load %arg13[%c0_161, %c0_162] : memref<256x128xf32, #tpu.memory_space<vmem>>, vector<256x128xf32>
    %cst_163 = arith.constant dense<0.000000e+00> : vector<1x128xf32>
    %165 = tpu.matmul %163, %164, %cst_163 {dimension_numbers = #tpu.dot_dimension_numbers<[1], [0], [0], [1], [0, 0, 1, 1], [], []>} : vector<1x256xf32>, vector<256x128xf32>, vector<1x128xf32> -> vector<1x128xf32>
    %c0_164 = arith.constant 0 : index
    %c0_165 = arith.constant 0 : index
    %166 = vector.load %arg14[%c0_164, %c0_165] : memref<1x128xf32, #tpu.memory_space<vmem>>, vector<1x128xf32>
    %167 = arith.addf %165, %166 : vector<1x128xf32>
    %168 = tpu.iota {dimensions = array<i32: 1>} : vector<1x128xi32>
    %c6_i32 = arith.constant 6 : i32
    %169 = vector.broadcast %c6_i32 : i32 to vector<1x128xi32>
    %170 = arith.cmpi slt, %168, %169 : vector<1x128xi32>
    %171 = arith.extui %170 : vector<1x128xi1> to vector<1x128xi32>
    %172 = arith.sitofp %171 : vector<1x128xi32> to vector<1x128xf32>
    %173 = arith.mulf %167, %172 : vector<1x128xf32>
    %c6_i32_166 = arith.constant 6 : i32
    %174 = vector.broadcast %c6_i32_166 : i32 to vector<1x128xi32>
    %175 = arith.cmpi eq, %168, %174 : vector<1x128xi32>
    %cst_167 = arith.constant 0.000000e+00 : f32
    %176 = vector.broadcast %cst_167 : f32 to vector<1x128xf32>
    %177 = arith.select %175, %167, %176 : vector<1x128xi1>, vector<1x128xf32>
    %cst_168 = arith.constant dense<0.000000e+00> : vector<1xf32>
    %178 = vector.multi_reduction <add>, %177, %cst_168 [1] : vector<1x128xf32> to vector<1xf32>
    %179 = vector.shape_cast %178 : vector<1xf32> to vector<1x1xf32>
    %cst_169 = arith.constant dense<0.000000e+00> : vector<1xf32>
    %180 = vector.multi_reduction <add>, %173, %cst_169 [1] : vector<1x128xf32> to vector<1xf32>
    %181 = vector.shape_cast %180 : vector<1xf32> to vector<1x1xf32>
    %cst_170 = arith.constant 0.166666672 : f32
    %182 = vector.broadcast %cst_170 : f32 to vector<1x1xf32>
    %183 = arith.mulf %181, %182 : vector<1x1xf32>
    %184 = vector.broadcast %179 : vector<1x1xf32> to vector<1x128xf32>
    %185 = arith.addf %173, %184 : vector<1x128xf32>
    %186 = vector.broadcast %183 : vector<1x1xf32> to vector<1x128xf32>
    %187 = arith.subf %185, %186 : vector<1x128xf32>
    %188 = arith.mulf %172, %187 : vector<1x128xf32>
    %c0_171 = arith.constant 0 : index
    %c0_172 = arith.constant 0 : index
    %c0_173 = arith.constant 0 : index
    %189 = vector.load %arg15[%c0_171, %c0_172, %c0_173] : memref<1x1x128xf32, #tpu.memory_space<vmem>>, vector<1x1x128xf32>
    %190 = vector.shape_cast %189 : vector<1x1x128xf32> to vector<1x128xf32>
    %191 = vector.shape_cast %188 : vector<1x128xf32> to vector<1x1x128xf32>
    tpu.vector_store %arg15[%c0_171, %c0_172, %c0_173], %191 {strides = array<i32>} : memref<1x1x128xf32, #tpu.memory_space<vmem>>, vector<1x1x128xf32>,
    return
  }
  func.func @transform_0(%arg0: i32) -> (i32, i32, i32) {
    %c0_i32 = arith.constant 0 : i32
    %c0_i32_0 = arith.constant 0 : i32
    %c0_i32_1 = arith.constant 0 : i32
    return %arg0, %c0_i32, %c0_i32_0 : i32, i32, i32
  }
  func.func @transform_1(%arg0: i32) -> (i32, i32, i32) {
    %c0_i32 = arith.constant 0 : i32
    %c0_i32_0 = arith.constant 0 : i32
    %c0_i32_1 = arith.constant 0 : i32
    %c0_i32_2 = arith.constant 0 : i32
    return %c0_i32, %c0_i32_0, %c0_i32_1 : i32, i32, i32
  }
  func.func @transform_2(%arg0: i32) -> (i32, i32, i32) {
    %c0_i32 = arith.constant 0 : i32
    %c0_i32_0 = arith.constant 0 : i32
    %c0_i32_1 = arith.constant 0 : i32
    %c0_i32_2 = arith.constant 0 : i32
    return %c0_i32, %c0_i32_0, %c0_i32_1 : i32, i32, i32
  }
  func.func @transform_3(%arg0: i32) -> (i32, i32) {
    %c0_i32 = arith.constant 0 : i32
    %c0_i32_0 = arith.constant 0 : i32
    %c0_i32_1 = arith.constant 0 : i32
    return %c0_i32, %c0_i32_0 : i32, i32
  }
  func.func @transform_4(%arg0: i32) -> (i32, i32, i32) {
    %c0_i32 = arith.constant 0 : i32
    %c0_i32_0 = arith.constant 0 : i32
    %c0_i32_1 = arith.constant 0 : i32
    %c0_i32_2 = arith.constant 0 : i32
    return %c0_i32, %c0_i32_0, %c0_i32_1 : i32, i32, i32
  }
  func.func @transform_5(%arg0: i32) -> (i32, i32, i32) {
    %c0_i32 = arith.constant 0 : i32
    %c0_i32_0 = arith.constant 0 : i32
    %c0_i32_1 = arith.constant 0 : i32
    %c0_i32_2 = arith.constant 0 : i32
    return %c0_i32, %c0_i32_0, %c0_i32_1 : i32, i32, i32
  }
  func.func @transform_6(%arg0: i32) -> (i32, i32) {
    %c0_i32 = arith.constant 0 : i32
    %c0_i32_0 = arith.constant 0 : i32
    %c0_i32_1 = arith.constant 0 : i32
    return %c0_i32, %c0_i32_0 : i32, i32
  }
  func.func @transform_7(%arg0: i32) -> (i32, i32, i32) {
    %c0_i32 = arith.constant 0 : i32
    %c0_i32_0 = arith.constant 0 : i32
    %c0_i32_1 = arith.constant 0 : i32
    %c0_i32_2 = arith.constant 0 : i32
    return %c0_i32, %c0_i32_0, %c0_i32_1 : i32, i32, i32
  }
  func.func @transform_8(%arg0: i32) -> (i32, i32, i32) {
    %c0_i32 = arith.constant 0 : i32
    %c0_i32_0 = arith.constant 0 : i32
    %c0_i32_1 = arith.constant 0 : i32
    %c0_i32_2 = arith.constant 0 : i32
    return %c0_i32, %c0_i32_0, %c0_i32_1 : i32, i32, i32
  }
  func.func @transform_9(%arg0: i32) -> (i32, i32) {
    %c0_i32 = arith.constant 0 : i32
    %c0_i32_0 = arith.constant 0 : i32
    %c0_i32_1 = arith.constant 0 : i32
    return %c0_i32, %c0_i32_0 : i32, i32
  }
  func.func @transform_10(%arg0: i32) -> (i32, i32, i32) {
    %c0_i32 = arith.constant 0 : i32
    %c0_i32_0 = arith.constant 0 : i32
    %c0_i32_1 = arith.constant 0 : i32
    %c0_i32_2 = arith.constant 0 : i32
    return %c0_i32, %c0_i32_0, %c0_i32_1 : i32, i32, i32
  }
  func.func @transform_11(%arg0: i32) -> (i32, i32) {
    %c0_i32 = arith.constant 0 : i32
    %c0_i32_0 = arith.constant 0 : i32
    %c0_i32_1 = arith.constant 0 : i32
    return %c0_i32, %c0_i32_0 : i32, i32
  }
  func.func @transform_12(%arg0: i32) -> (i32, i32) {
    %c0_i32 = arith.constant 0 : i32
    %c0_i32_0 = arith.constant 0 : i32
    %c0_i32_1 = arith.constant 0 : i32
    return %c0_i32, %c0_i32_0 : i32, i32
  }
  func.func @transform_13(%arg0: i32) -> (i32, i32) {
    %c0_i32 = arith.constant 0 : i32
    %c0_i32_0 = arith.constant 0 : i32
    %c0_i32_1 = arith.constant 0 : i32
    return %c0_i32, %c0_i32_0 : i32, i32
  }
  func.func @transform_14(%arg0: i32) -> (i32, i32, i32) {
    %c0_i32 = arith.constant 0 : i32
    %c0_i32_0 = arith.constant 0 : i32
    %c0_i32_1 = arith.constant 0 : i32
    return %arg0, %c0_i32, %c0_i32_0 : i32, i32, i32
  }
}

</mosaic_0001>

<llo_original>
// kernel: dueling_dqn_forward.1
$region0: #{dueling_dqn_forward.1}
  #allocation0 [shape = 'u32[]', space=smem, size = 0x4, offset = 0x4, fixed_abs, tag = 'smem constant byte address 0x4 - core index']
  #allocation1 [shape = 'u32[144,128]{1,0:T(1,128)}', space=vmem, size = 0x12000, scoped, tag = 'internal scratch']
  %s0 = inlined_call_operand.vmem [shape: f32[2,64,4], index: 0, kind: input, shape index: {}]
  %s1 = inlined_call_operand.vmem [shape: f32[9,16,64], index: 1, kind: input, shape index: {}]
  %s2 = inlined_call_operand.hbm [shape: f32[9,4,32], index: 2, kind: input, shape index: {}]
  %s3 = inlined_call_operand.vmem [shape: f32[1,32], index: 3, kind: input, shape index: {}]
  %s4 = inlined_call_operand.vmem [shape: f32[4,16,16], index: 4, kind: input, shape index: {}]
  %s5 = inlined_call_operand.hbm [shape: f32[4,32,64], index: 5, kind: input, shape index: {}]
  %s6 = inlined_call_operand.vmem [shape: f32[1,64], index: 6, kind: input, shape index: {}]
  %s7 = inlined_call_operand.hbm [shape: f32[4,8,16], index: 7, kind: input, shape index: {}]
  %s8 = inlined_call_operand.hbm [shape: f32[4,64,64], index: 8, kind: input, shape index: {}]
  %s9 = inlined_call_operand.vmem [shape: f32[1,64], index: 9, kind: input, shape index: {}]
  %s10 = inlined_call_operand.hbm [shape: f32[4,64,256], index: 10, kind: input, shape index: {}]
  %s11 = inlined_call_operand.vmem [shape: f32[1,256], index: 11, kind: input, shape index: {}]
  %s12 = inlined_call_operand.hbm [shape: f32[256,128], index: 12, kind: input, shape index: {}]
  %s13 = inlined_call_operand.vmem [shape: f32[1,128], index: 13, kind: input, shape index: {}]
  %s14 = inlined_call_operand.hbm [shape: f32[2,1,128], index: 14, kind: output, shape index: {}]
  %s15 = sld [smem:[#allocation0]]
  $region113: #{dueling_dqn_forward.1} parent=0
    _
  %s17 = ssub.s32 1, %s15
  %s18 = scalar_select 0, %s17, %s15
  $region1: #{dueling_dqn_forward.1} parent=0
    #allocation2 [shape = 'u8[18432]{0}', space=vmem, size = 0x4800, scoped, tag = 'input window, operand 2, single buffered']
    #allocation3 [shape = 's32[2]{0}', space=sflag, size = 0x8, scoped, tag = 'scoped memory for dueling_dqn_forward.1']
    #allocation4 [shape = 's32[2]{0}', space=sflag, size = 0x8, scoped, tag = 'scoped memory for dueling_dqn_forward.1']
    #allocation5 [shape = 'u8[65536]{0}', space=vmem, size = 0x10000, scoped, tag = 'input window, operand 5, single buffered']
    #allocation6 [shape = 's32[1]{0}', space=sflag, size = 0x4, scoped, tag = 'scoped memory for dueling_dqn_forward.1']
    #allocation7 [shape = 'u8[16384]{0}', space=vmem, size = 0x4000, scoped, tag = 'input window, operand 7, single buffered']
    #allocation8 [shape = 'u8[131072]{0}', space=vmem, size = 0x20000, scoped, tag = 'input window, operand 8, single buffered']
    #allocation9 [shape = 's32[1]{0}', space=sflag, size = 0x4, scoped, tag = 'scoped memory for dueling_dqn_forward.1']
    #allocation10 [shape = 'u8[262144]{0}', space=vmem, size = 0x40000, scoped, tag = 'input window, operand 10, single buffered']
    #allocation11 [shape = 'u8[131072]{0}', space=vmem, size = 0x20000, scoped, tag = 'input window, operand 12, single buffered']
    #allocation12 [shape = 's32[1]{0}', space=sflag, size = 0x4, scoped, tag = 'scoped memory for dueling_dqn_forward.1']
    #allocation13 [shape = 'u8[1024]{0}', space=vmem, size = 0x400, scoped, tag = 'output window, operand 0']
    %19 = vsyncpa [#allocation3], 0
    %20 = vsyncpa [#allocation6], 0
    %21 = vsyncpa [#allocation9], 0
    %22 = vsyncpa [#allocation12], 0
    %23 = vsyncpa [#allocation4], 0
    %s24 = scalar_lea.sflag [#allocation4], 1
    %25 = vsyncpa %s24, 0
    loop: start=0, step=1, limit=4
    $region2: #{dueling_dqn_forward.1} parent=1 // loop_pre_header
      _
    $region3: #{dueling_dqn_forward.1} parent=1 // loop_header
      %s27 = sphi 0, %s31
      %p28 = scmp.ge.s32.totalorder %s27, 4
      %s37 = sphi 0, %s39
      %s40 = sphi 0, %s37
      %s41 = sphi 0, %s40
      %s57 = sphi 0, %s41
      %s61 = sphi 0, %s61
      %s63 = sphi 0, %s61
      %s64 = sphi 0, %s63
      %s78 = sphi 0, %s64
      %s82 = sphi 0, %s82
      %s84 = sphi 0, %s82
      %s85 = sphi 0, %s84
      %s99 = sphi 0, %s85
      %s103 = sphi 0, %s103
      %s105 = sphi 0, %s103
      %s106 = sphi 0, %s105
      %s120 = sphi 0, %s106
      %s124 = sphi 0, %s124
      %s126 = sphi 0, %s124
      %s127 = sphi 0, %s126
      %s141 = sphi 0, %s127
      %s145 = sphi 0, %s145
      %s147 = sphi 0, %s145
      %s148 = sphi 0, %s147
      %s162 = sphi 0, %s148
      %s166 = sphi 0, %s166
      %s168 = sphi 0, %s166
      %s169 = sphi 0, %s168
      %s183 = sphi 0, %s169
      %s187 = sphi 0, %s187
      %s189 = sphi 0, %s187
      %s190 = sphi 0, %s189
      %s204 = sphi 0, %s190
      %s208 = sphi 0, %s208
      %s210 = sphi 0, %s208
      %s211 = sphi 0, %s210
      %s225 = sphi 0, %s211
      %s229 = sphi 0, %s229
      %s231 = sphi 0, %s229
      %s232 = sphi 0, %s231
      %s246 = sphi 0, %s232
      %s250 = sphi 0, %s250
      %s252 = sphi 0, %s250
      %s253 = sphi 0, %s252
      %s267 = sphi 0, %s253
      %s271 = sphi 0, %s271
      %s273 = sphi 0, %s271
      %s274 = sphi 0, %s273
      %s288 = sphi 0, %s274
      %s292 = sphi 0, %s292
      %s294 = sphi 0, %s292
      %s295 = sphi 0, %s294
      %s309 = sphi 0, %s295
      %s313 = sphi 0, %s313
      %s315 = sphi 0, %s313
      %s316 = sphi 0, %s315
      %s330 = sphi 0, %s316
      %s336 = sphi 0, %s338
      %s339 = sphi 0, %s336
      %s340 = sphi 0, %s339
      %s356 = sphi 0, %s340
    $region4: #{dueling_dqn_forward.1} parent=1 // loop_header_branch
      %30 = sbr.rel (%p28) target = $region8
    $region5: #{dueling_dqn_forward.1} parent=1 // loop_body
      %s32 = ssub.s32 %s27, 1
      %s33 = ssub.s32 %s27, 2
      %s34 = sadd.s32 %s27, 1
      %s35 = ssub.s32 %s27, %s34
      %p36 = scmp.eq.s32.totalorder %s35, 0
      %s38 = sadd.s32 %s37, 1
      %s39 = scalar_select %p36, %s37, %s38
      %p42 = pneg %p36
      %p43 = scmp.eq.s32.totalorder %s27, 1
      %p44 = por %p42, %p43
      %p45 = scmp.ne.s32.totalorder %s37, %s40
      %p46 = scmp.eq.s32.totalorder %s27, 0
      %p47 = por %p45, %p46
      %p48 = scmp.ne.s32.totalorder %s37, %s40
      %p49 = scmp.eq.s32.totalorder %s32, 1
      %p50 = por %p48, %p49
      %p51 = scmp.ne.s32.totalorder %s40, %s41
      %p52 = scmp.eq.s32.totalorder %s32, 0
      %p53 = por %p51, %p52
      %p54 = scmp.ne.s32.totalorder %s40, %s41
      %p55 = scmp.eq.s32.totalorder %s33, 1
      %p56 = por %p54, %p55
      %p58 = scmp.ne.s32.totalorder %s41, %s57
      %p59 = scmp.eq.s32.totalorder %s33, 0
      %p60 = por %p58, %p59
      %s62 = sadd.s32 %s61, 1
      %p65 = scmp.eq.s32.totalorder %s27, 1
      %p66 = scmp.ne.s32.totalorder %s61, %s63
      %p67 = scmp.eq.s32.totalorder %s27, 0
      %p68 = por %p66, %p67
      %p69 = scmp.ne.s32.totalorder %s61, %s63
      %p70 = scmp.eq.s32.totalorder %s32, 1
      %p71 = por %p69, %p70
      %p72 = scmp.ne.s32.totalorder %s63, %s64
      %p73 = scmp.eq.s32.totalorder %s32, 0
      %p74 = por %p72, %p73
      %p75 = scmp.ne.s32.totalorder %s63, %s64
      %p76 = scmp.eq.s32.totalorder %s33, 1
      %p77 = por %p75, %p76
      %p79 = scmp.ne.s32.totalorder %s64, %s78
      %p80 = scmp.eq.s32.totalorder %s33, 0
      %p81 = por %p79, %p80
      %s83 = sadd.s32 %s82, 1
      %p86 = scmp.eq.s32.totalorder %s27, 1
      %p87 = scmp.ne.s32.totalorder %s82, %s84
      %p88 = scmp.eq.s32.totalorder %s27, 0
      %p89 = por %p87, %p88
      %p90 = scmp.ne.s32.totalorder %s82, %s84
      %p91 = scmp.eq.s32.totalorder %s32, 1
      %p92 = por %p90, %p91
      %p93 = scmp.ne.s32.totalorder %s84, %s85
      %p94 = scmp.eq.s32.totalorder %s32, 0
      %p95 = por %p93, %p94
      %p96 = scmp.ne.s32.totalorder %s84, %s85
      %p97 = scmp.eq.s32.totalorder %s33, 1
      %p98 = por %p96, %p97
      %p100 = scmp.ne.s32.totalorder %s85, %s99
      %p101 = scmp.eq.s32.totalorder %s33, 0
      %p102 = por %p100, %p101
      %s104 = sadd.s32 %s103, 1
      %p107 = scmp.eq.s32.totalorder %s27, 1
      %p108 = scmp.ne.s32.totalorder %s103, %s105
      %p109 = scmp.eq.s32.totalorder %s27, 0
      %p110 = por %p108, %p109
      %p111 = scmp.ne.s32.totalorder %s103, %s105
      %p112 = scmp.eq.s32.totalorder %s32, 1
      %p113 = por %p111, %p112
      %p114 = scmp.ne.s32.totalorder %s105, %s106
      %p115 = scmp.eq.s32.totalorder %s32, 0
      %p116 = por %p114, %p115
      %p117 = scmp.ne.s32.totalorder %s105, %s106
      %p118 = scmp.eq.s32.totalorder %s33, 1
      %p119 = por %p117, %p118
      %p121 = scmp.ne.s32.totalorder %s106, %s120
      %p122 = scmp.eq.s32.totalorder %s33, 0
      %p123 = por %p121, %p122
      %s125 = sadd.s32 %s124, 1
      %p128 = scmp.eq.s32.totalorder %s27, 1
      %p129 = scmp.ne.s32.totalorder %s124, %s126
      %p130 = scmp.eq.s32.totalorder %s27, 0
      %p131 = por %p129, %p130
      %p132 = scmp.ne.s32.totalorder %s124, %s126
      %p133 = scmp.eq.s32.totalorder %s32, 1
      %p134 = por %p132, %p133
      %p135 = scmp.ne.s32.totalorder %s126, %s127
      %p136 = scmp.eq.s32.totalorder %s32, 0
      %p137 = por %p135, %p136
      %p138 = scmp.ne.s32.totalorder %s126, %s127
      %p139 = scmp.eq.s32.totalorder %s33, 1
      %p140 = por %p138, %p139
      %p142 = scmp.ne.s32.totalorder %s127, %s141
      %p143 = scmp.eq.s32.totalorder %s33, 0
      %p144 = por %p142, %p143
      %s146 = sadd.s32 %s145, 1
      %p149 = scmp.eq.s32.totalorder %s27, 1
      %p150 = scmp.ne.s32.totalorder %s145, %s147
      %p151 = scmp.eq.s32.totalorder %s27, 0
      %p152 = por %p150, %p151
      %p153 = scmp.ne.s32.totalorder %s145, %s147
      %p154 = scmp.eq.s32.totalorder %s32, 1
      %p155 = por %p153, %p154
      %p156 = scmp.ne.s32.totalorder %s147, %s148
      %p157 = scmp.eq.s32.totalorder %s32, 0
      %p158 = por %p156, %p157
      %p159 = scmp.ne.s32.totalorder %s147, %s148
      %p160 = scmp.eq.s32.totalorder %s33, 1
      %p161 = por %p159, %p160
      %p163 = scmp.ne.s32.totalorder %s148, %s162
      %p164 = scmp.eq.s32.totalorder %s33, 0
      %p165 = por %p163, %p164
      %s167 = sadd.s32 %s166, 1
      %p170 = scmp.eq.s32.totalorder %s27, 1
      %p171 = scmp.ne.s32.totalorder %s166, %s168
      %p172 = scmp.eq.s32.totalorder %s27, 0
      %p173 = por %p171, %p172
      %p174 = scmp.ne.s32.totalorder %s166, %s168
      %p175 = scmp.eq.s32.totalorder %s32, 1
      %p176 = por %p174, %p175
      %p177 = scmp.ne.s32.totalorder %s168, %s169
      %p178 = scmp.eq.s32.totalorder %s32, 0
      %p179 = por %p177, %p178
      %p180 = scmp.ne.s32.totalorder %s168, %s169
      %p181 = scmp.eq.s32.totalorder %s33, 1
      %p182 = por %p180, %p181
      %p184 = scmp.ne.s32.totalorder %s169, %s183
      %p185 = scmp.eq.s32.totalorder %s33, 0
      %p186 = por %p184, %p185
      %s188 = sadd.s32 %s187, 1
      %p191 = scmp.eq.s32.totalorder %s27, 1
      %p192 = scmp.ne.s32.totalorder %s187, %s189
      %p193 = scmp.eq.s32.totalorder %s27, 0
      %p194 = por %p192, %p193
      %p195 = scmp.ne.s32.totalorder %s187, %s189
      %p196 = scmp.eq.s32.totalorder %s32, 1
      %p197 = por %p195, %p196
      %p198 = scmp.ne.s32.totalorder %s189, %s190
      %p199 = scmp.eq.s32.totalorder %s32, 0
      %p200 = por %p198, %p199
      %p201 = scmp.ne.s32.totalorder %s189, %s190
      %p202 = scmp.eq.s32.totalorder %s33, 1
      %p203 = por %p201, %p202
      %p205 = scmp.ne.s32.totalorder %s190, %s204
      %p206 = scmp.eq.s32.totalorder %s33, 0
      %p207 = por %p205, %p206
      %s209 = sadd.s32 %s208, 1
      %p212 = scmp.eq.s32.totalorder %s27, 1
      %p213 = scmp.ne.s32.totalorder %s208, %s210
      %p214 = scmp.eq.s32.totalorder %s27, 0
      %p215 = por %p213, %p214
      %p216 = scmp.ne.s32.totalorder %s208, %s210
      %p217 = scmp.eq.s32.totalorder %s32, 1
      %p218 = por %p216, %p217
      %p219 = scmp.ne.s32.totalorder %s210, %s211
      %p220 = scmp.eq.s32.totalorder %s32, 0
      %p221 = por %p219, %p220
      %p222 = scmp.ne.s32.totalorder %s210, %s211
      %p223 = scmp.eq.s32.totalorder %s33, 1
      %p224 = por %p222, %p223
      %p226 = scmp.ne.s32.totalorder %s211, %s225
      %p227 = scmp.eq.s32.totalorder %s33, 0
      %p228 = por %p226, %p227
      %s230 = sadd.s32 %s229, 1
      %p233 = scmp.eq.s32.totalorder %s27, 1
      %p234 = scmp.ne.s32.totalorder %s229, %s231
      %p235 = scmp.eq.s32.totalorder %s27, 0
      %p236 = por %p234, %p235
      %p237 = scmp.ne.s32.totalorder %s229, %s231
      %p238 = scmp.eq.s32.totalorder %s32, 1
      %p239 = por %p237, %p238
      %p240 = scmp.ne.s32.totalorder %s231, %s232
      %p241 = scmp.eq.s32.totalorder %s32, 0
      %p242 = por %p240, %p241
      %p243 = scmp.ne.s32.totalorder %s231, %s232
      %p244 = scmp.eq.s32.totalorder %s33, 1
      %p245 = por %p243, %p244
      %p247 = scmp.ne.s32.totalorder %s232, %s246
      %p248 = scmp.eq.s32.totalorder %s33, 0
      %p249 = por %p247, %p248
      %s251 = sadd.s32 %s250, 1
      %p254 = scmp.eq.s32.totalorder %s27, 1
      %p255 = scmp.ne.s32.totalorder %s250, %s252
      %p256 = scmp.eq.s32.totalorder %s27, 0
      %p257 = por %p255, %p256
      %p258 = scmp.ne.s32.totalorder %s250, %s252
      %p259 = scmp.eq.s32.totalorder %s32, 1
      %p260 = por %p258, %p259
      %p261 = scmp.ne.s32.totalorder %s252, %s253
      %p262 = scmp.eq.s32.totalorder %s32, 0
      %p263 = por %p261, %p262
      %p264 = scmp.ne.s32.totalorder %s252, %s253
      %p265 = scmp.eq.s32.totalorder %s33, 1
      %p266 = por %p264, %p265
      %p268 = scmp.ne.s32.totalorder %s253, %s267
      %p269 = scmp.eq.s32.totalorder %s33, 0
      %p270 = por %p268, %p269
      %s272 = sadd.s32 %s271, 1
      %p275 = scmp.eq.s32.totalorder %s27, 1
      %p276 = scmp.ne.s32.totalorder %s271, %s273
      %p277 = scmp.eq.s32.totalorder %s27, 0
      %p278 = por %p276, %p277
      %p279 = scmp.ne.s32.totalorder %s271, %s273
      %p280 = scmp.eq.s32.totalorder %s32, 1
      %p281 = por %p279, %p280
      %p282 = scmp.ne.s32.totalorder %s273, %s274
      %p283 = scmp.eq.s32.totalorder %s32, 0
      %p284 = por %p282, %p283
      %p285 = scmp.ne.s32.totalorder %s273, %s274
      %p286 = scmp.eq.s32.totalorder %s33, 1
      %p287 = por %p285, %p286
      %p289 = scmp.ne.s32.totalorder %s274, %s288
      %p290 = scmp.eq.s32.totalorder %s33, 0
      %p291 = por %p289, %p290
      %s293 = sadd.s32 %s292, 1
      %p296 = scmp.eq.s32.totalorder %s27, 1
      %p297 = scmp.ne.s32.totalorder %s292, %s294
      %p298 = scmp.eq.s32.totalorder %s27, 0
      %p299 = por %p297, %p298
      %p300 = scmp.ne.s32.totalorder %s292, %s294
      %p301 = scmp.eq.s32.totalorder %s32, 1
      %p302 = por %p300, %p301
      %p303 = scmp.ne.s32.totalorder %s294, %s295
      %p304 = scmp.eq.s32.totalorder %s32, 0
      %p305 = por %p303, %p304
      %p306 = scmp.ne.s32.totalorder %s294, %s295
      %p307 = scmp.eq.s32.totalorder %s33, 1
      %p308 = por %p306, %p307
      %p310 = scmp.ne.s32.totalorder %s295, %s309
      %p311 = scmp.eq.s32.totalorder %s33, 0
      %p312 = por %p310, %p311
      %s314 = sadd.s32 %s313, 1
      %p317 = scmp.eq.s32.totalorder %s27, 1
      %p318 = scmp.ne.s32.totalorder %s313, %s315
      %p319 = scmp.eq.s32.totalorder %s27, 0
      %p320 = por %p318, %p319
      %p321 = scmp.ne.s32.totalorder %s313, %s315
      %p322 = scmp.eq.s32.totalorder %s32, 1
      %p323 = por %p321, %p322
      %p324 = scmp.ne.s32.totalorder %s315, %s316
      %p325 = scmp.eq.s32.totalorder %s32, 0
      %p326 = por %p324, %p325
      %p327 = scmp.ne.s32.totalorder %s315, %s316
      %p328 = scmp.eq.s32.totalorder %s33, 1
      %p329 = por %p327, %p328
      %p331 = scmp.ne.s32.totalorder %s316, %s330
      %p332 = scmp.eq.s32.totalorder %s33, 0
      %p333 = por %p331, %p332
      %s334 = ssub.s32 %s27, %s34
      %p335 = scmp.eq.s32.totalorder %s334, 0
      %s337 = sadd.s32 %s336, 1
      %s338 = scalar_select %p335, %s336, %s337
      %p341 = pneg %p335
      %p342 = scmp.eq.s32.totalorder %s27, 1
      %p343 = por %p341, %p342
      %p344 = scmp.ne.s32.totalorder %s336, %s339
      %p345 = scmp.eq.s32.totalorder %s27, 0
      %p346 = por %p344, %p345
      %p347 = scmp.ne.s32.totalorder %s336, %s339
      %p348 = scmp.eq.s32.totalorder %s32, 1
      %p349 = por %p347, %p348
      %p350 = scmp.ne.s32.totalorder %s339, %s340
      %p351 = scmp.eq.s32.totalorder %s32, 0
      %p352 = por %p350, %p351
      %p353 = scmp.ne.s32.totalorder %s339, %s340
      %p354 = scmp.eq.s32.totalorder %s33, 1
      %p355 = por %p353, %p354
      %p357 = scmp.ne.s32.totalorder %s340, %s356
      %p358 = scmp.eq.s32.totalorder %s33, 0
      %p359 = por %p357, %p358
      %p360 = scmp.le.s32.totalorder 1, %s27
      %p361 = scmp.lt.s32.totalorder %s27, 3
      %p362 = pnand %p360, %p361
      %p363 = pneg %p362
      // Predicated region
      $region9: #{dueling_dqn_forward.1} parent=5 // pred_check
        _
      $region10: #{dueling_dqn_forward.1} parent=5 // pred_check_branch
        %365 = sbr.rel (%p362) target = $region12
      $region11: #{dueling_dqn_forward.1} parent=5 // pred_region
        %s366 = ssub.s32 %s27, 1
        // Predicated region
        $region13: #{dueling_dqn_forward.1} parent=11 // pred_check
          %p367 = pneg %p74
        $region14: #{dueling_dqn_forward.1} parent=11 // pred_check_branch
          %369 = sbr.rel (%p367) target = $region16
        $region15: #{dueling_dqn_forward.1} parent=11 // pred_region
          _
        $region16: #{dueling_dqn_forward.1} parent=11 // pred_fallthru
          _
        // Predicated region
        $region17: #{dueling_dqn_forward.1} parent=11 // pred_check
          %p370 = pneg %p95
        $region18: #{dueling_dqn_forward.1} parent=11 // pred_check_branch
          %372 = sbr.rel (%p370) target = $region20
        $region19: #{dueling_dqn_forward.1} parent=11 // pred_region
          %s374 = ssub.s32 576, 576
          %375 = vsyncadd [#allocation3], %s374
          %s376 = sshll.u32 [#allocation2], 4
          %s377 = int_to_ptr.vmem [resolvable:$true] %s376
          %382 = dma.hbm_to_vmem [thread:$0]  %s2, 576, %s377, [#allocation3], 64, 64, 4
        $region20: #{dueling_dqn_forward.1} parent=11 // pred_fallthru
          _
        // Predicated region
        $region21: #{dueling_dqn_forward.1} parent=11 // pred_check
          %p383 = pneg %p116
        $region22: #{dueling_dqn_forward.1} parent=11 // pred_check_branch
          %385 = sbr.rel (%p383) target = $region24
        $region23: #{dueling_dqn_forward.1} parent=11 // pred_region
          _
        $region24: #{dueling_dqn_forward.1} parent=11 // pred_fallthru
          _
        // Predicated region
        $region25: #{dueling_dqn_forward.1} parent=11 // pred_check
          %p386 = pneg %p137
        $region26: #{dueling_dqn_forward.1} parent=11 // pred_check_branch
          %388 = sbr.rel (%p386) target = $region28
        $region27: #{dueling_dqn_forward.1} parent=11 // pred_region
          _
        $region28: #{dueling_dqn_forward.1} parent=11 // pred_fallthru
          _
        // Predicated region
        $region29: #{dueling_dqn_forward.1} parent=11 // pred_check
          %p389 = pneg %p158
        $region30: #{dueling_dqn_forward.1} parent=11 // pred_check_branch
          %391 = sbr.rel (%p389) target = $region32
        $region31: #{dueling_dqn_forward.1} parent=11 // pred_region
          %s393 = ssub.s32 2048, 2048
          %394 = vsyncadd [#allocation6], %s393
          %s395 = sshll.u32 [#allocation5], 4
          %s396 = int_to_ptr.vmem [resolvable:$true] %s395
          %401 = dma.hbm_to_vmem [thread:$0]  %s5, 2048, %s396, [#allocation6], 128, 128, 8
        $region32: #{dueling_dqn_forward.1} parent=11 // pred_fallthru
          _
        // Predicated region
        $region33: #{dueling_dqn_forward.1} parent=11 // pred_check
          %p402 = pneg %p179
        $region34: #{dueling_dqn_forward.1} parent=11 // pred_check_branch
          %404 = sbr.rel (%p402) target = $region36
        $region35: #{dueling_dqn_forward.1} parent=11 // pred_region
          _
        $region36: #{dueling_dqn_forward.1} parent=11 // pred_fallthru
          _
        // Predicated region
        $region37: #{dueling_dqn_forward.1} parent=11 // pred_check
          %p405 = pneg %p200
        $region38: #{dueling_dqn_forward.1} parent=11 // pred_check_branch
          %407 = sbr.rel (%p405) target = $region40
        $region39: #{dueling_dqn_forward.1} parent=11 // pred_region
          %s409 = ssub.s32 512, 512
          %410 = vsyncadd [#allocation6], %s409
          %s411 = sshll.u32 [#allocation7], 4
          %s412 = int_to_ptr.vmem [resolvable:$true] %s411
          %417 = dma.hbm_to_vmem [thread:$0]  %s7, 512, %s412, [#allocation6], 128, 128, 8
        $region40: #{dueling_dqn_forward.1} parent=11 // pred_fallthru
          _
        // Predicated region
        $region41: #{dueling_dqn_forward.1} parent=11 // pred_check
          %p418 = pneg %p221
        $region42: #{dueling_dqn_forward.1} parent=11 // pred_check_branch
          %420 = sbr.rel (%p418) target = $region44
        $region43: #{dueling_dqn_forward.1} parent=11 // pred_region
          %s422 = ssub.s32 4096, 4096
          %423 = vsyncadd [#allocation9], %s422
          %s424 = sshll.u32 [#allocation8], 4
          %s425 = int_to_ptr.vmem [resolvable:$true] %s424
          %430 = dma.hbm_to_vmem [thread:$0]  %s8, 4096, %s425, [#allocation9], 128, 128, 8
        $region44: #{dueling_dqn_forward.1} parent=11 // pred_fallthru
          _
        // Predicated region
        $region45: #{dueling_dqn_forward.1} parent=11 // pred_check
          %p431 = pneg %p242
        $region46: #{dueling_dqn_forward.1} parent=11 // pred_check_branch
          %433 = sbr.rel (%p431) target = $region48
        $region47: #{dueling_dqn_forward.1} parent=11 // pred_region
          _
        $region48: #{dueling_dqn_forward.1} parent=11 // pred_fallthru
          _
        // Predicated region
        $region49: #{dueling_dqn_forward.1} parent=11 // pred_check
          %p434 = pneg %p263
        $region50: #{dueling_dqn_forward.1} parent=11 // pred_check_branch
          %436 = sbr.rel (%p434) target = $region52
        $region51: #{dueling_dqn_forward.1} parent=11 // pred_region
          %s438 = ssub.s32 8192, 8192
          %439 = vsyncadd [#allocation9], %s438
          %s440 = sshll.u32 [#allocation10], 4
          %s441 = int_to_ptr.vmem [resolvable:$true] %s440
          %446 = dma.hbm_to_vmem [thread:$0]  %s10, 8192, %s441, [#allocation9], 256, 256, 16
        $region52: #{dueling_dqn_forward.1} parent=11 // pred_fallthru
          _
        // Predicated region
        $region53: #{dueling_dqn_forward.1} parent=11 // pred_check
          %p447 = pneg %p284
        $region54: #{dueling_dqn_forward.1} parent=11 // pred_check_branch
          %449 = sbr.rel (%p447) target = $region56
        $region55: #{dueling_dqn_forward.1} parent=11 // pred_region
          _
        $region56: #{dueling_dqn_forward.1} parent=11 // pred_fallthru
          _
        // Predicated region
        $region57: #{dueling_dqn_forward.1} parent=11 // pred_check
          %p450 = pneg %p305
        $region58: #{dueling_dqn_forward.1} parent=11 // pred_check_branch
          %452 = sbr.rel (%p450) target = $region60
        $region59: #{dueling_dqn_forward.1} parent=11 // pred_region
          %s454 = ssub.s32 4096, 4096
          %455 = vsyncadd [#allocation12], %s454
          %s456 = sshll.u32 [#allocation11], 4
          %s457 = int_to_ptr.vmem [resolvable:$true] %s456
          %462 = dma.hbm_to_vmem [thread:$0]  %s12, 4096, %s457, [#allocation12], 128, 128, 8
        $region60: #{dueling_dqn_forward.1} parent=11 // pred_fallthru
          _
        // Predicated region
        $region61: #{dueling_dqn_forward.1} parent=11 // pred_check
          %p463 = pneg %p326
        $region62: #{dueling_dqn_forward.1} parent=11 // pred_check_branch
          %465 = sbr.rel (%p463) target = $region64
        $region63: #{dueling_dqn_forward.1} parent=11 // pred_region
          _
        $region64: #{dueling_dqn_forward.1} parent=11 // pred_fallthru
          _
      $region12: #{dueling_dqn_forward.1} parent=5 // pred_fallthru
        _
      %p466 = scmp.lt.s32.totalorder %s27, 2
      // Predicated region
      $region65: #{dueling_dqn_forward.1} parent=5 // pred_check
        %p467 = pneg %p466
      $region66: #{dueling_dqn_forward.1} parent=5 // pred_check_branch
        %469 = sbr.rel (%p467) target = $region68
      $region67: #{dueling_dqn_forward.1} parent=5 // pred_region
        // Predicated region
        $region69: #{dueling_dqn_forward.1} parent=67 // pred_check
          %p470 = pneg %p47
        $region70: #{dueling_dqn_forward.1} parent=67 // pred_check_branch
          %472 = sbr.rel (%p470) target = $region72
        $region71: #{dueling_dqn_forward.1} parent=67 // pred_region
          %p473 = scmp.lt.s32.totalorder %s27, 1
          %s474 = scalar_select %p473, %s27, 1
          %s475 = smul.addr %s474, 8
          %s476 = smul.addr %s475, 8
          %s477 = scalar_lea.vmem %s0, %s476
        $region72: #{dueling_dqn_forward.1} parent=67 // pred_fallthru
          _
      $region68: #{dueling_dqn_forward.1} parent=5 // pred_fallthru
        _
      %p478 = scmp.le.s32.totalorder 1, %s27
      %p479 = scmp.lt.s32.totalorder %s27, 3
      %p480 = pnand %p478, %p479
      %p481 = pneg %p480
      // Predicated region
      $region73: #{dueling_dqn_forward.1} parent=5 // pred_check
        _
      $region74: #{dueling_dqn_forward.1} parent=5 // pred_check_branch
        %483 = sbr.rel (%p480) target = $region76
      $region75: #{dueling_dqn_forward.1} parent=5 // pred_region
        %s484 = ssub.s32 %s27, 1
        // Predicated region
        $region77: #{dueling_dqn_forward.1} parent=75 // pred_check
          %p485 = pneg %p95
        $region78: #{dueling_dqn_forward.1} parent=75 // pred_check_branch
          %487 = sbr.rel (%p485) target = $region80
        $region79: #{dueling_dqn_forward.1} parent=75 // pred_region
          %488 = dma.done [#allocation3], 576
        $region80: #{dueling_dqn_forward.1} parent=75 // pred_fallthru
          _
        // Predicated region
        $region81: #{dueling_dqn_forward.1} parent=75 // pred_check
          %p489 = pneg %p158
        $region82: #{dueling_dqn_forward.1} parent=75 // pred_check_branch
          %491 = sbr.rel (%p489) target = $region84
        $region83: #{dueling_dqn_forward.1} parent=75 // pred_region
          %492 = dma.done [#allocation6], 2048
        $region84: #{dueling_dqn_forward.1} parent=75 // pred_fallthru
          _
        // Predicated region
        $region85: #{dueling_dqn_forward.1} parent=75 // pred_check
          %p493 = pneg %p200
        $region86: #{dueling_dqn_forward.1} parent=75 // pred_check_branch
          %495 = sbr.rel (%p493) target = $region88
        $region87: #{dueling_dqn_forward.1} parent=75 // pred_region
          %496 = dma.done [#allocation6], 512
        $region88: #{dueling_dqn_forward.1} parent=75 // pred_fallthru
          _
        // Predicated region
        $region89: #{dueling_dqn_forward.1} parent=75 // pred_check
          %p497 = pneg %p221
        $region90: #{dueling_dqn_forward.1} parent=75 // pred_check_branch
          %499 = sbr.rel (%p497) target = $region92
        $region91: #{dueling_dqn_forward.1} parent=75 // pred_region
          %500 = dma.done [#allocation9], 4096
        $region92: #{dueling_dqn_forward.1} parent=75 // pred_fallthru
          _
        // Predicated region
        $region93: #{dueling_dqn_forward.1} parent=75 // pred_check
          %p501 = pneg %p263
        $region94: #{dueling_dqn_forward.1} parent=75 // pred_check_branch
          %503 = sbr.rel (%p501) target = $region96
        $region95: #{dueling_dqn_forward.1} parent=75 // pred_region
          %504 = dma.done [#allocation9], 8192
        $region96: #{dueling_dqn_forward.1} parent=75 // pred_fallthru
          _
        // Predicated region
        $region97: #{dueling_dqn_forward.1} parent=75 // pred_check
          %p505 = pneg %p305
        $region98: #{dueling_dqn_forward.1} parent=75 // pred_check_branch
          %507 = sbr.rel (%p505) target = $region100
        $region99: #{dueling_dqn_forward.1} parent=75 // pred_region
          %508 = dma.done [#allocation12], 4096
        $region100: #{dueling_dqn_forward.1} parent=75 // pred_fallthru
          _
        %p509 = scmp.lt.s32.totalorder %s32, 1
        %s510 = scalar_select %p509, %s32, 1
        %s511 = smul.addr %s510, 8
        %s512 = smul.addr %s511, 8
        %s513 = scalar_lea.vmem %s0, %s512
        %p514 = pneg %p53
        %p515 = pneg %p50
        %p516 = pneg %p74
        %p517 = pneg %p71
        %p518 = pneg %p95
        %p519 = pneg %p92
        %p520 = pneg %p116
        %p521 = pneg %p113
        %p522 = pneg %p137
        %p523 = pneg %p134
        %p524 = pneg %p158
        %p525 = pneg %p155
        %p526 = pneg %p179
        %p527 = pneg %p176
        %p528 = pneg %p200
        %p529 = pneg %p197
        %p530 = pneg %p221
        %p531 = pneg %p218
        %p532 = pneg %p242
        %p533 = pneg %p239
        %p534 = pneg %p263
        %p535 = pneg %p260
        %p536 = pneg %p284
        %p537 = pneg %p281
        %p538 = pneg %p305
        %p539 = pneg %p302
        %p540 = pneg %p326
        %p541 = pneg %p323
        %p542 = pneg %p352
        %p543 = pneg %p349
        %s544 = sand.u32 %s339, 1
        %s545 = scalar_lea.sflag [#allocation4], %s544
        %s546 = sand.u32 %s339, 1
        %s547 = scalar_lea.vmem [#allocation13], %s546
        %p548 = scmp.lt.s32.totalorder %s32, 1
        %s549 = scalar_select %p548, %s32, 1
        %s550 = smul.addr %s549, 8
        %s551 = smul.addr %s550, 8
        %s552 = scalar_lea.vmem %s0, %s551
        %v553 = vld [vmem:[%s552] sm:$0xff]
        %v554 = vld [vmem:[%s552 + $0x8] sm:$0xff]
        %v555 = vld [vmem:[%s552 + $0x10] sm:$0xff]
        %v556 = vld [vmem:[%s552 + $0x18] sm:$0xff]
        %v557 = vld [vmem:[%s552 + $0x20] sm:$0xff]
        %v558 = vld [vmem:[%s552 + $0x28] sm:$0xff]
        %v559 = vld [vmem:[%s552 + $0x30] sm:$0xff]
        %v560 = vld [vmem:[%s552 + $0x38] sm:$0xff]
        %v561 = vld [vmem:[%s1] sm:$0xff]
        %v562 = vld [vmem:[%s1 + $0x8] sm:$0xff]
        %vm563 = vcmask 523264
        %v565 = vsel %vm563, %v561, 0
        %v568 = vsel %vm563, %v562, 0
        %570 = vmatprep.subr.mxu0 0.0
        %571 = vmatpush1.msra.mxu0 %v553
        %572 = vmatprep.subr.mxu0 0.0
        %573 = vmatpush1.msra.mxu0 %v554
        %574 = vmatprep.subr.mxu0 0.0
        %575 = vmatpush1.msra.mxu0 %v555
        %576 = vmatprep.subr.mxu0 0.0
        %577 = vmatpush1.msra.mxu0 %v556
        %578 = vmatprep.subr.mxu0 0.0
        %579 = vmatpush1.msra.mxu0 %v557
        %580 = vmatprep.subr.mxu0 0.0
        %581 = vmatpush1.msra.mxu0 %v558
        %582 = vmatprep.subr.mxu0 0.0
        %583 = vmatpush1.msra.mxu0 %v559
        %584 = vmatprep.subr.mxu0 0.0
        %585 = vmatpush1.msra.mxu0 %v560
        %586 = vmatprep.subr.mxu0 0.0
        %587 = vmatpush1.msra.mxu0 0.0
        %588 = vmatprep.subr.mxu0 0.0
        %589 = vmatpush1.msra.mxu0 0.0
        %590 = vmatprep.subr.mxu0 0.0
        %591 = vmatpush1.msra.mxu0 0.0
        %592 = vmatprep.subr.mxu0 0.0
        %593 = vmatpush1.msra.mxu0 0.0
        %594 = vmatprep.subr.mxu0 0.0
        %595 = vmatpush1.msra.mxu0 0.0
        %596 = vmatprep.subr.mxu0 0.0
        %597 = vmatpush1.msra.mxu0 0.0
        %598 = vmatprep.subr.mxu0 0.0
        %599 = vmatpush1.msra.mxu0 0.0
        %600 = vmatprep.subr.mxu0 0.0
        %601 = vmatpush1.msra.mxu0 0.0
        %602 = vmatprep.subr.mxu0 0.0
        %603 = vmatpush1.msra.mxu0 0.0
        %604 = vmatprep.subr.mxu0 0.0
        %605 = vmatpush1.msra.mxu0 0.0
        %606 = vmatprep.subr.mxu0 0.0
        %607 = vmatpush1.msra.mxu0 0.0
        %608 = vmatprep.subr.mxu0 0.0
        %609 = vmatpush1.msra.mxu0 0.0
        %610 = vmatprep.subr.mxu0 0.0
        %611 = vmatpush1.msra.mxu0 0.0
        %612 = vmatprep.subr.mxu0 0.0
        %613 = vmatpush1.msra.mxu0 0.0
        %614 = vmatprep.subr.mxu0 0.0
        %615 = vmatpush1.msra.mxu0 0.0
        %616 = vmatprep.subr.mxu0 0.0
        %617 = vmatpush1.msra.mxu0 0.0
        %618 = vmatprep.subr.mxu0 0.0
        %619 = vmatpush1.msra.mxu0 0.0
        %620 = vmatprep.subr.mxu0 0.0
        %621 = vmatpush1.msra.mxu0 0.0
        %622 = vmatprep.subr.mxu0 0.0
        %623 = vmatpush1.msra.mxu0 0.0
        %624 = vmatprep.subr.mxu0 0.0
        %625 = vmatpush1.msra.mxu0 0.0
        %626 = vmatprep.subr.mxu0 0.0
        %627 = vmatpush1.msra.mxu0 0.0
        %628 = vmatprep.subr.mxu0 0.0
        %629 = vmatpush1.msra.mxu0 0.0
        %630 = vmatprep.subr.mxu0 0.0
        %631 = vmatpush1.msra.mxu0 0.0
        %632 = vmatprep.subr.mxu0 0.0
        %633 = vmatpush1.msra.mxu0 0.0
        %634 = vmatprep.mubr.f32.mxu0 0.0
        %635 = vmatmul.mubr.f32.gmra.mrb[0].mxu0 %v565
        %v636 = vpop.f32.mrb[0].mxu0
        %v637 = vadd.f32 0.0, %v636
        %v638 = vpop.f32.mrb[0].mxu0
        %639 = vmatprep.mubr.f32.mxu0 0.0
        %640 = vmatmul.mubr.f32.gmra.mrb[0].mxu0 %v568
        %v641 = vpop.f32.mrb[0].mxu0
        %v642 = vadd.f32 0.0, %v641
        %v643 = vpop.f32.mrb[0].mxu0
        %644 = vdwg.mxu0
        %v645 = vld [vmem:[#allocation2] sm:$0xf]
        %s646 = scalar_lea.vmem %s1, 16
        %v647 = vld [vmem:[%s646] sm:$0xff]
        %v648 = vld [vmem:[%s646 + $0x8] sm:$0xff]
        %v650 = vsel %vm563, %v647, 0
        %v653 = vsel %vm563, %v648, 0
        %655 = vmatprep.subr.mxu0 0.0
        %656 = vmatpush1.msra.mxu0 %v553
        %657 = vmatprep.subr.mxu0 0.0
        %658 = vmatpush1.msra.mxu0 %v554
        %659 = vmatprep.subr.mxu0 0.0
        %660 = vmatpush1.msra.mxu0 %v555
        %661 = vmatprep.subr.mxu0 0.0
        %662 = vmatpush1.msra.mxu0 %v556
        %663 = vmatprep.subr.mxu0 0.0
        %664 = vmatpush1.msra.mxu0 %v557
        %665 = vmatprep.subr.mxu0 0.0
        %666 = vmatpush1.msra.mxu0 %v558
        %667 = vmatprep.subr.mxu0 0.0
        %668 = vmatpush1.msra.mxu0 %v559
        %669 = vmatprep.subr.mxu0 0.0
        %670 = vmatpush1.msra.mxu0 %v560
        %671 = vmatprep.subr.mxu0 0.0
        %672 = vmatpush1.msra.mxu0 0.0
        %673 = vmatprep.subr.mxu0 0.0
        %674 = vmatpush1.msra.mxu0 0.0
        %675 = vmatprep.subr.mxu0 0.0
        %676 = vmatpush1.msra.mxu0 0.0
        %677 = vmatprep.subr.mxu0 0.0
        %678 = vmatpush1.msra.mxu0 0.0
        %679 = vmatprep.subr.mxu0 0.0
        %680 = vmatpush1.msra.mxu0 0.0
        %681 = vmatprep.subr.mxu0 0.0
        %682 = vmatpush1.msra.mxu0 0.0
        %683 = vmatprep.subr.mxu0 0.0
        %684 = vmatpush1.msra.mxu0 0.0
        %685 = vmatprep.subr.mxu0 0.0
        %686 = vmatpush1.msra.mxu0 0.0
        %687 = vmatprep.subr.mxu0 0.0
        %688 = vmatpush1.msra.mxu0 0.0
        %689 = vmatprep.subr.mxu0 0.0
        %690 = vmatpush1.msra.mxu0 0.0
        %691 = vmatprep.subr.mxu0 0.0
        %692 = vmatpush1.msra.mxu0 0.0
        %693 = vmatprep.subr.mxu0 0.0
        %694 = vmatpush1.msra.mxu0 0.0
        %695 = vmatprep.subr.mxu0 0.0
        %696 = vmatpush1.msra.mxu0 0.0
        %697 = vmatprep.subr.mxu0 0.0
        %698 = vmatpush1.msra.mxu0 0.0
        %699 = vmatprep.subr.mxu0 0.0
        %700 = vmatpush1.msra.mxu0 0.0
        %701 = vmatprep.subr.mxu0 0.0
        %702 = vmatpush1.msra.mxu0 0.0
        %703 = vmatprep.subr.mxu0 0.0
        %704 = vmatpush1.msra.mxu0 0.0
        %705 = vmatprep.subr.mxu0 0.0
        %706 = vmatpush1.msra.mxu0 0.0
        %707 = vmatprep.subr.mxu0 0.0
        %708 = vmatpush1.msra.mxu0 0.0
        %709 = vmatprep.subr.mxu0 0.0
        %710 = vmatpush1.msra.mxu0 0.0
        %711 = vmatprep.subr.mxu0 0.0
        %712 = vmatpush1.msra.mxu0 0.0
        %713 = vmatprep.subr.mxu0 0.0
        %714 = vmatpush1.msra.mxu0 0.0
        %715 = vmatprep.subr.mxu0 0.0
        %716 = vmatpush1.msra.mxu0 0.0
        %717 = vmatprep.subr.mxu0 0.0
        %718 = vmatpush1.msra.mxu0 0.0
        %719 = vmatprep.mubr.f32.mxu0 0.0
        %720 = vmatmul.mubr.f32.gmra.mrb[0].mxu0 %v650
        %v721 = vpop.f32.mrb[0].mxu0
        %v722 = vadd.f32 0.0, %v721
        %v723 = vpop.f32.mrb[0].mxu0
        %724 = vmatprep.mubr.f32.mxu0 0.0
        %725 = vmatmul.mubr.f32.gmra.mrb[0].mxu0 %v653
        %v726 = vpop.f32.mrb[0].mxu0
        %v727 = vadd.f32 0.0, %v726
        %v728 = vpop.f32.mrb[0].mxu0
        %729 = vdwg.mxu0
        %s730 = scalar_lea.vmem [#allocation2], 4
        %v731 = vld [vmem:[%s730] sm:$0xf]
        %vm732 = vcmask 31744
        %v734 = vsel %vm732, %v722, 0
        %v737 = vsel %vm732, %v727, 0
        %vm739 = vcmask 1043456
        %v741 = vsel %vm739, %v731, 0
        %743 = vmatprep.subr.mxu0 0.0
        %744 = vmatpush1.msra.mxu0 %v741
        %745 = vmatprep.subr.mxu0 0.0
        %746 = vmatpush1.msra.mxu0 0.0
        %747 = vmatprep.subr.mxu0 0.0
        %748 = vmatpush1.msra.mxu0 0.0
        %749 = vmatprep.subr.mxu0 0.0
        %750 = vmatpush1.msra.mxu0 0.0
        %751 = vmatprep.subr.mxu0 0.0
        %752 = vmatpush1.msra.mxu0 0.0
        %753 = vmatprep.subr.mxu0 0.0
        %754 = vmatpush1.msra.mxu0 0.0
        %755 = vmatprep.subr.mxu0 0.0
        %756 = vmatpush1.msra.mxu0 0.0
        %757 = vmatprep.subr.mxu0 0.0
        %758 = vmatpush1.msra.mxu0 0.0
        %759 = vmatprep.subr.mxu0 0.0
        %760 = vmatpush1.msra.mxu0 0.0
        %761 = vmatprep.subr.mxu0 0.0
        %762 = vmatpush1.msra.mxu0 0.0
        %763 = vmatprep.subr.mxu0 0.0
        %764 = vmatpush1.msra.mxu0 0.0
        %765 = vmatprep.subr.mxu0 0.0
        %766 = vmatpush1.msra.mxu0 0.0
        %767 = vmatprep.subr.mxu0 0.0
        %768 = vmatpush1.msra.mxu0 0.0
        %769 = vmatprep.subr.mxu0 0.0
        %770 = vmatpush1.msra.mxu0 0.0
        %771 = vmatprep.subr.mxu0 0.0
        %772 = vmatpush1.msra.mxu0 0.0
        %773 = vmatprep.subr.mxu0 0.0
        %774 = vmatpush1.msra.mxu0 0.0
        %775 = vmatprep.subr.mxu0 0.0
        %776 = vmatpush1.msra.mxu0 0.0
        %777 = vmatprep.subr.mxu0 0.0
        %778 = vmatpush1.msra.mxu0 0.0
        %779 = vmatprep.subr.mxu0 0.0
        %780 = vmatpush1.msra.mxu0 0.0
        %781 = vmatprep.subr.mxu0 0.0
        %782 = vmatpush1.msra.mxu0 0.0
        %783 = vmatprep.subr.mxu0 0.0
        %784 = vmatpush1.msra.mxu0 0.0
        %785 = vmatprep.subr.mxu0 0.0
        %786 = vmatpush1.msra.mxu0 0.0
        %787 = vmatprep.subr.mxu0 0.0
        %788 = vmatpush1.msra.mxu0 0.0
        %789 = vmatprep.subr.mxu0 0.0
        %790 = vmatpush1.msra.mxu0 0.0
        %791 = vmatprep.subr.mxu0 0.0
        %792 = vmatpush1.msra.mxu0 0.0
        %793 = vmatprep.subr.mxu0 0.0
        %794 = vmatpush1.msra.mxu0 0.0
        %795 = vmatprep.subr.mxu0 0.0
        %796 = vmatpush1.msra.mxu0 0.0
        %797 = vmatprep.subr.mxu0 0.0
        %798 = vmatpush1.msra.mxu0 0.0
        %799 = vmatprep.subr.mxu0 0.0
        %800 = vmatpush1.msra.mxu0 0.0
        %801 = vmatprep.subr.mxu0 0.0
        %802 = vmatpush1.msra.mxu0 0.0
        %803 = vmatprep.subr.mxu0 0.0
        %804 = vmatpush1.msra.mxu0 0.0
        %805 = vmatprep.subr.mxu0 0.0
        %806 = vmatpush1.msra.mxu0 0.0
        %807 = vmatprep.mubr.f32.mxu0 0.0
        %808 = vmatmul.mubr.f32.gmra.mrb[0].mxu0 %v734
        %v809 = vpop.f32.mrb[0].mxu0
        %v810 = vadd.f32 0.0, %v809
        %v811 = vpop.f32.mrb[0].mxu0
        %812 = vmatprep.mubr.f32.mxu0 0.0
        %813 = vmatmul.mubr.f32.gmra.mrb[0].mxu0 %v737
        %v814 = vpop.f32.mrb[0].mxu0
        %v815 = vadd.f32 0.0, %v814
        %v816 = vpop.f32.mrb[0].mxu0
        %817 = vdwg.mxu0
        %v819 = vsel %vm732, %v637, 0
        %v822 = vsel %vm732, %v642, 0
        %v825 = vsel %vm739, %v645, 0
        %827 = vmatprep.subr.mxu0 0.0
        %828 = vmatpush1.msra.mxu0 %v825
        %829 = vmatprep.subr.mxu0 0.0
        %830 = vmatpush1.msra.mxu0 0.0
        %831 = vmatprep.subr.mxu0 0.0
        %832 = vmatpush1.msra.mxu0 0.0
        %833 = vmatprep.subr.mxu0 0.0
        %834 = vmatpush1.msra.mxu0 0.0
        %835 = vmatprep.subr.mxu0 0.0
        %836 = vmatpush1.msra.mxu0 0.0
        %837 = vmatprep.subr.mxu0 0.0
        %838 = vmatpush1.msra.mxu0 0.0
        %839 = vmatprep.subr.mxu0 0.0
        %840 = vmatpush1.msra.mxu0 0.0
        %841 = vmatprep.subr.mxu0 0.0
        %842 = vmatpush1.msra.mxu0 0.0
        %843 = vmatprep.subr.mxu0 0.0
        %844 = vmatpush1.msra.mxu0 0.0
        %845 = vmatprep.subr.mxu0 0.0
        %846 = vmatpush1.msra.mxu0 0.0
        %847 = vmatprep.subr.mxu0 0.0
        %848 = vmatpush1.msra.mxu0 0.0
        %849 = vmatprep.subr.mxu0 0.0
        %850 = vmatpush1.msra.mxu0 0.0
        %851 = vmatprep.subr.mxu0 0.0
        %852 = vmatpush1.msra.mxu0 0.0
        %853 = vmatprep.subr.mxu0 0.0
        %854 = vmatpush1.msra.mxu0 0.0
        %855 = vmatprep.subr.mxu0 0.0
        %856 = vmatpush1.msra.mxu0 0.0
        %857 = vmatprep.subr.mxu0 0.0
        %858 = vmatpush1.msra.mxu0 0.0
        %859 = vmatprep.subr.mxu0 0.0
        %860 = vmatpush1.msra.mxu0 0.0
        %861 = vmatprep.subr.mxu0 0.0
        %862 = vmatpush1.msra.mxu0 0.0
        %863 = vmatprep.subr.mxu0 0.0
        %864 = vmatpush1.msra.mxu0 0.0
        %865 = vmatprep.subr.mxu0 0.0
        %866 = vmatpush1.msra.mxu0 0.0
        %867 = vmatprep.subr.mxu0 0.0
        %868 = vmatpush1.msra.mxu0 0.0
        %869 = vmatprep.subr.mxu0 0.0
        %870 = vmatpush1.msra.mxu0 0.0
        %871 = vmatprep.subr.mxu0 0.0
        %872 = vmatpush1.msra.mxu0 0.0
        %873 = vmatprep.subr.mxu0 0.0
        %874 = vmatpush1.msra.mxu0 0.0
        %875 = vmatprep.subr.mxu0 0.0
        %876 = vmatpush1.msra.mxu0 0.0
        %877 = vmatprep.subr.mxu0 0.0
        %878 = vmatpush1.msra.mxu0 0.0
        %879 = vmatprep.subr.mxu0 0.0
        %880 = vmatpush1.msra.mxu0 0.0
        %881 = vmatprep.subr.mxu0 0.0
        %882 = vmatpush1.msra.mxu0 0.0
        %883 = vmatprep.subr.mxu0 0.0
        %884 = vmatpush1.msra.mxu0 0.0
        %885 = vmatprep.subr.mxu0 0.0
        %886 = vmatpush1.msra.mxu0 0.0
        %887 = vmatprep.subr.mxu0 0.0
        %888 = vmatpush1.msra.mxu0 0.0
        %889 = vmatprep.subr.mxu0 0.0
        %890 = vmatpush1.msra.mxu0 0.0
        %891 = vmatprep.mubr.f32.mxu0 0.0
        %892 = vmatmul.mubr.f32.gmra.mrb[0].mxu0 %v819
        %v893 = vpop.f32.mrb[0].mxu0
        %v894 = vadd.f32 %v810, %v893
        %v895 = vpop.f32.mrb[0].mxu0
        %896 = vmatprep.mubr.f32.mxu0 0.0
        %897 = vmatmul.mubr.f32.gmra.mrb[0].mxu0 %v822
        %v898 = vpop.f32.mrb[0].mxu0
        %v899 = vadd.f32 %v815, %v898
        %v900 = vpop.f32.mrb[0].mxu0
        %901 = vdwg.mxu0
        %s902 = scalar_lea.vmem %s1, 32
        %v903 = vld [vmem:[%s902] sm:$0xff]
        %v904 = vld [vmem:[%s902 + $0x8] sm:$0xff]
        %v906 = vsel %vm563, %v903, 0
        %v909 = vsel %vm563, %v904, 0
        %911 = vmatprep.subr.mxu0 0.0
        %912 = vmatpush1.msra.mxu0 %v553
        %913 = vmatprep.subr.mxu0 0.0
        %914 = vmatpush1.msra.mxu0 %v554
        %915 = vmatprep.subr.mxu0 0.0
        %916 = vmatpush1.msra.mxu0 %v555
        %917 = vmatprep.subr.mxu0 0.0
        %918 = vmatpush1.msra.mxu0 %v556
        %919 = vmatprep.subr.mxu0 0.0
        %920 = vmatpush1.msra.mxu0 %v557
        %921 = vmatprep.subr.mxu0 0.0
        %922 = vmatpush1.msra.mxu0 %v558
        %923 = vmatprep.subr.mxu0 0.0
        %924 = vmatpush1.msra.mxu0 %v559
        %925 = vmatprep.subr.mxu0 0.0
        %926 = vmatpush1.msra.mxu0 %v560
        %927 = vmatprep.subr.mxu0 0.0
        %928 = vmatpush1.msra.mxu0 0.0
        %929 = vmatprep.subr.mxu0 0.0
        %930 = vmatpush1.msra.mxu0 0.0
        %931 = vmatprep.subr.mxu0 0.0
        %932 = vmatpush1.msra.mxu0 0.0
        %933 = vmatprep.subr.mxu0 0.0
        %934 = vmatpush1.msra.mxu0 0.0
        %935 = vmatprep.subr.mxu0 0.0
        %936 = vmatpush1.msra.mxu0 0.0
        %937 = vmatprep.subr.mxu0 0.0
        %938 = vmatpush1.msra.mxu0 0.0
        %939 = vmatprep.subr.mxu0 0.0
        %940 = vmatpush1.msra.mxu0 0.0
        %941 = vmatprep.subr.mxu0 0.0
        %942 = vmatpush1.msra.mxu0 0.0
        %943 = vmatprep.subr.mxu0 0.0
        %944 = vmatpush1.msra.mxu0 0.0
        %945 = vmatprep.subr.mxu0 0.0
        %946 = vmatpush1.msra.mxu0 0.0
        %947 = vmatprep.subr.mxu0 0.0
        %948 = vmatpush1.msra.mxu0 0.0
        %949 = vmatprep.subr.mxu0 0.0
        %950 = vmatpush1.msra.mxu0 0.0
        %951 = vmatprep.subr.mxu0 0.0
        %952 = vmatpush1.msra.mxu0 0.0
        %953 = vmatprep.subr.mxu0 0.0
        %954 = vmatpush1.msra.mxu0 0.0
        %955 = vmatprep.subr.mxu0 0.0
        %956 = vmatpush1.msra.mxu0 0.0
        %957 = vmatprep.subr.mxu0 0.0
        %958 = vmatpush1.msra.mxu0 0.0
        %959 = vmatprep.subr.mxu0 0.0
        %960 = vmatpush1.msra.mxu0 0.0
        %961 = vmatprep.subr.mxu0 0.0
        %962 = vmatpush1.msra.mxu0 0.0
        %963 = vmatprep.subr.mxu0 0.0
        %964 = vmatpush1.msra.mxu0 0.0
        %965 = vmatprep.subr.mxu0 0.0
        %966 = vmatpush1.msra.mxu0 0.0
        %967 = vmatprep.subr.mxu0 0.0
        %968 = vmatpush1.msra.mxu0 0.0
        %969 = vmatprep.subr.mxu0 0.0
        %970 = vmatpush1.msra.mxu0 0.0
        %971 = vmatprep.subr.mxu0 0.0
        %972 = vmatpush1.msra.mxu0 0.0
        %973 = vmatprep.subr.mxu0 0.0
        %974 = vmatpush1.msra.mxu0 0.0
        %975 = vmatprep.mubr.f32.mxu0 0.0
        %976 = vmatmul.mubr.f32.gmra.mrb[0].mxu0 %v906
        %v977 = vpop.f32.mrb[0].mxu0
        %v978 = vadd.f32 0.0, %v977
        %v979 = vpop.f32.mrb[0].mxu0
        %980 = vmatprep.mubr.f32.mxu0 0.0
        %981 = vmatmul.mubr.f32.gmra.mrb[0].mxu0 %v909
        %v982 = vpop.f32.mrb[0].mxu0
        %v983 = vadd.f32 0.0, %v982
        %v984 = vpop.f32.mrb[0].mxu0
        %985 = vdwg.mxu0
        %s986 = scalar_lea.vmem [#allocation2], 8
        %v987 = vld [vmem:[%s986] sm:$0xf]
        %v989 = vsel %vm732, %v978, 0
        %v992 = vsel %vm732, %v983, 0
        %v995 = vsel %vm739, %v987, 0
        %997 = vmatprep.subr.mxu0 0.0
        %998 = vmatpush1.msra.mxu0 %v995
        %999 = vmatprep.subr.mxu0 0.0
        %1000 = vmatpush1.msra.mxu0 0.0
        %1001 = vmatprep.subr.mxu0 0.0
        %1002 = vmatpush1.msra.mxu0 0.0
        %1003 = vmatprep.subr.mxu0 0.0
        %1004 = vmatpush1.msra.mxu0 0.0
        %1005 = vmatprep.subr.mxu0 0.0
        %1006 = vmatpush1.msra.mxu0 0.0
        %1007 = vmatprep.subr.mxu0 0.0
        %1008 = vmatpush1.msra.mxu0 0.0
        %1009 = vmatprep.subr.mxu0 0.0
        %1010 = vmatpush1.msra.mxu0 0.0
        %1011 = vmatprep.subr.mxu0 0.0
        %1012 = vmatpush1.msra.mxu0 0.0
        %1013 = vmatprep.subr.mxu0 0.0
        %1014 = vmatpush1.msra.mxu0 0.0
        %1015 = vmatprep.subr.mxu0 0.0
        %1016 = vmatpush1.msra.mxu0 0.0
        %1017 = vmatprep.subr.mxu0 0.0
        %1018 = vmatpush1.msra.mxu0 0.0
        %1019 = vmatprep.subr.mxu0 0.0
        %1020 = vmatpush1.msra.mxu0 0.0
        %1021 = vmatprep.subr.mxu0 0.0
        %1022 = vmatpush1.msra.mxu0 0.0
        %1023 = vmatprep.subr.mxu0 0.0
        %1024 = vmatpush1.msra.mxu0 0.0
        %1025 = vmatprep.subr.mxu0 0.0
        %1026 = vmatpush1.msra.mxu0 0.0
        %1027 = vmatprep.subr.mxu0 0.0
        %1028 = vmatpush1.msra.mxu0 0.0
        %1029 = vmatprep.subr.mxu0 0.0
        %1030 = vmatpush1.msra.mxu0 0.0
        %1031 = vmatprep.subr.mxu0 0.0
        %1032 = vmatpush1.msra.mxu0 0.0
        %1033 = vmatprep.subr.mxu0 0.0
        %1034 = vmatpush1.msra.mxu0 0.0
        %1035 = vmatprep.subr.mxu0 0.0
        %1036 = vmatpush1.msra.mxu0 0.0
        %1037 = vmatprep.subr.mxu0 0.0
        %1038 = vmatpush1.msra.mxu0 0.0
        %1039 = vmatprep.subr.mxu0 0.0
        %1040 = vmatpush1.msra.mxu0 0.0
        %1041 = vmatprep.subr.mxu0 0.0
        %1042 = vmatpush1.msra.mxu0 0.0
        %1043 = vmatprep.subr.mxu0 0.0
        %1044 = vmatpush1.msra.mxu0 0.0
        %1045 = vmatprep.subr.mxu0 0.0
        %1046 = vmatpush1.msra.mxu0 0.0
        %1047 = vmatprep.subr.mxu0 0.0
        %1048 = vmatpush1.msra.mxu0 0.0
        %1049 = vmatprep.subr.mxu0 0.0
        %1050 = vmatpush1.msra.mxu0 0.0
        %1051 = vmatprep.subr.mxu0 0.0
        %1052 = vmatpush1.msra.mxu0 0.0
        %1053 = vmatprep.subr.mxu0 0.0
        %1054 = vmatpush1.msra.mxu0 0.0
        %1055 = vmatprep.subr.mxu0 0.0
        %1056 = vmatpush1.msra.mxu0 0.0
        %1057 = vmatprep.subr.mxu0 0.0
        %1058 = vmatpush1.msra.mxu0 0.0
        %1059 = vmatprep.subr.mxu0 0.0
        %1060 = vmatpush1.msra.mxu0 0.0
        %1061 = vmatprep.mubr.f32.mxu0 0.0
        %1062 = vmatmul.mubr.f32.gmra.mrb[0].mxu0 %v989
        %v1063 = vpop.f32.mrb[0].mxu0
        %v1064 = vadd.f32 0.0, %v1063
        %v1065 = vpop.f32.mrb[0].mxu0
        %1066 = vmatprep.mubr.f32.mxu0 0.0
        %1067 = vmatmul.mubr.f32.gmra.mrb[0].mxu0 %v992
        %v1068 = vpop.f32.mrb[0].mxu0
        %v1069 = vadd.f32 0.0, %v1068
        %v1070 = vpop.f32.mrb[0].mxu0
        %1071 = vdwg.mxu0
        %v1072 = vadd.f32 %v894, %v1064
        %v1073 = vadd.f32 %v899, %v1069
        %s1074 = scalar_lea.vmem %s1, 48
        %v1075 = vld [vmem:[%s1074] sm:$0xff]
        %v1076 = vld [vmem:[%s1074 + $0x8] sm:$0xff]
        %v1078 = vsel %vm563, %v1075, 0
        %v1081 = vsel %vm563, %v1076, 0
        %1083 = vmatprep.subr.mxu0 0.0
        %1084 = vmatpush1.msra.mxu0 %v553
        %1085 = vmatprep.subr.mxu0 0.0
        %1086 = vmatpush1.msra.mxu0 %v554
        %1087 = vmatprep.subr.mxu0 0.0
        %1088 = vmatpush1.msra.mxu0 %v555
        %1089 = vmatprep.subr.mxu0 0.0
        %1090 = vmatpush1.msra.mxu0 %v556
        %1091 = vmatprep.subr.mxu0 0.0
        %1092 = vmatpush1.msra.mxu0 %v557
        %1093 = vmatprep.subr.mxu0 0.0
        %1094 = vmatpush1.msra.mxu0 %v558
        %1095 = vmatprep.subr.mxu0 0.0
        %1096 = vmatpush1.msra.mxu0 %v559
        %1097 = vmatprep.subr.mxu0 0.0
        %1098 = vmatpush1.msra.mxu0 %v560
        %1099 = vmatprep.subr.mxu0 0.0
        %1100 = vmatpush1.msra.mxu0 0.0
        %1101 = vmatprep.subr.mxu0 0.0
        %1102 = vmatpush1.msra.mxu0 0.0
        %1103 = vmatprep.subr.mxu0 0.0
        %1104 = vmatpush1.msra.mxu0 0.0
        %1105 = vmatprep.subr.mxu0 0.0
        %1106 = vmatpush1.msra.mxu0 0.0
        %1107 = vmatprep.subr.mxu0 0.0
        %1108 = vmatpush1.msra.mxu0 0.0
        %1109 = vmatprep.subr.mxu0 0.0
        %1110 = vmatpush1.msra.mxu0 0.0
        %1111 = vmatprep.subr.mxu0 0.0
        %1112 = vmatpush1.msra.mxu0 0.0
        %1113 = vmatprep.subr.mxu0 0.0
        %1114 = vmatpush1.msra.mxu0 0.0
        %1115 = vmatprep.subr.mxu0 0.0
        %1116 = vmatpush1.msra.mxu0 0.0
        %1117 = vmatprep.subr.mxu0 0.0
        %1118 = vmatpush1.msra.mxu0 0.0
        %1119 = vmatprep.subr.mxu0 0.0
        %1120 = vmatpush1.msra.mxu0 0.0
        %1121 = vmatprep.subr.mxu0 0.0
        %1122 = vmatpush1.msra.mxu0 0.0
        %1123 = vmatprep.subr.mxu0 0.0
        %1124 = vmatpush1.msra.mxu0 0.0
        %1125 = vmatprep.subr.mxu0 0.0
        %1126 = vmatpush1.msra.mxu0 0.0
        %1127 = vmatprep.subr.mxu0 0.0
        %1128 = vmatpush1.msra.mxu0 0.0
        %1129 = vmatprep.subr.mxu0 0.0
        %1130 = vmatpush1.msra.mxu0 0.0
        %1131 = vmatprep.subr.mxu0 0.0
        %1132 = vmatpush1.msra.mxu0 0.0
        %1133 = vmatprep.subr.mxu0 0.0
        %1134 = vmatpush1.msra.mxu0 0.0
        %1135 = vmatprep.subr.mxu0 0.0
        %1136 = vmatpush1.msra.mxu0 0.0
        %1137 = vmatprep.subr.mxu0 0.0
        %1138 = vmatpush1.msra.mxu0 0.0
        %1139 = vmatprep.subr.mxu0 0.0
        %1140 = vmatpush1.msra.mxu0 0.0
        %1141 = vmatprep.subr.mxu0 0.0
        %1142 = vmatpush1.msra.mxu0 0.0
        %1143 = vmatprep.subr.mxu0 0.0
        %1144 = vmatpush1.msra.mxu0 0.0
        %1145 = vmatprep.subr.mxu0 0.0
        %1146 = vmatpush1.msra.mxu0 0.0
        %1147 = vmatprep.mubr.f32.mxu0 0.0
        %1148 = vmatmul.mubr.f32.gmra.mrb[0].mxu0 %v1078
        %v1149 = vpop.f32.mrb[0].mxu0
        %v1150 = vadd.f32 0.0, %v1149
        %v1151 = vpop.f32.mrb[0].mxu0
        %1152 = vmatprep.mubr.f32.mxu0 0.0
        %1153 = vmatmul.mubr.f32.gmra.mrb[0].mxu0 %v1081
        %v1154 = vpop.f32.mrb[0].mxu0
        %v1155 = vadd.f32 0.0, %v1154
        %v1156 = vpop.f32.mrb[0].mxu0
        %1157 = vdwg.mxu0
        %s1158 = scalar_lea.vmem [#allocation2], 12
        %v1159 = vld [vmem:[%s1158] sm:$0xf]
        %v1161 = vsel %vm732, %v1150, 0
        %v1164 = vsel %vm732, %v1155, 0
        %v1167 = vsel %vm739, %v1159, 0
        %1169 = vmatprep.subr.mxu0 0.0
        %1170 = vmatpush1.msra.mxu0 %v1167
        %1171 = vmatprep.subr.mxu0 0.0
        %1172 = vmatpush1.msra.mxu0 0.0
        %1173 = vmatprep.subr.mxu0 0.0
        %1174 = vmatpush1.msra.mxu0 0.0
        %1175 = vmatprep.subr.mxu0 0.0
        %1176 = vmatpush1.msra.mxu0 0.0
        %1177 = vmatprep.subr.mxu0 0.0
        %1178 = vmatpush1.msra.mxu0 0.0
        %1179 = vmatprep.subr.mxu0 0.0
        %1180 = vmatpush1.msra.mxu0 0.0
        %1181 = vmatprep.subr.mxu0 0.0
        %1182 = vmatpush1.msra.mxu0 0.0
        %1183 = vmatprep.subr.mxu0 0.0
        %1184 = vmatpush1.msra.mxu0 0.0
        %1185 = vmatprep.subr.mxu0 0.0
        %1186 = vmatpush1.msra.mxu0 0.0
        %1187 = vmatprep.subr.mxu0 0.0
        %1188 = vmatpush1.msra.mxu0 0.0
        %1189 = vmatprep.subr.mxu0 0.0
        %1190 = vmatpush1.msra.mxu0 0.0
        %1191 = vmatprep.subr.mxu0 0.0
        %1192 = vmatpush1.msra.mxu0 0.0
        %1193 = vmatprep.subr.mxu0 0.0
        %1194 = vmatpush1.msra.mxu0 0.0
        %1195 = vmatprep.subr.mxu0 0.0
        %1196 = vmatpush1.msra.mxu0 0.0
        %1197 = vmatprep.subr.mxu0 0.0
        %1198 = vmatpush1.msra.mxu0 0.0
        %1199 = vmatprep.subr.mxu0 0.0
        %1200 = vmatpush1.msra.mxu0 0.0
        %1201 = vmatprep.subr.mxu0 0.0
        %1202 = vmatpush1.msra.mxu0 0.0
        %1203 = vmatprep.subr.mxu0 0.0
        %1204 = vmatpush1.msra.mxu0 0.0
        %1205 = vmatprep.subr.mxu0 0.0
        %1206 = vmatpush1.msra.mxu0 0.0
        %1207 = vmatprep.subr.mxu0 0.0
        %1208 = vmatpush1.msra.mxu0 0.0
        %1209 = vmatprep.subr.mxu0 0.0
        %1210 = vmatpush1.msra.mxu0 0.0
        %1211 = vmatprep.subr.mxu0 0.0
        %1212 = vmatpush1.msra.mxu0 0.0
        %1213 = vmatprep.subr.mxu0 0.0
        %1214 = vmatpush1.msra.mxu0 0.0
        %1215 = vmatprep.subr.mxu0 0.0
        %1216 = vmatpush1.msra.mxu0 0.0
        %1217 = vmatprep.subr.mxu0 0.0
        %1218 = vmatpush1.msra.mxu0 0.0
        %1219 = vmatprep.subr.mxu0 0.0
        %1220 = vmatpush1.msra.mxu0 0.0
        %1221 = vmatprep.subr.mxu0 0.0
        %1222 = vmatpush1.msra.mxu0 0.0
        %1223 = vmatprep.subr.mxu0 0.0
        %1224 = vmatpush1.msra.mxu0 0.0
        %1225 = vmatprep.subr.mxu0 0.0
        %1226 = vmatpush1.msra.mxu0 0.0
        %1227 = vmatprep.subr.mxu0 0.0
        %1228 = vmatpush1.msra.mxu0 0.0
        %1229 = vmatprep.subr.mxu0 0.0
        %1230 = vmatpush1.msra.mxu0 0.0
        %1231 = vmatprep.subr.mxu0 0.0
        %1232 = vmatpush1.msra.mxu0 0.0
        %1233 = vmatprep.mubr.f32.mxu0 0.0
        %1234 = vmatmul.mubr.f32.gmra.mrb[0].mxu0 %v1161
        %v1235 = vpop.f32.mrb[0].mxu0
        %v1236 = vadd.f32 0.0, %v1235
        %v1237 = vpop.f32.mrb[0].mxu0
        %1238 = vmatprep.mubr.f32.mxu0 0.0
        %1239 = vmatmul.mubr.f32.gmra.mrb[0].mxu0 %v1164
        %v1240 = vpop.f32.mrb[0].mxu0
        %v1241 = vadd.f32 0.0, %v1240
        %v1242 = vpop.f32.mrb[0].mxu0
        %1243 = vdwg.mxu0
        %v1244 = vadd.f32 %v1072, %v1236
        %v1245 = vadd.f32 %v1073, %v1241
        %s1246 = scalar_lea.vmem %s1, 64
        %v1247 = vld [vmem:[%s1246] sm:$0xff]
        %v1248 = vld [vmem:[%s1246 + $0x8] sm:$0xff]
        %v1250 = vsel %vm563, %v1247, 0
        %v1253 = vsel %vm563, %v1248, 0
        %1255 = vmatprep.subr.mxu0 0.0
        %1256 = vmatpush1.msra.mxu0 %v553
        %1257 = vmatprep.subr.mxu0 0.0
        %1258 = vmatpush1.msra.mxu0 %v554
        %1259 = vmatprep.subr.mxu0 0.0
        %1260 = vmatpush1.msra.mxu0 %v555
        %1261 = vmatprep.subr.mxu0 0.0
        %1262 = vmatpush1.msra.mxu0 %v556
        %1263 = vmatprep.subr.mxu0 0.0
        %1264 = vmatpush1.msra.mxu0 %v557
        %1265 = vmatprep.subr.mxu0 0.0
        %1266 = vmatpush1.msra.mxu0 %v558
        %1267 = vmatprep.subr.mxu0 0.0
        %1268 = vmatpush1.msra.mxu0 %v559
        %1269 = vmatprep.subr.mxu0 0.0
        %1270 = vmatpush1.msra.mxu0 %v560
        %1271 = vmatprep.subr.mxu0 0.0
        %1272 = vmatpush1.msra.mxu0 0.0
        %1273 = vmatprep.subr.mxu0 0.0
        %1274 = vmatpush1.msra.mxu0 0.0
        %1275 = vmatprep.subr.mxu0 0.0
        %1276 = vmatpush1.msra.mxu0 0.0
        %1277 = vmatprep.subr.mxu0 0.0
        %1278 = vmatpush1.msra.mxu0 0.0
        %1279 = vmatprep.subr.mxu0 0.0
        %1280 = vmatpush1.msra.mxu0 0.0
        %1281 = vmatprep.subr.mxu0 0.0
        %1282 = vmatpush1.msra.mxu0 0.0
        %1283 = vmatprep.subr.mxu0 0.0
        %1284 = vmatpush1.msra.mxu0 0.0
        %1285 = vmatprep.subr.mxu0 0.0
        %1286 = vmatpush1.msra.mxu0 0.0
        %1287 = vmatprep.subr.mxu0 0.0
        %1288 = vmatpush1.msra.mxu0 0.0
        %1289 = vmatprep.subr.mxu0 0.0
        %1290 = vmatpush1.msra.mxu0 0.0
        %1291 = vmatprep.subr.mxu0 0.0
        %1292 = vmatpush1.msra.mxu0 0.0
        %1293 = vmatprep.subr.mxu0 0.0
        %1294 = vmatpush1.msra.mxu0 0.0
        %1295 = vmatprep.subr.mxu0 0.0
        %1296 = vmatpush1.msra.mxu0 0.0
        %1297 = vmatprep.subr.mxu0 0.0
        %1298 = vmatpush1.msra.mxu0 0.0
        %1299 = vmatprep.subr.mxu0 0.0
        %1300 = vmatpush1.msra.mxu0 0.0
        %1301 = vmatprep.subr.mxu0 0.0
        %1302 = vmatpush1.msra.mxu0 0.0
        %1303 = vmatprep.subr.mxu0 0.0
        %1304 = vmatpush1.msra.mxu0 0.0
        %1305 = vmatprep.subr.mxu0 0.0
        %1306 = vmatpush1.msra.mxu0 0.0
        %1307 = vmatprep.subr.mxu0 0.0
        %1308 = vmatpush1.msra.mxu0 0.0
        %1309 = vmatprep.subr.mxu0 0.0
        %1310 = vmatpush1.msra.mxu0 0.0
        %1311 = vmatprep.subr.mxu0 0.0
        %1312 = vmatpush1.msra.mxu0 0.0
        %1313 = vmatprep.subr.mxu0 0.0
        %1314 = vmatpush1.msra.mxu0 0.0
        %1315 = vmatprep.subr.mxu0 0.0
        %1316 = vmatpush1.msra.mxu0 0.0
        %1317 = vmatprep.subr.mxu0 0.0
        %1318 = vmatpush1.msra.mxu0 0.0
        %1319 = vmatprep.mubr.f32.mxu0 0.0
        %1320 = vmatmul.mubr.f32.gmra.mrb[0].mxu0 %v1250
        %v1321 = vpop.f32.mrb[0].mxu0
        %v1322 = vadd.f32 0.0, %v1321
        %v1323 = vpop.f32.mrb[0].mxu0
        %1324 = vmatprep.mubr.f32.mxu0 0.0
        %1325 = vmatmul.mubr.f32.gmra.mrb[0].mxu0 %v1253
        %v1326 = vpop.f32.mrb[0].mxu0
        %v1327 = vadd.f32 0.0, %v1326
        %v1328 = vpop.f32.mrb[0].mxu0
        %1329 = vdwg.mxu0
        %s1330 = scalar_lea.vmem [#allocation2], 16
        %v1331 = vld [vmem:[%s1330] sm:$0xf]
        %v1333 = vsel %vm732, %v1322, 0
        %v1336 = vsel %vm732, %v1327, 0
        %v1339 = vsel %vm739, %v1331, 0
        %1341 = vmatprep.subr.mxu0 0.0
        %1342 = vmatpush1.msra.mxu0 %v1339
        %1343 = vmatprep.subr.mxu0 0.0
        %1344 = vmatpush1.msra.mxu0 0.0
        %1345 = vmatprep.subr.mxu0 0.0
        %1346 = vmatpush1.msra.mxu0 0.0
        %1347 = vmatprep.subr.mxu0 0.0
        %1348 = vmatpush1.msra.mxu0 0.0
        %1349 = vmatprep.subr.mxu0 0.0
        %1350 = vmatpush1.msra.mxu0 0.0
        %1351 = vmatprep.subr.mxu0 0.0
        %1352 = vmatpush1.msra.mxu0 0.0
        %1353 = vmatprep.subr.mxu0 0.0
        %1354 = vmatpush1.msra.mxu0 0.0
        %1355 = vmatprep.subr.mxu0 0.0
        %1356 = vmatpush1.msra.mxu0 0.0
        %1357 = vmatprep.subr.mxu0 0.0
        %1358 = vmatpush1.msra.mxu0 0.0
        %1359 = vmatprep.subr.mxu0 0.0
        %1360 = vmatpush1.msra.mxu0 0.0
        %1361 = vmatprep.subr.mxu0 0.0
        %1362 = vmatpush1.msra.mxu0 0.0
        %1363 = vmatprep.subr.mxu0 0.0
        %1364 = vmatpush1.msra.mxu0 0.0
        %1365 = vmatprep.subr.mxu0 0.0
        %1366 = vmatpush1.msra.mxu0 0.0
        %1367 = vmatprep.subr.mxu0 0.0
        %1368 = vmatpush1.msra.mxu0 0.0
        %1369 = vmatprep.subr.mxu0 0.0
        %1370 = vmatpush1.msra.mxu0 0.0
        %1371 = vmatprep.subr.mxu0 0.0
        %1372 = vmatpush1.msra.mxu0 0.0
        %1373 = vmatprep.subr.mxu0 0.0
        %1374 = vmatpush1.msra.mxu0 0.0
        %1375 = vmatprep.subr.mxu0 0.0
        %1376 = vmatpush1.msra.mxu0 0.0
        %1377 = vmatprep.subr.mxu0 0.0
        %1378 = vmatpush1.msra.mxu0 0.0
        %1379 = vmatprep.subr.mxu0 0.0
        %1380 = vmatpush1.msra.mxu0 0.0
        %1381 = vmatprep.subr.mxu0 0.0
        %1382 = vmatpush1.msra.mxu0 0.0
        %1383 = vmatprep.subr.mxu0 0.0
        %1384 = vmatpush1.msra.mxu0 0.0
        %1385 = vmatprep.subr.mxu0 0.0
        %1386 = vmatpush1.msra.mxu0 0.0
        %1387 = vmatprep.subr.mxu0 0.0
        %1388 = vmatpush1.msra.mxu0 0.0
        %1389 = vmatprep.subr.mxu0 0.0
        %1390 = vmatpush1.msra.mxu0 0.0
        %1391 = vmatprep.subr.mxu0 0.0
        %1392 = vmatpush1.msra.mxu0 0.0
        %1393 = vmatprep.subr.mxu0 0.0
        %1394 = vmatpush1.msra.mxu0 0.0
        %1395 = vmatprep.subr.mxu0 0.0
        %1396 = vmatpush1.msra.mxu0 0.0
        %1397 = vmatprep.subr.mxu0 0.0
        %1398 = vmatpush1.msra.mxu0 0.0
        %1399 = vmatprep.subr.mxu0 0.0
        %1400 = vmatpush1.msra.mxu0 0.0
        %1401 = vmatprep.subr.mxu0 0.0
        %1402 = vmatpush1.msra.mxu0 0.0
        %1403 = vmatprep.subr.mxu0 0.0
        %1404 = vmatpush1.msra.mxu0 0.0
        %1405 = vmatprep.mubr.f32.mxu0 0.0
        %1406 = vmatmul.mubr.f32.gmra.mrb[0].mxu0 %v1333
        %v1407 = vpop.f32.mrb[0].mxu0
        %v1408 = vadd.f32 0.0, %v1407
        %v1409 = vpop.f32.mrb[0].mxu0
        %1410 = vmatprep.mubr.f32.mxu0 0.0
        %1411 = vmatmul.mubr.f32.gmra.mrb[0].mxu0 %v1336
        %v1412 = vpop.f32.mrb[0].mxu0
        %v1413 = vadd.f32 0.0, %v1412
        %v1414 = vpop.f32.mrb[0].mxu0
        %1415 = vdwg.mxu0
        %v1416 = vadd.f32 %v1244, %v1408
        %v1417 = vadd.f32 %v1245, %v1413
        %s1418 = scalar_lea.vmem %s1, 80
        %v1419 = vld [vmem:[%s1418] sm:$0xff]
        %v1420 = vld [vmem:[%s1418 + $0x8] sm:$0xff]
        %v1422 = vsel %vm563, %v1419, 0
        %v1425 = vsel %vm563, %v1420, 0
        %1427 = vmatprep.subr.mxu0 0.0
        %1428 = vmatpush1.msra.mxu0 %v553
        %1429 = vmatprep.subr.mxu0 0.0
        %1430 = vmatpush1.msra.mxu0 %v554
        %1431 = vmatprep.subr.mxu0 0.0
        %1432 = vmatpush1.msra.mxu0 %v555
        %1433 = vmatprep.subr.mxu0 0.0
        %1434 = vmatpush1.msra.mxu0 %v556
        %1435 = vmatprep.subr.mxu0 0.0
        %1436 = vmatpush1.msra.mxu0 %v557
        %1437 = vmatprep.subr.mxu0 0.0
        %1438 = vmatpush1.msra.mxu0 %v558
        %1439 = vmatprep.subr.mxu0 0.0
        %1440 = vmatpush1.msra.mxu0 %v559
        %1441 = vmatprep.subr.mxu0 0.0
        %1442 = vmatpush1.msra.mxu0 %v560
        %1443 = vmatprep.subr.mxu0 0.0
        %1444 = vmatpush1.msra.mxu0 0.0
        %1445 = vmatprep.subr.mxu0 0.0
        %1446 = vmatpush1.msra.mxu0 0.0
        %1447 = vmatprep.subr.mxu0 0.0
        %1448 = vmatpush1.msra.mxu0 0.0
        %1449 = vmatprep.subr.mxu0 0.0
        %1450 = vmatpush1.msra.mxu0 0.0
        %1451 = vmatprep.subr.mxu0 0.0
        %1452 = vmatpush1.msra.mxu0 0.0
        %1453 = vmatprep.subr.mxu0 0.0
        %1454 = vmatpush1.msra.mxu0 0.0
        %1455 = vmatprep.subr.mxu0 0.0
        %1456 = vmatpush1.msra.mxu0 0.0
        %1457 = vmatprep.subr.mxu0 0.0
        %1458 = vmatpush1.msra.mxu0 0.0
        %1459 = vmatprep.subr.mxu0 0.0
        %1460 = vmatpush1.msra.mxu0 0.0
        %1461 = vmatprep.subr.mxu0 0.0
        %1462 = vmatpush1.msra.mxu0 0.0
        %1463 = vmatprep.subr.mxu0 0.0
        %1464 = vmatpush1.msra.mxu0 0.0
        %1465 = vmatprep.subr.mxu0 0.0
        %1466 = vmatpush1.msra.mxu0 0.0
        %1467 = vmatprep.subr.mxu0 0.0
        %1468 = vmatpush1.msra.mxu0 0.0
        %1469 = vmatprep.subr.mxu0 0.0
        %1470 = vmatpush1.msra.mxu0 0.0
        %1471 = vmatprep.subr.mxu0 0.0
        %1472 = vmatpush1.msra.mxu0 0.0
        %1473 = vmatprep.subr.mxu0 0.0
        %1474 = vmatpush1.msra.mxu0 0.0
        %1475 = vmatprep.subr.mxu0 0.0
        %1476 = vmatpush1.msra.mxu0 0.0
        %1477 = vmatprep.subr.mxu0 0.0
        %1478 = vmatpush1.msra.mxu0 0.0
        %1479 = vmatprep.subr.mxu0 0.0
        %1480 = vmatpush1.msra.mxu0 0.0
        %1481 = vmatprep.subr.mxu0 0.0
        %1482 = vmatpush1.msra.mxu0 0.0
        %1483 = vmatprep.subr.mxu0 0.0
        %1484 = vmatpush1.msra.mxu0 0.0
        %1485 = vmatprep.subr.mxu0 0.0
        %1486 = vmatpush1.msra.mxu0 0.0
        %1487 = vmatprep.subr.mxu0 0.0
        %1488 = vmatpush1.msra.mxu0 0.0
        %1489 = vmatprep.subr.mxu0 0.0
        %1490 = vmatpush1.msra.mxu0 0.0
        %1491 = vmatprep.mubr.f32.mxu0 0.0
        %1492 = vmatmul.mubr.f32.gmra.mrb[0].mxu0 %v1422
        %v1493 = vpop.f32.mrb[0].mxu0
        %v1494 = vadd.f32 0.0, %v1493
        %v1495 = vpop.f32.mrb[0].mxu0
        %1496 = vmatprep.mubr.f32.mxu0 0.0
        %1497 = vmatmul.mubr.f32.gmra.mrb[0].mxu0 %v1425
        %v1498 = vpop.f32.mrb[0].mxu0
        %v1499 = vadd.f32 0.0, %v1498
        %v1500 = vpop.f32.mrb[0].mxu0
        %1501 = vdwg.mxu0
        %s1502 = scalar_lea.vmem [#allocation2], 20
        %v1503 = vld [vmem:[%s1502] sm:$0xf]
        %v1505 = vsel %vm732, %v1494, 0
        %v1508 = vsel %vm732, %v1499, 0
        %v1511 = vsel %vm739, %v1503, 0
        %1513 = vmatprep.subr.mxu0 0.0
        %1514 = vmatpush1.msra.mxu0 %v1511
        %1515 = vmatprep.subr.mxu0 0.0
        %1516 = vmatpush1.msra.mxu0 0.0
        %1517 = vmatprep.subr.mxu0 0.0
        %1518 = vmatpush1.msra.mxu0 0.0
        %1519 = vmatprep.subr.mxu0 0.0
        %1520 = vmatpush1.msra.mxu0 0.0
        %1521 = vmatprep.subr.mxu0 0.0
        %1522 = vmatpush1.msra.mxu0 0.0
        %1523 = vmatprep.subr.mxu0 0.0
        %1524 = vmatpush1.msra.mxu0 0.0
        %1525 = vmatprep.subr.mxu0 0.0
        %1526 = vmatpush1.msra.mxu0 0.0
        %1527 = vmatprep.subr.mxu0 0.0
        %1528 = vmatpush1.msra.mxu0 0.0
        %1529 = vmatprep.subr.mxu0 0.0
        %1530 = vmatpush1.msra.mxu0 0.0
        %1531 = vmatprep.subr.mxu0 0.0
        %1532 = vmatpush1.msra.mxu0 0.0
        %1533 = vmatprep.subr.mxu0 0.0
        %1534 = vmatpush1.msra.mxu0 0.0
        %1535 = vmatprep.subr.mxu0 0.0
        %1536 = vmatpush1.msra.mxu0 0.0
        %1537 = vmatprep.subr.mxu0 0.0
        %1538 = vmatpush1.msra.mxu0 0.0
        %1539 = vmatprep.subr.mxu0 0.0
        %1540 = vmatpush1.msra.mxu0 0.0
        %1541 = vmatprep.subr.mxu0 0.0
        %1542 = vmatpush1.msra.mxu0 0.0
        %1543 = vmatprep.subr.mxu0 0.0
        %1544 = vmatpush1.msra.mxu0 0.0
        %1545 = vmatprep.subr.mxu0 0.0
        %1546 = vmatpush1.msra.mxu0 0.0
        %1547 = vmatprep.subr.mxu0 0.0
        %1548 = vmatpush1.msra.mxu0 0.0
        %1549 = vmatprep.subr.mxu0 0.0
        %1550 = vmatpush1.msra.mxu0 0.0
        %1551 = vmatprep.subr.mxu0 0.0
        %1552 = vmatpush1.msra.mxu0 0.0
        %1553 = vmatprep.subr.mxu0 0.0
        %1554 = vmatpush1.msra.mxu0 0.0
        %1555 = vmatprep.subr.mxu0 0.0
        %1556 = vmatpush1.msra.mxu0 0.0
        %1557 = vmatprep.subr.mxu0 0.0
        %1558 = vmatpush1.msra.mxu0 0.0
        %1559 = vmatprep.subr.mxu0 0.0
        %1560 = vmatpush1.msra.mxu0 0.0
        %1561 = vmatprep.subr.mxu0 0.0
        %1562 = vmatpush1.msra.mxu0 0.0
        %1563 = vmatprep.subr.mxu0 0.0
        %1564 = vmatpush1.msra.mxu0 0.0
        %1565 = vmatprep.subr.mxu0 0.0
        %1566 = vmatpush1.msra.mxu0 0.0
        %1567 = vmatprep.subr.mxu0 0.0
        %1568 = vmatpush1.msra.mxu0 0.0
        %1569 = vmatprep.subr.mxu0 0.0
        %1570 = vmatpush1.msra.mxu0 0.0
        %1571 = vmatprep.subr.mxu0 0.0
        %1572 = vmatpush1.msra.mxu0 0.0
        %1573 = vmatprep.subr.mxu0 0.0
        %1574 = vmatpush1.msra.mxu0 0.0
        %1575 = vmatprep.subr.mxu0 0.0
        %1576 = vmatpush1.msra.mxu0 0.0
        %1577 = vmatprep.mubr.f32.mxu0 0.0
        %1578 = vmatmul.mubr.f32.gmra.mrb[0].mxu0 %v1505
        %v1579 = vpop.f32.mrb[0].mxu0
        %v1580 = vadd.f32 0.0, %v1579
        %v1581 = vpop.f32.mrb[0].mxu0
        %1582 = vmatprep.mubr.f32.mxu0 0.0
        %1583 = vmatmul.mubr.f32.gmra.mrb[0].mxu0 %v1508
        %v1584 = vpop.f32.mrb[0].mxu0
        %v1585 = vadd.f32 0.0, %v1584
        %v1586 = vpop.f32.mrb[0].mxu0
        %1587 = vdwg.mxu0
        %v1588 = vadd.f32 %v1416, %v1580
        %v1589 = vadd.f32 %v1417, %v1585
        %s1590 = scalar_lea.vmem %s1, 96
        %v1591 = vld [vmem:[%s1590] sm:$0xff]
        %v1592 = vld [vmem:[%s1590 + $0x8] sm:$0xff]
        %v1594 = vsel %vm563, %v1591, 0
        %v1597 = vsel %vm563, %v1592, 0
        %1599 = vmatprep.subr.mxu0 0.0
        %1600 = vmatpush1.msra.mxu0 %v553
        %1601 = vmatprep.subr.mxu0 0.0
        %1602 = vmatpush1.msra.mxu0 %v554
        %1603 = vmatprep.subr.mxu0 0.0
        %1604 = vmatpush1.msra.mxu0 %v555
        %1605 = vmatprep.subr.mxu0 0.0
        %1606 = vmatpush1.msra.mxu0 %v556
        %1607 = vmatprep.subr.mxu0 0.0
        %1608 = vmatpush1.msra.mxu0 %v557
        %1609 = vmatprep.subr.mxu0 0.0
        %1610 = vmatpush1.msra.mxu0 %v558
        %1611 = vmatprep.subr.mxu0 0.0
        %1612 = vmatpush1.msra.mxu0 %v559
        %1613 = vmatprep.subr.mxu0 0.0
        %1614 = vmatpush1.msra.mxu0 %v560
        %1615 = vmatprep.subr.mxu0 0.0
        %1616 = vmatpush1.msra.mxu0 0.0
        %1617 = vmatprep.subr.mxu0 0.0
        %1618 = vmatpush1.msra.mxu0 0.0
        %1619 = vmatprep.subr.mxu0 0.0
        %1620 = vmatpush1.msra.mxu0 0.0
        %1621 = vmatprep.subr.mxu0 0.0
        %1622 = vmatpush1.msra.mxu0 0.0
        %1623 = vmatprep.subr.mxu0 0.0
        %1624 = vmatpush1.msra.mxu0 0.0
        %1625 = vmatprep.subr.mxu0 0.0
        %1626 = vmatpush1.msra.mxu0 0.0
        %1627 = vmatprep.subr.mxu0 0.0
        %1628 = vmatpush1.msra.mxu0 0.0
        %1629 = vmatprep.subr.mxu0 0.0
        %1630 = vmatpush1.msra.mxu0 0.0
        %1631 = vmatprep.subr.mxu0 0.0
        %1632 = vmatpush1.msra.mxu0 0.0
        %1633 = vmatprep.subr.mxu0 0.0
        %1634 = vmatpush1.msra.mxu0 0.0
        %1635 = vmatprep.subr.mxu0 0.0
        %1636 = vmatpush1.msra.mxu0 0.0
        %1637 = vmatprep.subr.mxu0 0.0
        %1638 = vmatpush1.msra.mxu0 0.0
        %1639 = vmatprep.subr.mxu0 0.0
        %1640 = vmatpush1.msra.mxu0 0.0
        %1641 = vmatprep.subr.mxu0 0.0
        %1642 = vmatpush1.msra.mxu0 0.0
        %1643 = vmatprep.subr.mxu0 0.0
        %1644 = vmatpush1.msra.mxu0 0.0
        %1645 = vmatprep.subr.mxu0 0.0
        %1646 = vmatpush1.msra.mxu0 0.0
        %1647 = vmatprep.subr.mxu0 0.0
        %1648 = vmatpush1.msra.mxu0 0.0
        %1649 = vmatprep.subr.mxu0 0.0
        %1650 = vmatpush1.msra.mxu0 0.0
        %1651 = vmatprep.subr.mxu0 0.0
        %1652 = vmatpush1.msra.mxu0 0.0
        %1653 = vmatprep.subr.mxu0 0.0
        %1654 = vmatpush1.msra.mxu0 0.0
        %1655 = vmatprep.subr.mxu0 0.0
        %1656 = vmatpush1.msra.mxu0 0.0
        %1657 = vmatprep.subr.mxu0 0.0
        %1658 = vmatpush1.msra.mxu0 0.0
        %1659 = vmatprep.subr.mxu0 0.0
        %1660 = vmatpush1.msra.mxu0 0.0
        %1661 = vmatprep.subr.mxu0 0.0
        %1662 = vmatpush1.msra.mxu0 0.0
        %1663 = vmatprep.mubr.f32.mxu0 0.0
        %1664 = vmatmul.mubr.f32.gmra.mrb[0].mxu0 %v1594
        %v1665 = vpop.f32.mrb[0].mxu0
        %v1666 = vadd.f32 0.0, %v1665
        %v1667 = vpop.f32.mrb[0].mxu0
        %1668 = vmatprep.mubr.f32.mxu0 0.0
        %1669 = vmatmul.mubr.f32.gmra.mrb[0].mxu0 %v1597
        %v1670 = vpop.f32.mrb[0].mxu0
        %v1671 = vadd.f32 0.0, %v1670
        %v1672 = vpop.f32.mrb[0].mxu0
        %1673 = vdwg.mxu0
        %s1674 = scalar_lea.vmem [#allocation2], 24
        %v1675 = vld [vmem:[%s1674] sm:$0xf]
        %v1677 = vsel %vm732, %v1666, 0
        %v1680 = vsel %vm732, %v1671, 0
        %v1683 = vsel %vm739, %v1675, 0
        %1685 = vmatprep.subr.mxu0 0.0
        %1686 = vmatpush1.msra.mxu0 %v1683
        %1687 = vmatprep.subr.mxu0 0.0
        %1688 = vmatpush1.msra.mxu0 0.0
        %1689 = vmatprep.subr.mxu0 0.0
        %1690 = vmatpush1.msra.mxu0 0.0
        %1691 = vmatprep.subr.mxu0 0.0
        %1692 = vmatpush1.msra.mxu0 0.0
        %1693 = vmatprep.subr.mxu0 0.0
        %1694 = vmatpush1.msra.mxu0 0.0
        %1695 = vmatprep.subr.mxu0 0.0
        %1696 = vmatpush1.msra.mxu0 0.0
        %1697 = vmatprep.subr.mxu0 0.0
        %1698 = vmatpush1.msra.mxu0 0.0
        %1699 = vmatprep.subr.mxu0 0.0
        %1700 = vmatpush1.msra.mxu0 0.0
        %1701 = vmatprep.subr.mxu0 0.0
        %1702 = vmatpush1.msra.mxu0 0.0
        %1703 = vmatprep.subr.mxu0 0.0
        %1704 = vmatpush1.msra.mxu0 0.0
        %1705 = vmatprep.subr.mxu0 0.0
        %1706 = vmatpush1.msra.mxu0 0.0
        %1707 = vmatprep.subr.mxu0 0.0
        %1708 = vmatpush1.msra.mxu0 0.0
        %1709 = vmatprep.subr.mxu0 0.0
        %1710 = vmatpush1.msra.mxu0 0.0
        %1711 = vmatprep.subr.mxu0 0.0
        %1712 = vmatpush1.msra.mxu0 0.0
        %1713 = vmatprep.subr.mxu0 0.0
        %1714 = vmatpush1.msra.mxu0 0.0
        %1715 = vmatprep.subr.mxu0 0.0
        %1716 = vmatpush1.msra.mxu0 0.0
        %1717 = vmatprep.subr.mxu0 0.0
        %1718 = vmatpush1.msra.mxu0 0.0
        %1719 = vmatprep.subr.mxu0 0.0
        %1720 = vmatpush1.msra.mxu0 0.0
        %1721 = vmatprep.subr.mxu0 0.0
        %1722 = vmatpush1.msra.mxu0 0.0
        %1723 = vmatprep.subr.mxu0 0.0
        %1724 = vmatpush1.msra.mxu0 0.0
        %1725 = vmatprep.subr.mxu0 0.0
        %1726 = vmatpush1.msra.mxu0 0.0
        %1727 = vmatprep.subr.mxu0 0.0
        %1728 = vmatpush1.msra.mxu0 0.0
        %1729 = vmatprep.subr.mxu0 0.0
        %1730 = vmatpush1.msra.mxu0 0.0
        %1731 = vmatprep.subr.mxu0 0.0
        %1732 = vmatpush1.msra.mxu0 0.0
        %1733 = vmatprep.subr.mxu0 0.0
        %1734 = vmatpush1.msra.mxu0 0.0
        %1735 = vmatprep.subr.mxu0 0.0
        %1736 = vmatpush1.msra.mxu0 0.0
        %1737 = vmatprep.subr.mxu0 0.0
        %1738 = vmatpush1.msra.mxu0 0.0
        %1739 = vmatprep.subr.mxu0 0.0
        %1740 = vmatpush1.msra.mxu0 0.0
        %1741 = vmatprep.subr.mxu0 0.0
        %1742 = vmatpush1.msra.mxu0 0.0
        %1743 = vmatprep.subr.mxu0 0.0
        %1744 = vmatpush1.msra.mxu0 0.0
        %1745 = vmatprep.subr.mxu0 0.0
        %1746 = vmatpush1.msra.mxu0 0.0
        %1747 = vmatprep.subr.mxu0 0.0
        %1748 = vmatpush1.msra.mxu0 0.0
        %1749 = vmatprep.mubr.f32.mxu0 0.0
        %1750 = vmatmul.mubr.f32.gmra.mrb[0].mxu0 %v1677
        %v1751 = vpop.f32.mrb[0].mxu0
        %v1752 = vadd.f32 0.0, %v1751
        %v1753 = vpop.f32.mrb[0].mxu0
        %1754 = vmatprep.mubr.f32.mxu0 0.0
        %1755 = vmatmul.mubr.f32.gmra.mrb[0].mxu0 %v1680
        %v1756 = vpop.f32.mrb[0].mxu0
        %v1757 = vadd.f32 0.0, %v1756
        %v1758 = vpop.f32.mrb[0].mxu0
        %1759 = vdwg.mxu0
        %v1760 = vadd.f32 %v1588, %v1752
        %v1761 = vadd.f32 %v1589, %v1757
        %s1762 = scalar_lea.vmem %s1, 112
        %v1763 = vld [vmem:[%s1762] sm:$0xff]
        %v1764 = vld [vmem:[%s1762 + $0x8] sm:$0xff]
        %v1766 = vsel %vm563, %v1763, 0
        %v1769 = vsel %vm563, %v1764, 0
        %1771 = vmatprep.subr.mxu0 0.0
        %1772 = vmatpush1.msra.mxu0 %v553
        %1773 = vmatprep.subr.mxu0 0.0
        %1774 = vmatpush1.msra.mxu0 %v554
        %1775 = vmatprep.subr.mxu0 0.0
        %1776 = vmatpush1.msra.mxu0 %v555
        %1777 = vmatprep.subr.mxu0 0.0
        %1778 = vmatpush1.msra.mxu0 %v556
        %1779 = vmatprep.subr.mxu0 0.0
        %1780 = vmatpush1.msra.mxu0 %v557
        %1781 = vmatprep.subr.mxu0 0.0
        %1782 = vmatpush1.msra.mxu0 %v558
        %1783 = vmatprep.subr.mxu0 0.0
        %1784 = vmatpush1.msra.mxu0 %v559
        %1785 = vmatprep.subr.mxu0 0.0
        %1786 = vmatpush1.msra.mxu0 %v560
        %1787 = vmatprep.subr.mxu0 0.0
        %1788 = vmatpush1.msra.mxu0 0.0
        %1789 = vmatprep.subr.mxu0 0.0
        %1790 = vmatpush1.msra.mxu0 0.0
        %1791 = vmatprep.subr.mxu0 0.0
        %1792 = vmatpush1.msra.mxu0 0.0
        %1793 = vmatprep.subr.mxu0 0.0
        %1794 = vmatpush1.msra.mxu0 0.0
        %1795 = vmatprep.subr.mxu0 0.0
        %1796 = vmatpush1.msra.mxu0 0.0
        %1797 = vmatprep.subr.mxu0 0.0
        %1798 = vmatpush1.msra.mxu0 0.0
        %1799 = vmatprep.subr.mxu0 0.0
        %1800 = vmatpush1.msra.mxu0 0.0
        %1801 = vmatprep.subr.mxu0 0.0
        %1802 = vmatpush1.msra.mxu0 0.0
        %1803 = vmatprep.subr.mxu0 0.0
        %1804 = vmatpush1.msra.mxu0 0.0
        %1805 = vmatprep.subr.mxu0 0.0
        %1806 = vmatpush1.msra.mxu0 0.0
        %1807 = vmatprep.subr.mxu0 0.0
        %1808 = vmatpush1.msra.mxu0 0.0
        %1809 = vmatprep.subr.mxu0 0.0
        %1810 = vmatpush1.msra.mxu0 0.0
        %1811 = vmatprep.subr.mxu0 0.0
        %1812 = vmatpush1.msra.mxu0 0.0
        %1813 = vmatprep.subr.mxu0 0.0
        %1814 = vmatpush1.msra.mxu0 0.0
        %1815 = vmatprep.subr.mxu0 0.0
        %1816 = vmatpush1.msra.mxu0 0.0
        %1817 = vmatprep.subr.mxu0 0.0
        %1818 = vmatpush1.msra.mxu0 0.0
        %1819 = vmatprep.subr.mxu0 0.0
        %1820 = vmatpush1.msra.mxu0 0.0
        %1821 = vmatprep.subr.mxu0 0.0
        %1822 = vmatpush1.msra.mxu0 0.0
        %1823 = vmatprep.subr.mxu0 0.0
        %1824 = vmatpush1.msra.mxu0 0.0
        %1825 = vmatprep.subr.mxu0 0.0
        %1826 = vmatpush1.msra.mxu0 0.0
        %1827 = vmatprep.subr.mxu0 0.0
        %1828 = vmatpush1.msra.mxu0 0.0
        %1829 = vmatprep.subr.mxu0 0.0
        %1830 = vmatpush1.msra.mxu0 0.0
        %1831 = vmatprep.subr.mxu0 0.0
        %1832 = vmatpush1.msra.mxu0 0.0
        %1833 = vmatprep.subr.mxu0 0.0
        %1834 = vmatpush1.msra.mxu0 0.0
        %1835 = vmatprep.mubr.f32.mxu0 0.0
        %1836 = vmatmul.mubr.f32.gmra.mrb[0].mxu0 %v1766
        %v1837 = vpop.f32.mrb[0].mxu0
        %v1838 = vadd.f32 0.0, %v1837
        %v1839 = vpop.f32.mrb[0].mxu0
        %1840 = vmatprep.mubr.f32.mxu0 0.0
        %1841 = vmatmul.mubr.f32.gmra.mrb[0].mxu0 %v1769
        %v1842 = vpop.f32.mrb[0].mxu0
        %v1843 = vadd.f32 0.0, %v1842
        %v1844 = vpop.f32.mrb[0].mxu0
        %1845 = vdwg.mxu0
        %s1846 = scalar_lea.vmem [#allocation2], 28
        %v1847 = vld [vmem:[%s1846] sm:$0xf]
        %v1849 = vsel %vm732, %v1838, 0
        %v1852 = vsel %vm732, %v1843, 0
        %v1855 = vsel %vm739, %v1847, 0
        %1857 = vmatprep.subr.mxu0 0.0
        %1858 = vmatpush1.msra.mxu0 %v1855
        %1859 = vmatprep.subr.mxu0 0.0
        %1860 = vmatpush1.msra.mxu0 0.0
        %1861 = vmatprep.subr.mxu0 0.0
        %1862 = vmatpush1.msra.mxu0 0.0
        %1863 = vmatprep.subr.mxu0 0.0
        %1864 = vmatpush1.msra.mxu0 0.0
        %1865 = vmatprep.subr.mxu0 0.0
        %1866 = vmatpush1.msra.mxu0 0.0
        %1867 = vmatprep.subr.mxu0 0.0
        %1868 = vmatpush1.msra.mxu0 0.0
        %1869 = vmatprep.subr.mxu0 0.0
        %1870 = vmatpush1.msra.mxu0 0.0
        %1871 = vmatprep.subr.mxu0 0.0
        %1872 = vmatpush1.msra.mxu0 0.0
        %1873 = vmatprep.subr.mxu0 0.0
        %1874 = vmatpush1.msra.mxu0 0.0
        %1875 = vmatprep.subr.mxu0 0.0
        %1876 = vmatpush1.msra.mxu0 0.0
        %1877 = vmatprep.subr.mxu0 0.0
        %1878 = vmatpush1.msra.mxu0 0.0
        %1879 = vmatprep.subr.mxu0 0.0
        %1880 = vmatpush1.msra.mxu0 0.0
        %1881 = vmatprep.subr.mxu0 0.0
        %1882 = vmatpush1.msra.mxu0 0.0
        %1883 = vmatprep.subr.mxu0 0.0
        %1884 = vmatpush1.msra.mxu0 0.0
        %1885 = vmatprep.subr.mxu0 0.0
        %1886 = vmatpush1.msra.mxu0 0.0
        %1887 = vmatprep.subr.mxu0 0.0
        %1888 = vmatpush1.msra.mxu0 0.0
        %1889 = vmatprep.subr.mxu0 0.0
        %1890 = vmatpush1.msra.mxu0 0.0
        %1891 = vmatprep.subr.mxu0 0.0
        %1892 = vmatpush1.msra.mxu0 0.0
        %1893 = vmatprep.subr.mxu0 0.0
        %1894 = vmatpush1.msra.mxu0 0.0
        %1895 = vmatprep.subr.mxu0 0.0
        %1896 = vmatpush1.msra.mxu0 0.0
        %1897 = vmatprep.subr.mxu0 0.0
        %1898 = vmatpush1.msra.mxu0 0.0
        %1899 = vmatprep.subr.mxu0 0.0
        %1900 = vmatpush1.msra.mxu0 0.0
        %1901 = vmatprep.subr.mxu0 0.0
        %1902 = vmatpush1.msra.mxu0 0.0
        %1903 = vmatprep.subr.mxu0 0.0
        %1904 = vmatpush1.msra.mxu0 0.0
        %1905 = vmatprep.subr.mxu0 0.0
        %1906 = vmatpush1.msra.mxu0 0.0
        %1907 = vmatprep.subr.mxu0 0.0
        %1908 = vmatpush1.msra.mxu0 0.0
        %1909 = vmatprep.subr.mxu0 0.0
        %1910 = vmatpush1.msra.mxu0 0.0
        %1911 = vmatprep.subr.mxu0 0.0
        %1912 = vmatpush1.msra.mxu0 0.0
        %1913 = vmatprep.subr.mxu0 0.0
        %1914 = vmatpush1.msra.mxu0 0.0
        %1915 = vmatprep.subr.mxu0 0.0
        %1916 = vmatpush1.msra.mxu0 0.0
        %1917 = vmatprep.subr.mxu0 0.0
        %1918 = vmatpush1.msra.mxu0 0.0
        %1919 = vmatprep.subr.mxu0 0.0
        %1920 = vmatpush1.msra.mxu0 0.0
        %1921 = vmatprep.mubr.f32.mxu0 0.0
        %1922 = vmatmul.mubr.f32.gmra.mrb[0].mxu0 %v1849
        %v1923 = vpop.f32.mrb[0].mxu0
        %v1924 = vadd.f32 0.0, %v1923
        %v1925 = vpop.f32.mrb[0].mxu0
        %1926 = vmatprep.mubr.f32.mxu0 0.0
        %1927 = vmatmul.mubr.f32.gmra.mrb[0].mxu0 %v1852
        %v1928 = vpop.f32.mrb[0].mxu0
        %v1929 = vadd.f32 0.0, %v1928
        %v1930 = vpop.f32.mrb[0].mxu0
        %1931 = vdwg.mxu0
        %v1932 = vadd.f32 %v1760, %v1924
        %v1933 = vadd.f32 %v1761, %v1929
        %s1934 = scalar_lea.vmem %s1, 128
        %v1935 = vld [vmem:[%s1934] sm:$0xff]
        %v1936 = vld [vmem:[%s1934 + $0x8] sm:$0xff]
        %v1938 = vsel %vm563, %v1935, 0
        %v1941 = vsel %vm563, %v1936, 0
        %1943 = vmatprep.subr.mxu0 0.0
        %1944 = vmatpush1.msra.mxu0 %v553
        %1945 = vmatprep.subr.mxu0 0.0
        %1946 = vmatpush1.msra.mxu0 %v554
        %1947 = vmatprep.subr.mxu0 0.0
        %1948 = vmatpush1.msra.mxu0 %v555
        %1949 = vmatprep.subr.mxu0 0.0
        %1950 = vmatpush1.msra.mxu0 %v556
        %1951 = vmatprep.subr.mxu0 0.0
        %1952 = vmatpush1.msra.mxu0 %v557
        %1953 = vmatprep.subr.mxu0 0.0
        %1954 = vmatpush1.msra.mxu0 %v558
        %1955 = vmatprep.subr.mxu0 0.0
        %1956 = vmatpush1.msra.mxu0 %v559
        %1957 = vmatprep.subr.mxu0 0.0
        %1958 = vmatpush1.msra.mxu0 %v560
        %1959 = vmatprep.subr.mxu0 0.0
        %1960 = vmatpush1.msra.mxu0 0.0
        %1961 = vmatprep.subr.mxu0 0.0
        %1962 = vmatpush1.msra.mxu0 0.0
        %1963 = vmatprep.subr.mxu0 0.0
        %1964 = vmatpush1.msra.mxu0 0.0
        %1965 = vmatprep.subr.mxu0 0.0
        %1966 = vmatpush1.msra.mxu0 0.0
        %1967 = vmatprep.subr.mxu0 0.0
        %1968 = vmatpush1.msra.mxu0 0.0
        %1969 = vmatprep.subr.mxu0 0.0
        %1970 = vmatpush1.msra.mxu0 0.0
        %1971 = vmatprep.subr.mxu0 0.0
        %1972 = vmatpush1.msra.mxu0 0.0
        %1973 = vmatprep.subr.mxu0 0.0
        %1974 = vmatpush1.msra.mxu0 0.0
        %1975 = vmatprep.subr.mxu0 0.0
        %1976 = vmatpush1.msra.mxu0 0.0
        %1977 = vmatprep.subr.mxu0 0.0
        %1978 = vmatpush1.msra.mxu0 0.0
        %1979 = vmatprep.subr.mxu0 0.0
        %1980 = vmatpush1.msra.mxu0 0.0
        %1981 = vmatprep.subr.mxu0 0.0
        %1982 = vmatpush1.msra.mxu0 0.0
        %1983 = vmatprep.subr.mxu0 0.0
        %1984 = vmatpush1.msra.mxu0 0.0
        %1985 = vmatprep.subr.mxu0 0.0
        %1986 = vmatpush1.msra.mxu0 0.0
        %1987 = vmatprep.subr.mxu0 0.0
        %1988 = vmatpush1.msra.mxu0 0.0
        %1989 = vmatprep.subr.mxu0 0.0
        %1990 = vmatpush1.msra.mxu0 0.0
        %1991 = vmatprep.subr.mxu0 0.0
        %1992 = vmatpush1.msra.mxu0 0.0
        %1993 = vmatprep.subr.mxu0 0.0
        %1994 = vmatpush1.msra.mxu0 0.0
        %1995 = vmatprep.subr.mxu0 0.0
        %1996 = vmatpush1.msra.mxu0 0.0
        %1997 = vmatprep.subr.mxu0 0.0
        %1998 = vmatpush1.msra.mxu0 0.0
        %1999 = vmatprep.subr.mxu0 0.0
        %2000 = vmatpush1.msra.mxu0 0.0
        %2001 = vmatprep.subr.mxu0 0.0
        %2002 = vmatpush1.msra.mxu0 0.0
        %2003 = vmatprep.subr.mxu0 0.0
        %2004 = vmatpush1.msra.mxu0 0.0
        %2005 = vmatprep.subr.mxu0 0.0
        %2006 = vmatpush1.msra.mxu0 0.0
        %2007 = vmatprep.mubr.f32.mxu0 0.0
        %2008 = vmatmul.mubr.f32.gmra.mrb[0].mxu0 %v1938
        %v2009 = vpop.f32.mrb[0].mxu0
        %v2010 = vadd.f32 0.0, %v2009
        %v2011 = vpop.f32.mrb[0].mxu0
        %2012 = vmatprep.mubr.f32.mxu0 0.0
        %2013 = vmatmul.mubr.f32.gmra.mrb[0].mxu0 %v1941
        %v2014 = vpop.f32.mrb[0].mxu0
        %v2015 = vadd.f32 0.0, %v2014
        %v2016 = vpop.f32.mrb[0].mxu0
        %2017 = vdwg.mxu0
        %s2018 = scalar_lea.vmem [#allocation2], 32
        %v2019 = vld [vmem:[%s2018] sm:$0xf]
        %v2021 = vsel %vm732, %v2010, 0
        %v2024 = vsel %vm732, %v2015, 0
        %v2027 = vsel %vm739, %v2019, 0
        %2029 = vmatprep.subr.mxu0 0.0
        %2030 = vmatpush1.msra.mxu0 %v2027
        %2031 = vmatprep.subr.mxu0 0.0
        %2032 = vmatpush1.msra.mxu0 0.0
        %2033 = vmatprep.subr.mxu0 0.0
        %2034 = vmatpush1.msra.mxu0 0.0
        %2035 = vmatprep.subr.mxu0 0.0
        %2036 = vmatpush1.msra.mxu0 0.0
        %2037 = vmatprep.subr.mxu0 0.0
        %2038 = vmatpush1.msra.mxu0 0.0
        %2039 = vmatprep.subr.mxu0 0.0
        %2040 = vmatpush1.msra.mxu0 0.0
        %2041 = vmatprep.subr.mxu0 0.0
        %2042 = vmatpush1.msra.mxu0 0.0
        %2043 = vmatprep.subr.mxu0 0.0
        %2044 = vmatpush1.msra.mxu0 0.0
        %2045 = vmatprep.subr.mxu0 0.0
        %2046 = vmatpush1.msra.mxu0 0.0
        %2047 = vmatprep.subr.mxu0 0.0
        %2048 = vmatpush1.msra.mxu0 0.0
        %2049 = vmatprep.subr.mxu0 0.0
        %2050 = vmatpush1.msra.mxu0 0.0
        %2051 = vmatprep.subr.mxu0 0.0
        %2052 = vmatpush1.msra.mxu0 0.0
        %2053 = vmatprep.subr.mxu0 0.0
        %2054 = vmatpush1.msra.mxu0 0.0
        %2055 = vmatprep.subr.mxu0 0.0
        %2056 = vmatpush1.msra.mxu0 0.0
        %2057 = vmatprep.subr.mxu0 0.0
        %2058 = vmatpush1.msra.mxu0 0.0
        %2059 = vmatprep.subr.mxu0 0.0
        %2060 = vmatpush1.msra.mxu0 0.0
        %2061 = vmatprep.subr.mxu0 0.0
        %2062 = vmatpush1.msra.mxu0 0.0
        %2063 = vmatprep.subr.mxu0 0.0
        %2064 = vmatpush1.msra.mxu0 0.0
        %2065 = vmatprep.subr.mxu0 0.0
        %2066 = vmatpush1.msra.mxu0 0.0
        %2067 = vmatprep.subr.mxu0 0.0
        %2068 = vmatpush1.msra.mxu0 0.0
        %2069 = vmatprep.subr.mxu0 0.0
        %2070 = vmatpush1.msra.mxu0 0.0
        %2071 = vmatprep.subr.mxu0 0.0
        %2072 = vmatpush1.msra.mxu0 0.0
        %2073 = vmatprep.subr.mxu0 0.0
        %2074 = vmatpush1.msra.mxu0 0.0
        %2075 = vmatprep.subr.mxu0 0.0
        %2076 = vmatpush1.msra.mxu0 0.0
        %2077 = vmatprep.subr.mxu0 0.0
        %2078 = vmatpush1.msra.mxu0 0.0
        %2079 = vmatprep.subr.mxu0 0.0
        %2080 = vmatpush1.msra.mxu0 0.0
        %2081 = vmatprep.subr.mxu0 0.0
        %2082 = vmatpush1.msra.mxu0 0.0
        %2083 = vmatprep.subr.mxu0 0.0
        %2084 = vmatpush1.msra.mxu0 0.0
        %2085 = vmatprep.subr.mxu0 0.0
        %2086 = vmatpush1.msra.mxu0 0.0
        %2087 = vmatprep.subr.mxu0 0.0
        %2088 = vmatpush1.msra.mxu0 0.0
        %2089 = vmatprep.subr.mxu0 0.0
        %2090 = vmatpush1.msra.mxu0 0.0
        %2091 = vmatprep.subr.mxu0 0.0
        %2092 = vmatpush1.msra.mxu0 0.0
        %2093 = vmatprep.mubr.f32.mxu0 0.0
        %2094 = vmatmul.mubr.f32.gmra.mrb[0].mxu0 %v2021
        %v2095 = vpop.f32.mrb[0].mxu0
        %v2096 = vadd.f32 0.0, %v2095
        %v2097 = vpop.f32.mrb[0].mxu0
        %2098 = vmatprep.mubr.f32.mxu0 0.0
        %2099 = vmatmul.mubr.f32.gmra.mrb[0].mxu0 %v2024
        %v2100 = vpop.f32.mrb[0].mxu0
        %v2101 = vadd.f32 0.0, %v2100
        %v2102 = vpop.f32.mrb[0].mxu0
        %2103 = vdwg.mxu0
        %v2104 = vadd.f32 %v1932, %v2096
        %v2105 = vadd.f32 %v1933, %v2101
        %v2106 = vld [vmem:[%s3] sm:$0x1]
        %v2108 = vlaneseq
        %v2109 = vshrl.u32 %v2108, 7
        %v2110 = vsub.s32 0, %v2109
        %v2111 = vrot.slane %v2106, %v2110
        %v2113 = vadd.f32 %v2104, %v2111
        %v2114 = vadd.f32 %v2105, %v2111
        %v2115 = vmax.f32 %v2113, 0.0
        %v2116 = vmax.f32 %v2114, 0.0
        %v2117 = vld [vmem:[%s4] sm:$0xff]
        %v2118 = vld [vmem:[%s4 + $0x8] sm:$0xff]
        %vm2119 = vcmask 130048
        %v2121 = vsel %vm2119, %v2117, 0
        %v2124 = vsel %vm2119, %v2118, 0
        %2126 = vmatprep.subr.mxu0 0.0
        %2127 = vmatpush1.msra.mxu0 %v2115
        %2128 = vmatprep.subr.mxu0 0.0
        %2129 = vmatpush1.msra.mxu0 %v2116
        %2130 = vmatprep.subr.mxu0 0.0
        %2131 = vmatpush1.msra.mxu0 0.0
        %2132 = vmatprep.subr.mxu0 0.0
        %2133 = vmatpush1.msra.mxu0 0.0
        %2134 = vmatprep.subr.mxu0 0.0
        %2135 = vmatpush1.msra.mxu0 0.0
        %2136 = vmatprep.subr.mxu0 0.0
        %2137 = vmatpush1.msra.mxu0 0.0
        %2138 = vmatprep.subr.mxu0 0.0
        %2139 = vmatpush1.msra.mxu0 0.0
        %2140 = vmatprep.subr.mxu0 0.0
        %2141 = vmatpush1.msra.mxu0 0.0
        %2142 = vmatprep.subr.mxu0 0.0
        %2143 = vmatpush1.msra.mxu0 0.0
        %2144 = vmatprep.subr.mxu0 0.0
        %2145 = vmatpush1.msra.mxu0 0.0
        %2146 = vmatprep.subr.mxu0 0.0
        %2147 = vmatpush1.msra.mxu0 0.0
        %2148 = vmatprep.subr.mxu0 0.0
        %2149 = vmatpush1.msra.mxu0 0.0
        %2150 = vmatprep.subr.mxu0 0.0
        %2151 = vmatpush1.msra.mxu0 0.0
        %2152 = vmatprep.subr.mxu0 0.0
        %2153 = vmatpush1.msra.mxu0 0.0
        %2154 = vmatprep.subr.mxu0 0.0
        %2155 = vmatpush1.msra.mxu0 0.0
        %2156 = vmatprep.subr.mxu0 0.0
        %2157 = vmatpush1.msra.mxu0 0.0
        %2158 = vmatprep.subr.mxu0 0.0
        %2159 = vmatpush1.msra.mxu0 0.0
        %2160 = vmatprep.subr.mxu0 0.0
        %2161 = vmatpush1.msra.mxu0 0.0
        %2162 = vmatprep.subr.mxu0 0.0
        %2163 = vmatpush1.msra.mxu0 0.0
        %2164 = vmatprep.subr.mxu0 0.0
        %2165 = vmatpush1.msra.mxu0 0.0
        %2166 = vmatprep.subr.mxu0 0.0
        %2167 = vmatpush1.msra.mxu0 0.0
        %2168 = vmatprep.subr.mxu0 0.0
        %2169 = vmatpush1.msra.mxu0 0.0
        %2170 = vmatprep.subr.mxu0 0.0
        %2171 = vmatpush1.msra.mxu0 0.0
        %2172 = vmatprep.subr.mxu0 0.0
        %2173 = vmatpush1.msra.mxu0 0.0
        %2174 = vmatprep.subr.mxu0 0.0
        %2175 = vmatpush1.msra.mxu0 0.0
        %2176 = vmatprep.subr.mxu0 0.0
        %2177 = vmatpush1.msra.mxu0 0.0
        %2178 = vmatprep.subr.mxu0 0.0
        %2179 = vmatpush1.msra.mxu0 0.0
        %2180 = vmatprep.subr.mxu0 0.0
        %2181 = vmatpush1.msra.mxu0 0.0
        %2182 = vmatprep.subr.mxu0 0.0
        %2183 = vmatpush1.msra.mxu0 0.0
        %2184 = vmatprep.subr.mxu0 0.0
        %2185 = vmatpush1.msra.mxu0 0.0
        %2186 = vmatprep.subr.mxu0 0.0
        %2187 = vmatpush1.msra.mxu0 0.0
        %2188 = vmatprep.subr.mxu0 0.0
        %2189 = vmatpush1.msra.mxu0 0.0
        %2190 = vmatprep.mubr.f32.mxu0 0.0
        %2191 = vmatmul.mubr.f32.gmra.mrb[0].mxu0 %v2121
        %v2192 = vpop.f32.mrb[0].mxu0
        %v2193 = vadd.f32 0.0, %v2192
        %v2194 = vpop.f32.mrb[0].mxu0
        %2195 = vmatprep.mubr.f32.mxu0 0.0
        %2196 = vmatmul.mubr.f32.gmra.mrb[0].mxu0 %v2124
        %v2197 = vpop.f32.mrb[0].mxu0
        %v2198 = vadd.f32 0.0, %v2197
        %v2199 = vpop.f32.mrb[0].mxu0
        %2200 = vdwg.mxu0
        %v2201 = vld [vmem:[#allocation5] sm:$0xff]
        %v2202 = vld [vmem:[#allocation5 + $0x8] sm:$0xff]
        %v2203 = vld [vmem:[#allocation5 + $0x10] sm:$0xff]
        %v2204 = vld [vmem:[#allocation5 + $0x18] sm:$0xff]
        %s2205 = scalar_lea.vmem %s4, 16
        %v2206 = vld [vmem:[%s2205] sm:$0xff]
        %v2207 = vld [vmem:[%s2205 + $0x8] sm:$0xff]
        %v2209 = vsel %vm2119, %v2206, 0
        %v2212 = vsel %vm2119, %v2207, 0
        %2214 = vmatprep.subr.mxu0 0.0
        %2215 = vmatpush1.msra.mxu0 %v2115
        %2216 = vmatprep.subr.mxu0 0.0
        %2217 = vmatpush1.msra.mxu0 %v2116
        %2218 = vmatprep.subr.mxu0 0.0
        %2219 = vmatpush1.msra.mxu0 0.0
        %2220 = vmatprep.subr.mxu0 0.0
        %2221 = vmatpush1.msra.mxu0 0.0
        %2222 = vmatprep.subr.mxu0 0.0
        %2223 = vmatpush1.msra.mxu0 0.0
        %2224 = vmatprep.subr.mxu0 0.0
        %2225 = vmatpush1.msra.mxu0 0.0
        %2226 = vmatprep.subr.mxu0 0.0
        %2227 = vmatpush1.msra.mxu0 0.0
        %2228 = vmatprep.subr.mxu0 0.0
        %2229 = vmatpush1.msra.mxu0 0.0
        %2230 = vmatprep.subr.mxu0 0.0
        %2231 = vmatpush1.msra.mxu0 0.0
        %2232 = vmatprep.subr.mxu0 0.0
        %2233 = vmatpush1.msra.mxu0 0.0
        %2234 = vmatprep.subr.mxu0 0.0
        %2235 = vmatpush1.msra.mxu0 0.0
        %2236 = vmatprep.subr.mxu0 0.0
        %2237 = vmatpush1.msra.mxu0 0.0
        %2238 = vmatprep.subr.mxu0 0.0
        %2239 = vmatpush1.msra.mxu0 0.0
        %2240 = vmatprep.subr.mxu0 0.0
        %2241 = vmatpush1.msra.mxu0 0.0
        %2242 = vmatprep.subr.mxu0 0.0
        %2243 = vmatpush1.msra.mxu0 0.0
        %2244 = vmatprep.subr.mxu0 0.0
        %2245 = vmatpush1.msra.mxu0 0.0
        %2246 = vmatprep.subr.mxu0 0.0
        %2247 = vmatpush1.msra.mxu0 0.0
        %2248 = vmatprep.subr.mxu0 0.0
        %2249 = vmatpush1.msra.mxu0 0.0
        %2250 = vmatprep.subr.mxu0 0.0
        %2251 = vmatpush1.msra.mxu0 0.0
        %2252 = vmatprep.subr.mxu0 0.0
        %2253 = vmatpush1.msra.mxu0 0.0
        %2254 = vmatprep.subr.mxu0 0.0
        %2255 = vmatpush1.msra.mxu0 0.0
        %2256 = vmatprep.subr.mxu0 0.0
        %2257 = vmatpush1.msra.mxu0 0.0
        %2258 = vmatprep.subr.mxu0 0.0
        %2259 = vmatpush1.msra.mxu0 0.0
        %2260 = vmatprep.subr.mxu0 0.0
        %2261 = vmatpush1.msra.mxu0 0.0
        %2262 = vmatprep.subr.mxu0 0.0
        %2263 = vmatpush1.msra.mxu0 0.0
        %2264 = vmatprep.subr.mxu0 0.0
        %2265 = vmatpush1.msra.mxu0 0.0
        %2266 = vmatprep.subr.mxu0 0.0
        %2267 = vmatpush1.msra.mxu0 0.0
        %2268 = vmatprep.subr.mxu0 0.0
        %2269 = vmatpush1.msra.mxu0 0.0
        %2270 = vmatprep.subr.mxu0 0.0
        %2271 = vmatpush1.msra.mxu0 0.0
        %2272 = vmatprep.subr.mxu0 0.0
        %2273 = vmatpush1.msra.mxu0 0.0
        %2274 = vmatprep.subr.mxu0 0.0
        %2275 = vmatpush1.msra.mxu0 0.0
        %2276 = vmatprep.subr.mxu0 0.0
        %2277 = vmatpush1.msra.mxu0 0.0
        %2278 = vmatprep.mubr.f32.mxu0 0.0
        %2279 = vmatmul.mubr.f32.gmra.mrb[0].mxu0 %v2209
        %v2280 = vpop.f32.mrb[0].mxu0
        %v2281 = vadd.f32 0.0, %v2280
        %v2282 = vpop.f32.mrb[0].mxu0
        %2283 = vmatprep.mubr.f32.mxu0 0.0
        %2284 = vmatmul.mubr.f32.gmra.mrb[0].mxu0 %v2212
        %v2285 = vpop.f32.mrb[0].mxu0
        %v2286 = vadd.f32 0.0, %v2285
        %v2287 = vpop.f32.mrb[0].mxu0
        %2288 = vdwg.mxu0
        %s2289 = scalar_lea.vmem [#allocation5], 32
        %v2290 = vld [vmem:[%s2289] sm:$0xff]
        %v2291 = vld [vmem:[%s2289 + $0x8] sm:$0xff]
        %v2292 = vld [vmem:[%s2289 + $0x10] sm:$0xff]
        %v2293 = vld [vmem:[%s2289 + $0x18] sm:$0xff]
        %vm2294 = vcmask 261120
        %v2296 = vsel %vm2294, %v2281, 0
        %v2299 = vsel %vm2294, %v2286, 0
        %2301 = vmatprep.subr.mxu0 0.0
        %2302 = vmatpush1.msra.mxu0 %v2290
        %2303 = vmatprep.subr.mxu0 0.0
        %2304 = vmatpush1.msra.mxu0 %v2291
        %2305 = vmatprep.subr.mxu0 0.0
        %2306 = vmatpush1.msra.mxu0 %v2292
        %2307 = vmatprep.subr.mxu0 0.0
        %2308 = vmatpush1.msra.mxu0 %v2293
        %2309 = vmatprep.subr.mxu0 0.0
        %2310 = vmatpush1.msra.mxu0 0.0
        %2311 = vmatprep.subr.mxu0 0.0
        %2312 = vmatpush1.msra.mxu0 0.0
        %2313 = vmatprep.subr.mxu0 0.0
        %2314 = vmatpush1.msra.mxu0 0.0
        %2315 = vmatprep.subr.mxu0 0.0
        %2316 = vmatpush1.msra.mxu0 0.0
        %2317 = vmatprep.subr.mxu0 0.0
        %2318 = vmatpush1.msra.mxu0 0.0
        %2319 = vmatprep.subr.mxu0 0.0
        %2320 = vmatpush1.msra.mxu0 0.0
        %2321 = vmatprep.subr.mxu0 0.0
        %2322 = vmatpush1.msra.mxu0 0.0
        %2323 = vmatprep.subr.mxu0 0.0
        %2324 = vmatpush1.msra.mxu0 0.0
        %2325 = vmatprep.subr.mxu0 0.0
        %2326 = vmatpush1.msra.mxu0 0.0
        %2327 = vmatprep.subr.mxu0 0.0
        %2328 = vmatpush1.msra.mxu0 0.0
        %2329 = vmatprep.subr.mxu0 0.0
        %2330 = vmatpush1.msra.mxu0 0.0
        %2331 = vmatprep.subr.mxu0 0.0
        %2332 = vmatpush1.msra.mxu0 0.0
        %2333 = vmatprep.subr.mxu0 0.0
        %2334 = vmatpush1.msra.mxu0 0.0
        %2335 = vmatprep.subr.mxu0 0.0
        %2336 = vmatpush1.msra.mxu0 0.0
        %2337 = vmatprep.subr.mxu0 0.0
        %2338 = vmatpush1.msra.mxu0 0.0
        %2339 = vmatprep.subr.mxu0 0.0
        %2340 = vmatpush1.msra.mxu0 0.0
        %2341 = vmatprep.subr.mxu0 0.0
        %2342 = vmatpush1.msra.mxu0 0.0
        %2343 = vmatprep.subr.mxu0 0.0
        %2344 = vmatpush1.msra.mxu0 0.0
        %2345 = vmatprep.subr.mxu0 0.0
        %2346 = vmatpush1.msra.mxu0 0.0
        %2347 = vmatprep.subr.mxu0 0.0
        %2348 = vmatpush1.msra.mxu0 0.0
        %2349 = vmatprep.subr.mxu0 0.0
        %2350 = vmatpush1.msra.mxu0 0.0
        %2351 = vmatprep.subr.mxu0 0.0
        %2352 = vmatpush1.msra.mxu0 0.0
        %2353 = vmatprep.subr.mxu0 0.0
        %2354 = vmatpush1.msra.mxu0 0.0
        %2355 = vmatprep.subr.mxu0 0.0
        %2356 = vmatpush1.msra.mxu0 0.0
        %2357 = vmatprep.subr.mxu0 0.0
        %2358 = vmatpush1.msra.mxu0 0.0
        %2359 = vmatprep.subr.mxu0 0.0
        %2360 = vmatpush1.msra.mxu0 0.0
        %2361 = vmatprep.subr.mxu0 0.0
        %2362 = vmatpush1.msra.mxu0 0.0
        %2363 = vmatprep.subr.mxu0 0.0
        %2364 = vmatpush1.msra.mxu0 0.0
        %2365 = vmatprep.mubr.f32.mxu0 0.0
        %2366 = vmatmul.mubr.f32.gmra.mrb[0].mxu0 %v2296
        %v2367 = vpop.f32.mrb[0].mxu0
        %v2368 = vadd.f32 0.0, %v2367
        %v2369 = vpop.f32.mrb[0].mxu0
        %2370 = vmatprep.mubr.f32.mxu0 0.0
        %2371 = vmatmul.mubr.f32.gmra.mrb[0].mxu0 %v2299
        %v2372 = vpop.f32.mrb[0].mxu0
        %v2373 = vadd.f32 0.0, %v2372
        %v2374 = vpop.f32.mrb[0].mxu0
        %2375 = vdwg.mxu0
        %v2377 = vsel %vm2294, %v2193, 0
        %v2380 = vsel %vm2294, %v2198, 0
        %2382 = vmatprep.subr.mxu0 0.0
        %2383 = vmatpush1.msra.mxu0 %v2201
        %2384 = vmatprep.subr.mxu0 0.0
        %2385 = vmatpush1.msra.mxu0 %v2202
        %2386 = vmatprep.subr.mxu0 0.0
        %2387 = vmatpush1.msra.mxu0 %v2203
        %2388 = vmatprep.subr.mxu0 0.0
        %2389 = vmatpush1.msra.mxu0 %v2204
        %2390 = vmatprep.subr.mxu0 0.0
        %2391 = vmatpush1.msra.mxu0 0.0
        %2392 = vmatprep.subr.mxu0 0.0
        %2393 = vmatpush1.msra.mxu0 0.0
        %2394 = vmatprep.subr.mxu0 0.0
        %2395 = vmatpush1.msra.mxu0 0.0
        %2396 = vmatprep.subr.mxu0 0.0
        %2397 = vmatpush1.msra.mxu0 0.0
        %2398 = vmatprep.subr.mxu0 0.0
        %2399 = vmatpush1.msra.mxu0 0.0
        %2400 = vmatprep.subr.mxu0 0.0
        %2401 = vmatpush1.msra.mxu0 0.0
        %2402 = vmatprep.subr.mxu0 0.0
        %2403 = vmatpush1.msra.mxu0 0.0
        %2404 = vmatprep.subr.mxu0 0.0
        %2405 = vmatpush1.msra.mxu0 0.0
        %2406 = vmatprep.subr.mxu0 0.0
        %2407 = vmatpush1.msra.mxu0 0.0
        %2408 = vmatprep.subr.mxu0 0.0
        %2409 = vmatpush1.msra.mxu0 0.0
        %2410 = vmatprep.subr.mxu0 0.0
        %2411 = vmatpush1.msra.mxu0 0.0
        %2412 = vmatprep.subr.mxu0 0.0
        %2413 = vmatpush1.msra.mxu0 0.0
        %2414 = vmatprep.subr.mxu0 0.0
        %2415 = vmatpush1.msra.mxu0 0.0
        %2416 = vmatprep.subr.mxu0 0.0
        %2417 = vmatpush1.msra.mxu0 0.0
        %2418 = vmatprep.subr.mxu0 0.0
        %2419 = vmatpush1.msra.mxu0 0.0
        %2420 = vmatprep.subr.mxu0 0.0
        %2421 = vmatpush1.msra.mxu0 0.0
        %2422 = vmatprep.subr.mxu0 0.0
        %2423 = vmatpush1.msra.mxu0 0.0
        %2424 = vmatprep.subr.mxu0 0.0
        %2425 = vmatpush1.msra.mxu0 0.0
        %2426 = vmatprep.subr.mxu0 0.0
        %2427 = vmatpush1.msra.mxu0 0.0
        %2428 = vmatprep.subr.mxu0 0.0
        %2429 = vmatpush1.msra.mxu0 0.0
        %2430 = vmatprep.subr.mxu0 0.0
        %2431 = vmatpush1.msra.mxu0 0.0
        %2432 = vmatprep.subr.mxu0 0.0
        %2433 = vmatpush1.msra.mxu0 0.0
        %2434 = vmatprep.subr.mxu0 0.0
        %2435 = vmatpush1.msra.mxu0 0.0
        %2436 = vmatprep.subr.mxu0 0.0
        %2437 = vmatpush1.msra.mxu0 0.0
        %2438 = vmatprep.subr.mxu0 0.0
        %2439 = vmatpush1.msra.mxu0 0.0
        %2440 = vmatprep.subr.mxu0 0.0
        %2441 = vmatpush1.msra.mxu0 0.0
        %2442 = vmatprep.subr.mxu0 0.0
        %2443 = vmatpush1.msra.mxu0 0.0
        %2444 = vmatprep.subr.mxu0 0.0
        %2445 = vmatpush1.msra.mxu0 0.0
        %2446 = vmatprep.mubr.f32.mxu0 0.0
        %2447 = vmatmul.mubr.f32.gmra.mrb[0].mxu0 %v2377
        %v2448 = vpop.f32.mrb[0].mxu0
        %v2449 = vadd.f32 %v2368, %v2448
        %v2450 = vpop.f32.mrb[0].mxu0
        %2451 = vmatprep.mubr.f32.mxu0 0.0
        %2452 = vmatmul.mubr.f32.gmra.mrb[0].mxu0 %v2380
        %v2453 = vpop.f32.mrb[0].mxu0
        %v2454 = vadd.f32 %v2373, %v2453
        %v2455 = vpop.f32.mrb[0].mxu0
        %2456 = vdwg.mxu0
        %s2457 = scalar_lea.vmem %s4, 32
        %v2458 = vld [vmem:[%s2457] sm:$0xff]
        %v2459 = vld [vmem:[%s2457 + $0x8] sm:$0xff]
        %v2461 = vsel %vm2119, %v2458, 0
        %v2464 = vsel %vm2119, %v2459, 0
        %2466 = vmatprep.subr.mxu0 0.0
        %2467 = vmatpush1.msra.mxu0 %v2115
        %2468 = vmatprep.subr.mxu0 0.0
        %2469 = vmatpush1.msra.mxu0 %v2116
        %2470 = vmatprep.subr.mxu0 0.0
        %2471 = vmatpush1.msra.mxu0 0.0
        %2472 = vmatprep.subr.mxu0 0.0
        %2473 = vmatpush1.msra.mxu0 0.0
        %2474 = vmatprep.subr.mxu0 0.0
        %2475 = vmatpush1.msra.mxu0 0.0
        %2476 = vmatprep.subr.mxu0 0.0
        %2477 = vmatpush1.msra.mxu0 0.0
        %2478 = vmatprep.subr.mxu0 0.0
        %2479 = vmatpush1.msra.mxu0 0.0
        %2480 = vmatprep.subr.mxu0 0.0
        %2481 = vmatpush1.msra.mxu0 0.0
        %2482 = vmatprep.subr.mxu0 0.0
        %2483 = vmatpush1.msra.mxu0 0.0
        %2484 = vmatprep.subr.mxu0 0.0
        %2485 = vmatpush1.msra.mxu0 0.0
        %2486 = vmatprep.subr.mxu0 0.0
        %2487 = vmatpush1.msra.mxu0 0.0
        %2488 = vmatprep.subr.mxu0 0.0
        %2489 = vmatpush1.msra.mxu0 0.0
        %2490 = vmatprep.subr.mxu0 0.0
        %2491 = vmatpush1.msra.mxu0 0.0
        %2492 = vmatprep.subr.mxu0 0.0
        %2493 = vmatpush1.msra.mxu0 0.0
        %2494 = vmatprep.subr.mxu0 0.0
        %2495 = vmatpush1.msra.mxu0 0.0
        %2496 = vmatprep.subr.mxu0 0.0
        %2497 = vmatpush1.msra.mxu0 0.0
        %2498 = vmatprep.subr.mxu0 0.0
        %2499 = vmatpush1.msra.mxu0 0.0
        %2500 = vmatprep.subr.mxu0 0.0
        %2501 = vmatpush1.msra.mxu0 0.0
        %2502 = vmatprep.subr.mxu0 0.0
        %2503 = vmatpush1.msra.mxu0 0.0
        %2504 = vmatprep.subr.mxu0 0.0
        %2505 = vmatpush1.msra.mxu0 0.0
        %2506 = vmatprep.subr.mxu0 0.0
        %2507 = vmatpush1.msra.mxu0 0.0
        %2508 = vmatprep.subr.mxu0 0.0
        %2509 = vmatpush1.msra.mxu0 0.0
        %2510 = vmatprep.subr.mxu0 0.0
        %2511 = vmatpush1.msra.mxu0 0.0
        %2512 = vmatprep.subr.mxu0 0.0
        %2513 = vmatpush1.msra.mxu0 0.0
        %2514 = vmatprep.subr.mxu0 0.0
        %2515 = vmatpush1.msra.mxu0 0.0
        %2516 = vmatprep.subr.mxu0 0.0
        %2517 = vmatpush1.msra.mxu0 0.0
        %2518 = vmatprep.subr.mxu0 0.0
        %2519 = vmatpush1.msra.mxu0 0.0
        %2520 = vmatprep.subr.mxu0 0.0
        %2521 = vmatpush1.msra.mxu0 0.0
        %2522 = vmatprep.subr.mxu0 0.0
        %2523 = vmatpush1.msra.mxu0 0.0
        %2524 = vmatprep.subr.mxu0 0.0
        %2525 = vmatpush1.msra.mxu0 0.0
        %2526 = vmatprep.subr.mxu0 0.0
        %2527 = vmatpush1.msra.mxu0 0.0
        %2528 = vmatprep.subr.mxu0 0.0
        %2529 = vmatpush1.msra.mxu0 0.0
        %2530 = vmatprep.mubr.f32.mxu0 0.0
        %2531 = vmatmul.mubr.f32.gmra.mrb[0].mxu0 %v2461
        %v2532 = vpop.f32.mrb[0].mxu0
        %v2533 = vadd.f32 0.0, %v2532
        %v2534 = vpop.f32.mrb[0].mxu0
        %2535 = vmatprep.mubr.f32.mxu0 0.0
        %2536 = vmatmul.mubr.f32.gmra.mrb[0].mxu0 %v2464
        %v2537 = vpop.f32.mrb[0].mxu0
        %v2538 = vadd.f32 0.0, %v2537
        %v2539 = vpop.f32.mrb[0].mxu0
        %2540 = vdwg.mxu0
        %s2541 = scalar_lea.vmem [#allocation5], 64
        %v2542 = vld [vmem:[%s2541] sm:$0xff]
        %v2543 = vld [vmem:[%s2541 + $0x8] sm:$0xff]
        %v2544 = vld [vmem:[%s2541 + $0x10] sm:$0xff]
        %v2545 = vld [vmem:[%s2541 + $0x18] sm:$0xff]
        %v2547 = vsel %vm2294, %v2533, 0
        %v2550 = vsel %vm2294, %v2538, 0
        %2552 = vmatprep.subr.mxu0 0.0
        %2553 = vmatpush1.msra.mxu0 %v2542
        %2554 = vmatprep.subr.mxu0 0.0
        %2555 = vmatpush1.msra.mxu0 %v2543
        %2556 = vmatprep.subr.mxu0 0.0
        %2557 = vmatpush1.msra.mxu0 %v2544
        %2558 = vmatprep.subr.mxu0 0.0
        %2559 = vmatpush1.msra.mxu0 %v2545
        %2560 = vmatprep.subr.mxu0 0.0
        %2561 = vmatpush1.msra.mxu0 0.0
        %2562 = vmatprep.subr.mxu0 0.0
        %2563 = vmatpush1.msra.mxu0 0.0
        %2564 = vmatprep.subr.mxu0 0.0
        %2565 = vmatpush1.msra.mxu0 0.0
        %2566 = vmatprep.subr.mxu0 0.0
        %2567 = vmatpush1.msra.mxu0 0.0
        %2568 = vmatprep.subr.mxu0 0.0
        %2569 = vmatpush1.msra.mxu0 0.0
        %2570 = vmatprep.subr.mxu0 0.0
        %2571 = vmatpush1.msra.mxu0 0.0
        %2572 = vmatprep.subr.mxu0 0.0
        %2573 = vmatpush1.msra.mxu0 0.0
        %2574 = vmatprep.subr.mxu0 0.0
        %2575 = vmatpush1.msra.mxu0 0.0
        %2576 = vmatprep.subr.mxu0 0.0
        %2577 = vmatpush1.msra.mxu0 0.0
        %2578 = vmatprep.subr.mxu0 0.0
        %2579 = vmatpush1.msra.mxu0 0.0
        %2580 = vmatprep.subr.mxu0 0.0
        %2581 = vmatpush1.msra.mxu0 0.0
        %2582 = vmatprep.subr.mxu0 0.0
        %2583 = vmatpush1.msra.mxu0 0.0
        %2584 = vmatprep.subr.mxu0 0.0
        %2585 = vmatpush1.msra.mxu0 0.0
        %2586 = vmatprep.subr.mxu0 0.0
        %2587 = vmatpush1.msra.mxu0 0.0
        %2588 = vmatprep.subr.mxu0 0.0
        %2589 = vmatpush1.msra.mxu0 0.0
        %2590 = vmatprep.subr.mxu0 0.0
        %2591 = vmatpush1.msra.mxu0 0.0
        %2592 = vmatprep.subr.mxu0 0.0
        %2593 = vmatpush1.msra.mxu0 0.0
        %2594 = vmatprep.subr.mxu0 0.0
        %2595 = vmatpush1.msra.mxu0 0.0
        %2596 = vmatprep.subr.mxu0 0.0
        %2597 = vmatpush1.msra.mxu0 0.0
        %2598 = vmatprep.subr.mxu0 0.0
        %2599 = vmatpush1.msra.mxu0 0.0
        %2600 = vmatprep.subr.mxu0 0.0
        %2601 = vmatpush1.msra.mxu0 0.0
        %2602 = vmatprep.subr.mxu0 0.0
        %2603 = vmatpush1.msra.mxu0 0.0
        %2604 = vmatprep.subr.mxu0 0.0
        %2605 = vmatpush1.msra.mxu0 0.0
        %2606 = vmatprep.subr.mxu0 0.0
        %2607 = vmatpush1.msra.mxu0 0.0
        %2608 = vmatprep.subr.mxu0 0.0
        %2609 = vmatpush1.msra.mxu0 0.0
        %2610 = vmatprep.subr.mxu0 0.0
        %2611 = vmatpush1.msra.mxu0 0.0
        %2612 = vmatprep.subr.mxu0 0.0
        %2613 = vmatpush1.msra.mxu0 0.0
        %2614 = vmatprep.subr.mxu0 0.0
        %2615 = vmatpush1.msra.mxu0 0.0
        %2616 = vmatprep.mubr.f32.mxu0 0.0
        %2617 = vmatmul.mubr.f32.gmra.mrb[0].mxu0 %v2547
        %v2618 = vpop.f32.mrb[0].mxu0
        %v2619 = vadd.f32 0.0, %v2618
        %v2620 = vpop.f32.mrb[0].mxu0
        %2621 = vmatprep.mubr.f32.mxu0 0.0
        %2622 = vmatmul.mubr.f32.gmra.mrb[0].mxu0 %v2550
        %v2623 = vpop.f32.mrb[0].mxu0
        %v2624 = vadd.f32 0.0, %v2623
        %v2625 = vpop.f32.mrb[0].mxu0
        %2626 = vdwg.mxu0
        %v2627 = vadd.f32 %v2449, %v2619
        %v2628 = vadd.f32 %v2454, %v2624
        %s2629 = scalar_lea.vmem %s4, 48
        %v2630 = vld [vmem:[%s2629] sm:$0xff]
        %v2631 = vld [vmem:[%s2629 + $0x8] sm:$0xff]
        %v2633 = vsel %vm2119, %v2630, 0
        %v2636 = vsel %vm2119, %v2631, 0
        %2638 = vmatprep.subr.mxu0 0.0
        %2639 = vmatpush1.msra.mxu0 %v2115
        %2640 = vmatprep.subr.mxu0 0.0
        %2641 = vmatpush1.msra.mxu0 %v2116
        %2642 = vmatprep.subr.mxu0 0.0
        %2643 = vmatpush1.msra.mxu0 0.0
        %2644 = vmatprep.subr.mxu0 0.0
        %2645 = vmatpush1.msra.mxu0 0.0
        %2646 = vmatprep.subr.mxu0 0.0
        %2647 = vmatpush1.msra.mxu0 0.0
        %2648 = vmatprep.subr.mxu0 0.0
        %2649 = vmatpush1.msra.mxu0 0.0
        %2650 = vmatprep.subr.mxu0 0.0
        %2651 = vmatpush1.msra.mxu0 0.0
        %2652 = vmatprep.subr.mxu0 0.0
        %2653 = vmatpush1.msra.mxu0 0.0
        %2654 = vmatprep.subr.mxu0 0.0
        %2655 = vmatpush1.msra.mxu0 0.0
        %2656 = vmatprep.subr.mxu0 0.0
        %2657 = vmatpush1.msra.mxu0 0.0
        %2658 = vmatprep.subr.mxu0 0.0
        %2659 = vmatpush1.msra.mxu0 0.0
        %2660 = vmatprep.subr.mxu0 0.0
        %2661 = vmatpush1.msra.mxu0 0.0
        %2662 = vmatprep.subr.mxu0 0.0
        %2663 = vmatpush1.msra.mxu0 0.0
        %2664 = vmatprep.subr.mxu0 0.0
        %2665 = vmatpush1.msra.mxu0 0.0
        %2666 = vmatprep.subr.mxu0 0.0
        %2667 = vmatpush1.msra.mxu0 0.0
        %2668 = vmatprep.subr.mxu0 0.0
        %2669 = vmatpush1.msra.mxu0 0.0
        %2670 = vmatprep.subr.mxu0 0.0
        %2671 = vmatpush1.msra.mxu0 0.0
        %2672 = vmatprep.subr.mxu0 0.0
        %2673 = vmatpush1.msra.mxu0 0.0
        %2674 = vmatprep.subr.mxu0 0.0
        %2675 = vmatpush1.msra.mxu0 0.0
        %2676 = vmatprep.subr.mxu0 0.0
        %2677 = vmatpush1.msra.mxu0 0.0
        %2678 = vmatprep.subr.mxu0 0.0
        %2679 = vmatpush1.msra.mxu0 0.0
        %2680 = vmatprep.subr.mxu0 0.0
        %2681 = vmatpush1.msra.mxu0 0.0
        %2682 = vmatprep.subr.mxu0 0.0
        %2683 = vmatpush1.msra.mxu0 0.0
        %2684 = vmatprep.subr.mxu0 0.0
        %2685 = vmatpush1.msra.mxu0 0.0
        %2686 = vmatprep.subr.mxu0 0.0
        %2687 = vmatpush1.msra.mxu0 0.0
        %2688 = vmatprep.subr.mxu0 0.0
        %2689 = vmatpush1.msra.mxu0 0.0
        %2690 = vmatprep.subr.mxu0 0.0
        %2691 = vmatpush1.msra.mxu0 0.0
        %2692 = vmatprep.subr.mxu0 0.0
        %2693 = vmatpush1.msra.mxu0 0.0
        %2694 = vmatprep.subr.mxu0 0.0
        %2695 = vmatpush1.msra.mxu0 0.0
        %2696 = vmatprep.subr.mxu0 0.0
        %2697 = vmatpush1.msra.mxu0 0.0
        %2698 = vmatprep.subr.mxu0 0.0
        %2699 = vmatpush1.msra.mxu0 0.0
        %2700 = vmatprep.subr.mxu0 0.0
        %2701 = vmatpush1.msra.mxu0 0.0
        %2702 = vmatprep.mubr.f32.mxu0 0.0
        %2703 = vmatmul.mubr.f32.gmra.mrb[0].mxu0 %v2633
        %v2704 = vpop.f32.mrb[0].mxu0
        %v2705 = vadd.f32 0.0, %v2704
        %v2706 = vpop.f32.mrb[0].mxu0
        %2707 = vmatprep.mubr.f32.mxu0 0.0
        %2708 = vmatmul.mubr.f32.gmra.mrb[0].mxu0 %v2636
        %v2709 = vpop.f32.mrb[0].mxu0
        %v2710 = vadd.f32 0.0, %v2709
        %v2711 = vpop.f32.mrb[0].mxu0
        %2712 = vdwg.mxu0
        %s2713 = scalar_lea.vmem [#allocation5], 96
        %v2714 = vld [vmem:[%s2713] sm:$0xff]
        %v2715 = vld [vmem:[%s2713 + $0x8] sm:$0xff]
        %v2716 = vld [vmem:[%s2713 + $0x10] sm:$0xff]
        %v2717 = vld [vmem:[%s2713 + $0x18] sm:$0xff]
        %v2719 = vsel %vm2294, %v2705, 0
        %v2722 = vsel %vm2294, %v2710, 0
        %2724 = vmatprep.subr.mxu0 0.0
        %2725 = vmatpush1.msra.mxu0 %v2714
        %2726 = vmatprep.subr.mxu0 0.0
        %2727 = vmatpush1.msra.mxu0 %v2715
        %2728 = vmatprep.subr.mxu0 0.0
        %2729 = vmatpush1.msra.mxu0 %v2716
        %2730 = vmatprep.subr.mxu0 0.0
        %2731 = vmatpush1.msra.mxu0 %v2717
        %2732 = vmatprep.subr.mxu0 0.0
        %2733 = vmatpush1.msra.mxu0 0.0
        %2734 = vmatprep.subr.mxu0 0.0
        %2735 = vmatpush1.msra.mxu0 0.0
        %2736 = vmatprep.subr.mxu0 0.0
        %2737 = vmatpush1.msra.mxu0 0.0
        %2738 = vmatprep.subr.mxu0 0.0
        %2739 = vmatpush1.msra.mxu0 0.0
        %2740 = vmatprep.subr.mxu0 0.0
        %2741 = vmatpush1.msra.mxu0 0.0
        %2742 = vmatprep.subr.mxu0 0.0
        %2743 = vmatpush1.msra.mxu0 0.0
        %2744 = vmatprep.subr.mxu0 0.0
        %2745 = vmatpush1.msra.mxu0 0.0
        %2746 = vmatprep.subr.mxu0 0.0
        %2747 = vmatpush1.msra.mxu0 0.0
        %2748 = vmatprep.subr.mxu0 0.0
        %2749 = vmatpush1.msra.mxu0 0.0
        %2750 = vmatprep.subr.mxu0 0.0
        %2751 = vmatpush1.msra.mxu0 0.0
        %2752 = vmatprep.subr.mxu0 0.0
        %2753 = vmatpush1.msra.mxu0 0.0
        %2754 = vmatprep.subr.mxu0 0.0
        %2755 = vmatpush1.msra.mxu0 0.0
        %2756 = vmatprep.subr.mxu0 0.0
        %2757 = vmatpush1.msra.mxu0 0.0
        %2758 = vmatprep.subr.mxu0 0.0
        %2759 = vmatpush1.msra.mxu0 0.0
        %2760 = vmatprep.subr.mxu0 0.0
        %2761 = vmatpush1.msra.mxu0 0.0
        %2762 = vmatprep.subr.mxu0 0.0
        %2763 = vmatpush1.msra.mxu0 0.0
        %2764 = vmatprep.subr.mxu0 0.0
        %2765 = vmatpush1.msra.mxu0 0.0
        %2766 = vmatprep.subr.mxu0 0.0
        %2767 = vmatpush1.msra.mxu0 0.0
        %2768 = vmatprep.subr.mxu0 0.0
        %2769 = vmatpush1.msra.mxu0 0.0
        %2770 = vmatprep.subr.mxu0 0.0
        %2771 = vmatpush1.msra.mxu0 0.0
        %2772 = vmatprep.subr.mxu0 0.0
        %2773 = vmatpush1.msra.mxu0 0.0
        %2774 = vmatprep.subr.mxu0 0.0
        %2775 = vmatpush1.msra.mxu0 0.0
        %2776 = vmatprep.subr.mxu0 0.0
        %2777 = vmatpush1.msra.mxu0 0.0
        %2778 = vmatprep.subr.mxu0 0.0
        %2779 = vmatpush1.msra.mxu0 0.0
        %2780 = vmatprep.subr.mxu0 0.0
        %2781 = vmatpush1.msra.mxu0 0.0
        %2782 = vmatprep.subr.mxu0 0.0
        %2783 = vmatpush1.msra.mxu0 0.0
        %2784 = vmatprep.subr.mxu0 0.0
        %2785 = vmatpush1.msra.mxu0 0.0
        %2786 = vmatprep.subr.mxu0 0.0
        %2787 = vmatpush1.msra.mxu0 0.0
        %2788 = vmatprep.mubr.f32.mxu0 0.0
        %2789 = vmatmul.mubr.f32.gmra.mrb[0].mxu0 %v2719
        %v2790 = vpop.f32.mrb[0].mxu0
        %v2791 = vadd.f32 0.0, %v2790
        %v2792 = vpop.f32.mrb[0].mxu0
        %2793 = vmatprep.mubr.f32.mxu0 0.0
        %2794 = vmatmul.mubr.f32.gmra.mrb[0].mxu0 %v2722
        %v2795 = vpop.f32.mrb[0].mxu0
        %v2796 = vadd.f32 0.0, %v2795
        %v2797 = vpop.f32.mrb[0].mxu0
        %2798 = vdwg.mxu0
        %v2799 = vadd.f32 %v2627, %v2791
        %v2800 = vadd.f32 %v2628, %v2796
        %v2801 = vld [vmem:[%s6] sm:$0x1]
        %v2803 = vlaneseq
        %v2804 = vshrl.u32 %v2803, 7
        %v2805 = vsub.s32 0, %v2804
        %v2806 = vrot.slane %v2801, %v2805
        %v2808 = vadd.f32 %v2799, %v2806
        %v2809 = vadd.f32 %v2800, %v2806
        %v2810 = vmax.f32 %v2808, 0.0
        %v2811 = vmax.f32 %v2809, 0.0
        %v2812 = vld [vmem:[#allocation7] sm:$0xff]
        %v2814 = vsel %vm2119, %v2812, 0
        %2816 = vmatprep.subr.mxu0 0.0
        %2817 = vmatpush1.msra.mxu0 %v2810
        %2818 = vmatprep.subr.mxu0 0.0
        %2819 = vmatpush1.msra.mxu0 %v2811
        %2820 = vmatprep.subr.mxu0 0.0
        %2821 = vmatpush1.msra.mxu0 0.0
        %2822 = vmatprep.subr.mxu0 0.0
        %2823 = vmatpush1.msra.mxu0 0.0
        %2824 = vmatprep.subr.mxu0 0.0
        %2825 = vmatpush1.msra.mxu0 0.0
        %2826 = vmatprep.subr.mxu0 0.0
        %2827 = vmatpush1.msra.mxu0 0.0
        %2828 = vmatprep.subr.mxu0 0.0
        %2829 = vmatpush1.msra.mxu0 0.0
        %2830 = vmatprep.subr.mxu0 0.0
        %2831 = vmatpush1.msra.mxu0 0.0
        %2832 = vmatprep.subr.mxu0 0.0
        %2833 = vmatpush1.msra.mxu0 0.0
        %2834 = vmatprep.subr.mxu0 0.0
        %2835 = vmatpush1.msra.mxu0 0.0
        %2836 = vmatprep.subr.mxu0 0.0
        %2837 = vmatpush1.msra.mxu0 0.0
        %2838 = vmatprep.subr.mxu0 0.0
        %2839 = vmatpush1.msra.mxu0 0.0
        %2840 = vmatprep.subr.mxu0 0.0
        %2841 = vmatpush1.msra.mxu0 0.0
        %2842 = vmatprep.subr.mxu0 0.0
        %2843 = vmatpush1.msra.mxu0 0.0
        %2844 = vmatprep.subr.mxu0 0.0
        %2845 = vmatpush1.msra.mxu0 0.0
        %2846 = vmatprep.subr.mxu0 0.0
        %2847 = vmatpush1.msra.mxu0 0.0
        %2848 = vmatprep.subr.mxu0 0.0
        %2849 = vmatpush1.msra.mxu0 0.0
        %2850 = vmatprep.subr.mxu0 0.0
        %2851 = vmatpush1.msra.mxu0 0.0
        %2852 = vmatprep.subr.mxu0 0.0
        %2853 = vmatpush1.msra.mxu0 0.0
        %2854 = vmatprep.subr.mxu0 0.0
        %2855 = vmatpush1.msra.mxu0 0.0
        %2856 = vmatprep.subr.mxu0 0.0
        %2857 = vmatpush1.msra.mxu0 0.0
        %2858 = vmatprep.subr.mxu0 0.0
        %2859 = vmatpush1.msra.mxu0 0.0
        %2860 = vmatprep.subr.mxu0 0.0
        %2861 = vmatpush1.msra.mxu0 0.0
        %2862 = vmatprep.subr.mxu0 0.0
        %2863 = vmatpush1.msra.mxu0 0.0
        %2864 = vmatprep.subr.mxu0 0.0
        %2865 = vmatpush1.msra.mxu0 0.0
        %2866 = vmatprep.subr.mxu0 0.0
        %2867 = vmatpush1.msra.mxu0 0.0
        %2868 = vmatprep.subr.mxu0 0.0
        %2869 = vmatpush1.msra.mxu0 0.0
        %2870 = vmatprep.subr.mxu0 0.0
        %2871 = vmatpush1.msra.mxu0 0.0
        %2872 = vmatprep.subr.mxu0 0.0
        %2873 = vmatpush1.msra.mxu0 0.0
        %2874 = vmatprep.subr.mxu0 0.0
        %2875 = vmatpush1.msra.mxu0 0.0
        %2876 = vmatprep.subr.mxu0 0.0
        %2877 = vmatpush1.msra.mxu0 0.0
        %2878 = vmatprep.subr.mxu0 0.0
        %2879 = vmatpush1.msra.mxu0 0.0
        %2880 = vmatprep.mubr.f32.mxu0 0.0
        %2881 = vmatmul.mubr.f32.gmra.mrb[0].mxu0 %v2814
        %v2882 = vpop.f32.mrb[0].mxu0
        %v2883 = vadd.f32 0.0, %v2882
        %v2884 = vpop.f32.mrb[0].mxu0
        %2885 = vdwg.mxu0
        %v2886 = vld [vmem:[#allocation8] sm:$0xff]
        %v2887 = vld [vmem:[#allocation8 + $0x8] sm:$0xff]
        %v2888 = vld [vmem:[#allocation8 + $0x10] sm:$0xff]
        %v2889 = vld [vmem:[#allocation8 + $0x18] sm:$0xff]
        %v2890 = vld [vmem:[#allocation8 + $0x20] sm:$0xff]
        %v2891 = vld [vmem:[#allocation8 + $0x28] sm:$0xff]
        %v2892 = vld [vmem:[#allocation8 + $0x30] sm:$0xff]
        %v2893 = vld [vmem:[#allocation8 + $0x38] sm:$0xff]
        %s2894 = scalar_lea.vmem [#allocation7], 8
        %v2895 = vld [vmem:[%s2894] sm:$0xff]
        %v2897 = vsel %vm2119, %v2895, 0
        %2899 = vmatprep.subr.mxu0 0.0
        %2900 = vmatpush1.msra.mxu0 %v2810
        %2901 = vmatprep.subr.mxu0 0.0
        %2902 = vmatpush1.msra.mxu0 %v2811
        %2903 = vmatprep.subr.mxu0 0.0
        %2904 = vmatpush1.msra.mxu0 0.0
        %2905 = vmatprep.subr.mxu0 0.0
        %2906 = vmatpush1.msra.mxu0 0.0
        %2907 = vmatprep.subr.mxu0 0.0
        %2908 = vmatpush1.msra.mxu0 0.0
        %2909 = vmatprep.subr.mxu0 0.0
        %2910 = vmatpush1.msra.mxu0 0.0
        %2911 = vmatprep.subr.mxu0 0.0
        %2912 = vmatpush1.msra.mxu0 0.0
        %2913 = vmatprep.subr.mxu0 0.0
        %2914 = vmatpush1.msra.mxu0 0.0
        %2915 = vmatprep.subr.mxu0 0.0
        %2916 = vmatpush1.msra.mxu0 0.0
        %2917 = vmatprep.subr.mxu0 0.0
        %2918 = vmatpush1.msra.mxu0 0.0
        %2919 = vmatprep.subr.mxu0 0.0
        %2920 = vmatpush1.msra.mxu0 0.0
        %2921 = vmatprep.subr.mxu0 0.0
        %2922 = vmatpush1.msra.mxu0 0.0
        %2923 = vmatprep.subr.mxu0 0.0
        %2924 = vmatpush1.msra.mxu0 0.0
        %2925 = vmatprep.subr.mxu0 0.0
        %2926 = vmatpush1.msra.mxu0 0.0
        %2927 = vmatprep.subr.mxu0 0.0
        %2928 = vmatpush1.msra.mxu0 0.0
        %2929 = vmatprep.subr.mxu0 0.0
        %2930 = vmatpush1.msra.mxu0 0.0
        %2931 = vmatprep.subr.mxu0 0.0
        %2932 = vmatpush1.msra.mxu0 0.0
        %2933 = vmatprep.subr.mxu0 0.0
        %2934 = vmatpush1.msra.mxu0 0.0
        %2935 = vmatprep.subr.mxu0 0.0
        %2936 = vmatpush1.msra.mxu0 0.0
        %2937 = vmatprep.subr.mxu0 0.0
        %2938 = vmatpush1.msra.mxu0 0.0
        %2939 = vmatprep.subr.mxu0 0.0
        %2940 = vmatpush1.msra.mxu0 0.0
        %2941 = vmatprep.subr.mxu0 0.0
        %2942 = vmatpush1.msra.mxu0 0.0
        %2943 = vmatprep.subr.mxu0 0.0
        %2944 = vmatpush1.msra.mxu0 0.0
        %2945 = vmatprep.subr.mxu0 0.0
        %2946 = vmatpush1.msra.mxu0 0.0
        %2947 = vmatprep.subr.mxu0 0.0
        %2948 = vmatpush1.msra.mxu0 0.0
        %2949 = vmatprep.subr.mxu0 0.0
        %2950 = vmatpush1.msra.mxu0 0.0
        %2951 = vmatprep.subr.mxu0 0.0
        %2952 = vmatpush1.msra.mxu0 0.0
        %2953 = vmatprep.subr.mxu0 0.0
        %2954 = vmatpush1.msra.mxu0 0.0
        %2955 = vmatprep.subr.mxu0 0.0
        %2956 = vmatpush1.msra.mxu0 0.0
        %2957 = vmatprep.subr.mxu0 0.0
        %2958 = vmatpush1.msra.mxu0 0.0
        %2959 = vmatprep.subr.mxu0 0.0
        %2960 = vmatpush1.msra.mxu0 0.0
        %2961 = vmatprep.subr.mxu0 0.0
        %2962 = vmatpush1.msra.mxu0 0.0
        %2963 = vmatprep.mubr.f32.mxu0 0.0
        %2964 = vmatmul.mubr.f32.gmra.mrb[0].mxu0 %v2897
        %v2965 = vpop.f32.mrb[0].mxu0
        %v2966 = vadd.f32 0.0, %v2965
        %v2967 = vpop.f32.mrb[0].mxu0
        %2968 = vdwg.mxu0
        %s2969 = scalar_lea.vmem [#allocation8], 64
        %v2970 = vld [vmem:[%s2969] sm:$0xff]
        %v2971 = vld [vmem:[%s2969 + $0x8] sm:$0xff]
        %v2972 = vld [vmem:[%s2969 + $0x10] sm:$0xff]
        %v2973 = vld [vmem:[%s2969 + $0x18] sm:$0xff]
        %v2974 = vld [vmem:[%s2969 + $0x20] sm:$0xff]
        %v2975 = vld [vmem:[%s2969 + $0x28] sm:$0xff]
        %v2976 = vld [vmem:[%s2969 + $0x30] sm:$0xff]
        %v2977 = vld [vmem:[%s2969 + $0x38] sm:$0xff]
        %v2979 = vsel %vm563, %v2966, 0
        %2981 = vmatprep.subr.mxu0 0.0
        %2982 = vmatpush1.msra.mxu0 %v2970
        %2983 = vmatprep.subr.mxu0 0.0
        %2984 = vmatpush1.msra.mxu0 %v2971
        %2985 = vmatprep.subr.mxu0 0.0
        %2986 = vmatpush1.msra.mxu0 %v2972
        %2987 = vmatprep.subr.mxu0 0.0
        %2988 = vmatpush1.msra.mxu0 %v2973
        %2989 = vmatprep.subr.mxu0 0.0
        %2990 = vmatpush1.msra.mxu0 %v2974
        %2991 = vmatprep.subr.mxu0 0.0
        %2992 = vmatpush1.msra.mxu0 %v2975
        %2993 = vmatprep.subr.mxu0 0.0
        %2994 = vmatpush1.msra.mxu0 %v2976
        %2995 = vmatprep.subr.mxu0 0.0
        %2996 = vmatpush1.msra.mxu0 %v2977
        %2997 = vmatprep.subr.mxu0 0.0
        %2998 = vmatpush1.msra.mxu0 0.0
        %2999 = vmatprep.subr.mxu0 0.0
        %3000 = vmatpush1.msra.mxu0 0.0
        %3001 = vmatprep.subr.mxu0 0.0
        %3002 = vmatpush1.msra.mxu0 0.0
        %3003 = vmatprep.subr.mxu0 0.0
        %3004 = vmatpush1.msra.mxu0 0.0
        %3005 = vmatprep.subr.mxu0 0.0
        %3006 = vmatpush1.msra.mxu0 0.0
        %3007 = vmatprep.subr.mxu0 0.0
        %3008 = vmatpush1.msra.mxu0 0.0
        %3009 = vmatprep.subr.mxu0 0.0
        %3010 = vmatpush1.msra.mxu0 0.0
        %3011 = vmatprep.subr.mxu0 0.0
        %3012 = vmatpush1.msra.mxu0 0.0
        %3013 = vmatprep.subr.mxu0 0.0
        %3014 = vmatpush1.msra.mxu0 0.0
        %3015 = vmatprep.subr.mxu0 0.0
        %3016 = vmatpush1.msra.mxu0 0.0
        %3017 = vmatprep.subr.mxu0 0.0
        %3018 = vmatpush1.msra.mxu0 0.0
        %3019 = vmatprep.subr.mxu0 0.0
        %3020 = vmatpush1.msra.mxu0 0.0
        %3021 = vmatprep.subr.mxu0 0.0
        %3022 = vmatpush1.msra.mxu0 0.0
        %3023 = vmatprep.subr.mxu0 0.0
        %3024 = vmatpush1.msra.mxu0 0.0
        %3025 = vmatprep.subr.mxu0 0.0
        %3026 = vmatpush1.msra.mxu0 0.0
        %3027 = vmatprep.subr.mxu0 0.0
        %3028 = vmatpush1.msra.mxu0 0.0
        %3029 = vmatprep.subr.mxu0 0.0
        %3030 = vmatpush1.msra.mxu0 0.0
        %3031 = vmatprep.subr.mxu0 0.0
        %3032 = vmatpush1.msra.mxu0 0.0
        %3033 = vmatprep.subr.mxu0 0.0
        %3034 = vmatpush1.msra.mxu0 0.0
        %3035 = vmatprep.subr.mxu0 0.0
        %3036 = vmatpush1.msra.mxu0 0.0
        %3037 = vmatprep.subr.mxu0 0.0
        %3038 = vmatpush1.msra.mxu0 0.0
        %3039 = vmatprep.subr.mxu0 0.0
        %3040 = vmatpush1.msra.mxu0 0.0
        %3041 = vmatprep.subr.mxu0 0.0
        %3042 = vmatpush1.msra.mxu0 0.0
        %3043 = vmatprep.subr.mxu0 0.0
        %3044 = vmatpush1.msra.mxu0 0.0
        %3045 = vmatprep.mubr.f32.mxu0 0.0
        %3046 = vmatmul.mubr.f32.gmra.mrb[0].mxu0 %v2979
        %v3047 = vpop.f32.mrb[0].mxu0
        %v3048 = vadd.f32 0.0, %v3047
        %v3049 = vpop.f32.mrb[0].mxu0
        %3050 = vdwg.mxu0
        %v3052 = vsel %vm563, %v2883, 0
        %3054 = vmatprep.subr.mxu0 0.0
        %3055 = vmatpush1.msra.mxu0 %v2886
        %3056 = vmatprep.subr.mxu0 0.0
        %3057 = vmatpush1.msra.mxu0 %v2887
        %3058 = vmatprep.subr.mxu0 0.0
        %3059 = vmatpush1.msra.mxu0 %v2888
        %3060 = vmatprep.subr.mxu0 0.0
        %3061 = vmatpush1.msra.mxu0 %v2889
        %3062 = vmatprep.subr.mxu0 0.0
        %3063 = vmatpush1.msra.mxu0 %v2890
        %3064 = vmatprep.subr.mxu0 0.0
        %3065 = vmatpush1.msra.mxu0 %v2891
        %3066 = vmatprep.subr.mxu0 0.0
        %3067 = vmatpush1.msra.mxu0 %v2892
        %3068 = vmatprep.subr.mxu0 0.0
        %3069 = vmatpush1.msra.mxu0 %v2893
        %3070 = vmatprep.subr.mxu0 0.0
        %3071 = vmatpush1.msra.mxu0 0.0
        %3072 = vmatprep.subr.mxu0 0.0
        %3073 = vmatpush1.msra.mxu0 0.0
        %3074 = vmatprep.subr.mxu0 0.0
        %3075 = vmatpush1.msra.mxu0 0.0
        %3076 = vmatprep.subr.mxu0 0.0
        %3077 = vmatpush1.msra.mxu0 0.0
        %3078 = vmatprep.subr.mxu0 0.0
        %3079 = vmatpush1.msra.mxu0 0.0
        %3080 = vmatprep.subr.mxu0 0.0
        %3081 = vmatpush1.msra.mxu0 0.0
        %3082 = vmatprep.subr.mxu0 0.0
        %3083 = vmatpush1.msra.mxu0 0.0
        %3084 = vmatprep.subr.mxu0 0.0
        %3085 = vmatpush1.msra.mxu0 0.0
        %3086 = vmatprep.subr.mxu0 0.0
        %3087 = vmatpush1.msra.mxu0 0.0
        %3088 = vmatprep.subr.mxu0 0.0
        %3089 = vmatpush1.msra.mxu0 0.0
        %3090 = vmatprep.subr.mxu0 0.0
        %3091 = vmatpush1.msra.mxu0 0.0
        %3092 = vmatprep.subr.mxu0 0.0
        %3093 = vmatpush1.msra.mxu0 0.0
        %3094 = vmatprep.subr.mxu0 0.0
        %3095 = vmatpush1.msra.mxu0 0.0
        %3096 = vmatprep.subr.mxu0 0.0
        %3097 = vmatpush1.msra.mxu0 0.0
        %3098 = vmatprep.subr.mxu0 0.0
        %3099 = vmatpush1.msra.mxu0 0.0
        %3100 = vmatprep.subr.mxu0 0.0
        %3101 = vmatpush1.msra.mxu0 0.0
        %3102 = vmatprep.subr.mxu0 0.0
        %3103 = vmatpush1.msra.mxu0 0.0
        %3104 = vmatprep.subr.mxu0 0.0
        %3105 = vmatpush1.msra.mxu0 0.0
        %3106 = vmatprep.subr.mxu0 0.0
        %3107 = vmatpush1.msra.mxu0 0.0
        %3108 = vmatprep.subr.mxu0 0.0
        %3109 = vmatpush1.msra.mxu0 0.0
        %3110 = vmatprep.subr.mxu0 0.0
        %3111 = vmatpush1.msra.mxu0 0.0
        %3112 = vmatprep.subr.mxu0 0.0
        %3113 = vmatpush1.msra.mxu0 0.0
        %3114 = vmatprep.subr.mxu0 0.0
        %3115 = vmatpush1.msra.mxu0 0.0
        %3116 = vmatprep.subr.mxu0 0.0
        %3117 = vmatpush1.msra.mxu0 0.0
        %3118 = vmatprep.mubr.f32.mxu0 0.0
        %3119 = vmatmul.mubr.f32.gmra.mrb[0].mxu0 %v3052
        %v3120 = vpop.f32.mrb[0].mxu0
        %v3121 = vadd.f32 %v3048, %v3120
        %v3122 = vpop.f32.mrb[0].mxu0
        %3123 = vdwg.mxu0
        %s3124 = scalar_lea.vmem [#allocation7], 16
        %v3125 = vld [vmem:[%s3124] sm:$0xff]
        %v3127 = vsel %vm2119, %v3125, 0
        %3129 = vmatprep.subr.mxu0 0.0
        %3130 = vmatpush1.msra.mxu0 %v2810
        %3131 = vmatprep.subr.mxu0 0.0
        %3132 = vmatpush1.msra.mxu0 %v2811
        %3133 = vmatprep.subr.mxu0 0.0
        %3134 = vmatpush1.msra.mxu0 0.0
        %3135 = vmatprep.subr.mxu0 0.0
        %3136 = vmatpush1.msra.mxu0 0.0
        %3137 = vmatprep.subr.mxu0 0.0
        %3138 = vmatpush1.msra.mxu0 0.0
        %3139 = vmatprep.subr.mxu0 0.0
        %3140 = vmatpush1.msra.mxu0 0.0
        %3141 = vmatprep.subr.mxu0 0.0
        %3142 = vmatpush1.msra.mxu0 0.0
        %3143 = vmatprep.subr.mxu0 0.0
        %3144 = vmatpush1.msra.mxu0 0.0
        %3145 = vmatprep.subr.mxu0 0.0
        %3146 = vmatpush1.msra.mxu0 0.0
        %3147 = vmatprep.subr.mxu0 0.0
        %3148 = vmatpush1.msra.mxu0 0.0
        %3149 = vmatprep.subr.mxu0 0.0
        %3150 = vmatpush1.msra.mxu0 0.0
        %3151 = vmatprep.subr.mxu0 0.0
        %3152 = vmatpush1.msra.mxu0 0.0
        %3153 = vmatprep.subr.mxu0 0.0
        %3154 = vmatpush1.msra.mxu0 0.0
        %3155 = vmatprep.subr.mxu0 0.0
        %3156 = vmatpush1.msra.mxu0 0.0
        %3157 = vmatprep.subr.mxu0 0.0
        %3158 = vmatpush1.msra.mxu0 0.0
        %3159 = vmatprep.subr.mxu0 0.0
        %3160 = vmatpush1.msra.mxu0 0.0
        %3161 = vmatprep.subr.mxu0 0.0
        %3162 = vmatpush1.msra.mxu0 0.0
        %3163 = vmatprep.subr.mxu0 0.0
        %3164 = vmatpush1.msra.mxu0 0.0
        %3165 = vmatprep.subr.mxu0 0.0
        %3166 = vmatpush1.msra.mxu0 0.0
        %3167 = vmatprep.subr.mxu0 0.0
        %3168 = vmatpush1.msra.mxu0 0.0
        %3169 = vmatprep.subr.mxu0 0.0
        %3170 = vmatpush1.msra.mxu0 0.0
        %3171 = vmatprep.subr.mxu0 0.0
        %3172 = vmatpush1.msra.mxu0 0.0
        %3173 = vmatprep.subr.mxu0 0.0
        %3174 = vmatpush1.msra.mxu0 0.0
        %3175 = vmatprep.subr.mxu0 0.0
        %3176 = vmatpush1.msra.mxu0 0.0
        %3177 = vmatprep.subr.mxu0 0.0
        %3178 = vmatpush1.msra.mxu0 0.0
        %3179 = vmatprep.subr.mxu0 0.0
        %3180 = vmatpush1.msra.mxu0 0.0
        %3181 = vmatprep.subr.mxu0 0.0
        %3182 = vmatpush1.msra.mxu0 0.0
        %3183 = vmatprep.subr.mxu0 0.0
        %3184 = vmatpush1.msra.mxu0 0.0
        %3185 = vmatprep.subr.mxu0 0.0
        %3186 = vmatpush1.msra.mxu0 0.0
        %3187 = vmatprep.subr.mxu0 0.0
        %3188 = vmatpush1.msra.mxu0 0.0
        %3189 = vmatprep.subr.mxu0 0.0
        %3190 = vmatpush1.msra.mxu0 0.0
        %3191 = vmatprep.subr.mxu0 0.0
        %3192 = vmatpush1.msra.mxu0 0.0
        %3193 = vmatprep.mubr.f32.mxu0 0.0
        %3194 = vmatmul.mubr.f32.gmra.mrb[0].mxu0 %v3127
        %v3195 = vpop.f32.mrb[0].mxu0
        %v3196 = vadd.f32 0.0, %v3195
        %v3197 = vpop.f32.mrb[0].mxu0
        %3198 = vdwg.mxu0
        %s3199 = scalar_lea.vmem [#allocation8], 128
        %v3200 = vld [vmem:[%s3199] sm:$0xff]
        %v3201 = vld [vmem:[%s3199 + $0x8] sm:$0xff]
        %v3202 = vld [vmem:[%s3199 + $0x10] sm:$0xff]
        %v3203 = vld [vmem:[%s3199 + $0x18] sm:$0xff]
        %v3204 = vld [vmem:[%s3199 + $0x20] sm:$0xff]
        %v3205 = vld [vmem:[%s3199 + $0x28] sm:$0xff]
        %v3206 = vld [vmem:[%s3199 + $0x30] sm:$0xff]
        %v3207 = vld [vmem:[%s3199 + $0x38] sm:$0xff]
        %v3209 = vsel %vm563, %v3196, 0
        %3211 = vmatprep.subr.mxu0 0.0
        %3212 = vmatpush1.msra.mxu0 %v3200
        %3213 = vmatprep.subr.mxu0 0.0
        %3214 = vmatpush1.msra.mxu0 %v3201
        %3215 = vmatprep.subr.mxu0 0.0
        %3216 = vmatpush1.msra.mxu0 %v3202
        %3217 = vmatprep.subr.mxu0 0.0
        %3218 = vmatpush1.msra.mxu0 %v3203
        %3219 = vmatprep.subr.mxu0 0.0
        %3220 = vmatpush1.msra.mxu0 %v3204
        %3221 = vmatprep.subr.mxu0 0.0
        %3222 = vmatpush1.msra.mxu0 %v3205
        %3223 = vmatprep.subr.mxu0 0.0
        %3224 = vmatpush1.msra.mxu0 %v3206
        %3225 = vmatprep.subr.mxu0 0.0
        %3226 = vmatpush1.msra.mxu0 %v3207
        %3227 = vmatprep.subr.mxu0 0.0
        %3228 = vmatpush1.msra.mxu0 0.0
        %3229 = vmatprep.subr.mxu0 0.0
        %3230 = vmatpush1.msra.mxu0 0.0
        %3231 = vmatprep.subr.mxu0 0.0
        %3232 = vmatpush1.msra.mxu0 0.0
        %3233 = vmatprep.subr.mxu0 0.0
        %3234 = vmatpush1.msra.mxu0 0.0
        %3235 = vmatprep.subr.mxu0 0.0
        %3236 = vmatpush1.msra.mxu0 0.0
        %3237 = vmatprep.subr.mxu0 0.0
        %3238 = vmatpush1.msra.mxu0 0.0
        %3239 = vmatprep.subr.mxu0 0.0
        %3240 = vmatpush1.msra.mxu0 0.0
        %3241 = vmatprep.subr.mxu0 0.0
        %3242 = vmatpush1.msra.mxu0 0.0
        %3243 = vmatprep.subr.mxu0 0.0
        %3244 = vmatpush1.msra.mxu0 0.0
        %3245 = vmatprep.subr.mxu0 0.0
        %3246 = vmatpush1.msra.mxu0 0.0
        %3247 = vmatprep.subr.mxu0 0.0
        %3248 = vmatpush1.msra.mxu0 0.0
        %3249 = vmatprep.subr.mxu0 0.0
        %3250 = vmatpush1.msra.mxu0 0.0
        %3251 = vmatprep.subr.mxu0 0.0
        %3252 = vmatpush1.msra.mxu0 0.0
        %3253 = vmatprep.subr.mxu0 0.0
        %3254 = vmatpush1.msra.mxu0 0.0
        %3255 = vmatprep.subr.mxu0 0.0
        %3256 = vmatpush1.msra.mxu0 0.0
        %3257 = vmatprep.subr.mxu0 0.0
        %3258 = vmatpush1.msra.mxu0 0.0
        %3259 = vmatprep.subr.mxu0 0.0
        %3260 = vmatpush1.msra.mxu0 0.0
        %3261 = vmatprep.subr.mxu0 0.0
        %3262 = vmatpush1.msra.mxu0 0.0
        %3263 = vmatprep.subr.mxu0 0.0
        %3264 = vmatpush1.msra.mxu0 0.0
        %3265 = vmatprep.subr.mxu0 0.0
        %3266 = vmatpush1.msra.mxu0 0.0
        %3267 = vmatprep.subr.mxu0 0.0
        %3268 = vmatpush1.msra.mxu0 0.0
        %3269 = vmatprep.subr.mxu0 0.0
        %3270 = vmatpush1.msra.mxu0 0.0
        %3271 = vmatprep.subr.mxu0 0.0
        %3272 = vmatpush1.msra.mxu0 0.0
        %3273 = vmatprep.subr.mxu0 0.0
        %3274 = vmatpush1.msra.mxu0 0.0
        %3275 = vmatprep.mubr.f32.mxu0 0.0
        %3276 = vmatmul.mubr.f32.gmra.mrb[0].mxu0 %v3209
        %v3277 = vpop.f32.mrb[0].mxu0
        %v3278 = vadd.f32 0.0, %v3277
        %v3279 = vpop.f32.mrb[0].mxu0
        %3280 = vdwg.mxu0
        %v3281 = vadd.f32 %v3121, %v3278
        %s3282 = scalar_lea.vmem [#allocation7], 24
        %v3283 = vld [vmem:[%s3282] sm:$0xff]
        %v3285 = vsel %vm2119, %v3283, 0
        %3287 = vmatprep.subr.mxu0 0.0
        %3288 = vmatpush1.msra.mxu0 %v2810
        %3289 = vmatprep.subr.mxu0 0.0
        %3290 = vmatpush1.msra.mxu0 %v2811
        %3291 = vmatprep.subr.mxu0 0.0
        %3292 = vmatpush1.msra.mxu0 0.0
        %3293 = vmatprep.subr.mxu0 0.0
        %3294 = vmatpush1.msra.mxu0 0.0
        %3295 = vmatprep.subr.mxu0 0.0
        %3296 = vmatpush1.msra.mxu0 0.0
        %3297 = vmatprep.subr.mxu0 0.0
        %3298 = vmatpush1.msra.mxu0 0.0
        %3299 = vmatprep.subr.mxu0 0.0
        %3300 = vmatpush1.msra.mxu0 0.0
        %3301 = vmatprep.subr.mxu0 0.0
        %3302 = vmatpush1.msra.mxu0 0.0
        %3303 = vmatprep.subr.mxu0 0.0
        %3304 = vmatpush1.msra.mxu0 0.0
        %3305 = vmatprep.subr.mxu0 0.0
        %3306 = vmatpush1.msra.mxu0 0.0
        %3307 = vmatprep.subr.mxu0 0.0
        %3308 = vmatpush1.msra.mxu0 0.0
        %3309 = vmatprep.subr.mxu0 0.0
        %3310 = vmatpush1.msra.mxu0 0.0
        %3311 = vmatprep.subr.mxu0 0.0
        %3312 = vmatpush1.msra.mxu0 0.0
        %3313 = vmatprep.subr.mxu0 0.0
        %3314 = vmatpush1.msra.mxu0 0.0
        %3315 = vmatprep.subr.mxu0 0.0
        %3316 = vmatpush1.msra.mxu0 0.0
        %3317 = vmatprep.subr.mxu0 0.0
        %3318 = vmatpush1.msra.mxu0 0.0
        %3319 = vmatprep.subr.mxu0 0.0
        %3320 = vmatpush1.msra.mxu0 0.0
        %3321 = vmatprep.subr.mxu0 0.0
        %3322 = vmatpush1.msra.mxu0 0.0
        %3323 = vmatprep.subr.mxu0 0.0
        %3324 = vmatpush1.msra.mxu0 0.0
        %3325 = vmatprep.subr.mxu0 0.0
        %3326 = vmatpush1.msra.mxu0 0.0
        %3327 = vmatprep.subr.mxu0 0.0
        %3328 = vmatpush1.msra.mxu0 0.0
        %3329 = vmatprep.subr.mxu0 0.0
        %3330 = vmatpush1.msra.mxu0 0.0
        %3331 = vmatprep.subr.mxu0 0.0
        %3332 = vmatpush1.msra.mxu0 0.0
        %3333 = vmatprep.subr.mxu0 0.0
        %3334 = vmatpush1.msra.mxu0 0.0
        %3335 = vmatprep.subr.mxu0 0.0
        %3336 = vmatpush1.msra.mxu0 0.0
        %3337 = vmatprep.subr.mxu0 0.0
        %3338 = vmatpush1.msra.mxu0 0.0
        %3339 = vmatprep.subr.mxu0 0.0
        %3340 = vmatpush1.msra.mxu0 0.0
        %3341 = vmatprep.subr.mxu0 0.0
        %3342 = vmatpush1.msra.mxu0 0.0
        %3343 = vmatprep.subr.mxu0 0.0
        %3344 = vmatpush1.msra.mxu0 0.0
        %3345 = vmatprep.subr.mxu0 0.0
        %3346 = vmatpush1.msra.mxu0 0.0
        %3347 = vmatprep.subr.mxu0 0.0
        %3348 = vmatpush1.msra.mxu0 0.0
        %3349 = vmatprep.subr.mxu0 0.0
        %3350 = vmatpush1.msra.mxu0 0.0
        %3351 = vmatprep.mubr.f32.mxu0 0.0
        %3352 = vmatmul.mubr.f32.gmra.mrb[0].mxu0 %v3285
        %v3353 = vpop.f32.mrb[0].mxu0
        %v3354 = vadd.f32 0.0, %v3353
        %v3355 = vpop.f32.mrb[0].mxu0
        %3356 = vdwg.mxu0
        %s3357 = scalar_lea.vmem [#allocation8], 192
        %v3358 = vld [vmem:[%s3357] sm:$0xff]
        %v3359 = vld [vmem:[%s3357 + $0x8] sm:$0xff]
        %v3360 = vld [vmem:[%s3357 + $0x10] sm:$0xff]
        %v3361 = vld [vmem:[%s3357 + $0x18] sm:$0xff]
        %v3362 = vld [vmem:[%s3357 + $0x20] sm:$0xff]
        %v3363 = vld [vmem:[%s3357 + $0x28] sm:$0xff]
        %v3364 = vld [vmem:[%s3357 + $0x30] sm:$0xff]
        %v3365 = vld [vmem:[%s3357 + $0x38] sm:$0xff]
        %v3367 = vsel %vm563, %v3354, 0
        %3369 = vmatprep.subr.mxu0 0.0
        %3370 = vmatpush1.msra.mxu0 %v3358
        %3371 = vmatprep.subr.mxu0 0.0
        %3372 = vmatpush1.msra.mxu0 %v3359
        %3373 = vmatprep.subr.mxu0 0.0
        %3374 = vmatpush1.msra.mxu0 %v3360
        %3375 = vmatprep.subr.mxu0 0.0
        %3376 = vmatpush1.msra.mxu0 %v3361
        %3377 = vmatprep.subr.mxu0 0.0
        %3378 = vmatpush1.msra.mxu0 %v3362
        %3379 = vmatprep.subr.mxu0 0.0
        %3380 = vmatpush1.msra.mxu0 %v3363
        %3381 = vmatprep.subr.mxu0 0.0
        %3382 = vmatpush1.msra.mxu0 %v3364
        %3383 = vmatprep.subr.mxu0 0.0
        %3384 = vmatpush1.msra.mxu0 %v3365
        %3385 = vmatprep.subr.mxu0 0.0
        %3386 = vmatpush1.msra.mxu0 0.0
        %3387 = vmatprep.subr.mxu0 0.0
        %3388 = vmatpush1.msra.mxu0 0.0
        %3389 = vmatprep.subr.mxu0 0.0
        %3390 = vmatpush1.msra.mxu0 0.0
        %3391 = vmatprep.subr.mxu0 0.0
        %3392 = vmatpush1.msra.mxu0 0.0
        %3393 = vmatprep.subr.mxu0 0.0
        %3394 = vmatpush1.msra.mxu0 0.0
        %3395 = vmatprep.subr.mxu0 0.0
        %3396 = vmatpush1.msra.mxu0 0.0
        %3397 = vmatprep.subr.mxu0 0.0
        %3398 = vmatpush1.msra.mxu0 0.0
        %3399 = vmatprep.subr.mxu0 0.0
        %3400 = vmatpush1.msra.mxu0 0.0
        %3401 = vmatprep.subr.mxu0 0.0
        %3402 = vmatpush1.msra.mxu0 0.0
        %3403 = vmatprep.subr.mxu0 0.0
        %3404 = vmatpush1.msra.mxu0 0.0
        %3405 = vmatprep.subr.mxu0 0.0
        %3406 = vmatpush1.msra.mxu0 0.0
        %3407 = vmatprep.subr.mxu0 0.0
        %3408 = vmatpush1.msra.mxu0 0.0
        %3409 = vmatprep.subr.mxu0 0.0
        %3410 = vmatpush1.msra.mxu0 0.0
        %3411 = vmatprep.subr.mxu0 0.0
        %3412 = vmatpush1.msra.mxu0 0.0
        %3413 = vmatprep.subr.mxu0 0.0
        %3414 = vmatpush1.msra.mxu0 0.0
        %3415 = vmatprep.subr.mxu0 0.0
        %3416 = vmatpush1.msra.mxu0 0.0
        %3417 = vmatprep.subr.mxu0 0.0
        %3418 = vmatpush1.msra.mxu0 0.0
        %3419 = vmatprep.subr.mxu0 0.0
        %3420 = vmatpush1.msra.mxu0 0.0
        %3421 = vmatprep.subr.mxu0 0.0
        %3422 = vmatpush1.msra.mxu0 0.0
        %3423 = vmatprep.subr.mxu0 0.0
        %3424 = vmatpush1.msra.mxu0 0.0
        %3425 = vmatprep.subr.mxu0 0.0
        %3426 = vmatpush1.msra.mxu0 0.0
        %3427 = vmatprep.subr.mxu0 0.0
        %3428 = vmatpush1.msra.mxu0 0.0
        %3429 = vmatprep.subr.mxu0 0.0
        %3430 = vmatpush1.msra.mxu0 0.0
        %3431 = vmatprep.subr.mxu0 0.0
        %3432 = vmatpush1.msra.mxu0 0.0
        %3433 = vmatprep.mubr.f32.mxu0 0.0
        %3434 = vmatmul.mubr.f32.gmra.mrb[0].mxu0 %v3367
        %v3435 = vpop.f32.mrb[0].mxu0
        %v3436 = vadd.f32 0.0, %v3435
        %v3437 = vpop.f32.mrb[0].mxu0
        %3438 = vdwg.mxu0
        %v3439 = vadd.f32 %v3281, %v3436
        %v3440 = vld [vmem:[%s9] sm:$0x1]
        %v3442 = vlaneseq
        %v3443 = vshrl.u32 %v3442, 7
        %v3444 = vsub.s32 0, %v3443
        %v3445 = vrot.slane %v3440, %v3444
        %v3447 = vadd.f32 %v3439, %v3445
        %v3448 = vmax.f32 %v3447, 0.0
        %v3449 = vld [vmem:[#allocation10] sm:$0xff]
        %v3450 = vld [vmem:[#allocation10 + $0x8] sm:$0xff]
        %v3451 = vld [vmem:[#allocation10 + $0x10] sm:$0xff]
        %v3452 = vld [vmem:[#allocation10 + $0x18] sm:$0xff]
        %v3453 = vld [vmem:[#allocation10 + $0x20] sm:$0xff]
        %v3454 = vld [vmem:[#allocation10 + $0x28] sm:$0xff]
        %v3455 = vld [vmem:[#allocation10 + $0x30] sm:$0xff]
        %v3456 = vld [vmem:[#allocation10 + $0x38] sm:$0xff]
        %v3457 = vld [vmem:[#allocation10 + $0x40] sm:$0xff]
        %v3458 = vld [vmem:[#allocation10 + $0x48] sm:$0xff]
        %v3459 = vld [vmem:[#allocation10 + $0x50] sm:$0xff]
        %v3460 = vld [vmem:[#allocation10 + $0x58] sm:$0xff]
        %v3461 = vld [vmem:[#allocation10 + $0x60] sm:$0xff]
        %v3462 = vld [vmem:[#allocation10 + $0x68] sm:$0xff]
        %v3463 = vld [vmem:[#allocation10 + $0x70] sm:$0xff]
        %v3464 = vld [vmem:[#allocation10 + $0x78] sm:$0xff]
        %s3465 = scalar_lea.vmem [#allocation10], 128
        %v3466 = vld [vmem:[%s3465] sm:$0xff]
        %v3467 = vld [vmem:[%s3465 + $0x8] sm:$0xff]
        %v3468 = vld [vmem:[%s3465 + $0x10] sm:$0xff]
        %v3469 = vld [vmem:[%s3465 + $0x18] sm:$0xff]
        %v3470 = vld [vmem:[%s3465 + $0x20] sm:$0xff]
        %v3471 = vld [vmem:[%s3465 + $0x28] sm:$0xff]
        %v3472 = vld [vmem:[%s3465 + $0x30] sm:$0xff]
        %v3473 = vld [vmem:[%s3465 + $0x38] sm:$0xff]
        %v3474 = vld [vmem:[%s3465 + $0x40] sm:$0xff]
        %v3475 = vld [vmem:[%s3465 + $0x48] sm:$0xff]
        %v3476 = vld [vmem:[%s3465 + $0x50] sm:$0xff]
        %v3477 = vld [vmem:[%s3465 + $0x58] sm:$0xff]
        %v3478 = vld [vmem:[%s3465 + $0x60] sm:$0xff]
        %v3479 = vld [vmem:[%s3465 + $0x68] sm:$0xff]
        %v3480 = vld [vmem:[%s3465 + $0x70] sm:$0xff]
        %v3481 = vld [vmem:[%s3465 + $0x78] sm:$0xff]
        %v3483 = vrot.slane %v3448, 1
        %v3484 = vsel %vm563, %v3483, 0
        %3486 = vmatprep.subr.mxu0 %v3467
        %3487 = vmatpush1.msra.mxu0 %v3466
        %3488 = vmatprep.subr.mxu0 %v3469
        %3489 = vmatpush1.msra.mxu0 %v3468
        %3490 = vmatprep.subr.mxu0 %v3471
        %3491 = vmatpush1.msra.mxu0 %v3470
        %3492 = vmatprep.subr.mxu0 %v3473
        %3493 = vmatpush1.msra.mxu0 %v3472
        %3494 = vmatprep.subr.mxu0 %v3475
        %3495 = vmatpush1.msra.mxu0 %v3474
        %3496 = vmatprep.subr.mxu0 %v3477
        %3497 = vmatpush1.msra.mxu0 %v3476
        %3498 = vmatprep.subr.mxu0 %v3479
        %3499 = vmatpush1.msra.mxu0 %v3478
        %3500 = vmatprep.subr.mxu0 %v3481
        %3501 = vmatpush1.msra.mxu0 %v3480
        %3502 = vmatprep.subr.mxu0 0.0
        %3503 = vmatpush1.msra.mxu0 0.0
        %3504 = vmatprep.subr.mxu0 0.0
        %3505 = vmatpush1.msra.mxu0 0.0
        %3506 = vmatprep.subr.mxu0 0.0
        %3507 = vmatpush1.msra.mxu0 0.0
        %3508 = vmatprep.subr.mxu0 0.0
        %3509 = vmatpush1.msra.mxu0 0.0
        %3510 = vmatprep.subr.mxu0 0.0
        %3511 = vmatpush1.msra.mxu0 0.0
        %3512 = vmatprep.subr.mxu0 0.0
        %3513 = vmatpush1.msra.mxu0 0.0
        %3514 = vmatprep.subr.mxu0 0.0
        %3515 = vmatpush1.msra.mxu0 0.0
        %3516 = vmatprep.subr.mxu0 0.0
        %3517 = vmatpush1.msra.mxu0 0.0
        %3518 = vmatprep.subr.mxu0 0.0
        %3519 = vmatpush1.msra.mxu0 0.0
        %3520 = vmatprep.subr.mxu0 0.0
        %3521 = vmatpush1.msra.mxu0 0.0
        %3522 = vmatprep.subr.mxu0 0.0
        %3523 = vmatpush1.msra.mxu0 0.0
        %3524 = vmatprep.subr.mxu0 0.0
        %3525 = vmatpush1.msra.mxu0 0.0
        %3526 = vmatprep.subr.mxu0 0.0
        %3527 = vmatpush1.msra.mxu0 0.0
        %3528 = vmatprep.subr.mxu0 0.0
        %3529 = vmatpush1.msra.mxu0 0.0
        %3530 = vmatprep.subr.mxu0 0.0
        %3531 = vmatpush1.msra.mxu0 0.0
        %3532 = vmatprep.subr.mxu0 0.0
        %3533 = vmatpush1.msra.mxu0 0.0
        %3534 = vmatprep.subr.mxu0 0.0
        %3535 = vmatpush1.msra.mxu0 0.0
        %3536 = vmatprep.subr.mxu0 0.0
        %3537 = vmatpush1.msra.mxu0 0.0
        %3538 = vmatprep.subr.mxu0 0.0
        %3539 = vmatpush1.msra.mxu0 0.0
        %3540 = vmatprep.subr.mxu0 0.0
        %3541 = vmatpush1.msra.mxu0 0.0
        %3542 = vmatprep.subr.mxu0 0.0
        %3543 = vmatpush1.msra.mxu0 0.0
        %3544 = vmatprep.subr.mxu0 0.0
        %3545 = vmatpush1.msra.mxu0 0.0
        %3546 = vmatprep.subr.mxu0 0.0
        %3547 = vmatpush1.msra.mxu0 0.0
        %3548 = vmatprep.subr.mxu0 0.0
        %3549 = vmatpush1.msra.mxu0 0.0
        %3550 = vmatprep.mubr.f32.mxu0 0.0
        %3551 = vmatmul.mubr.f32.gmra.mrb[0].mxu0 %v3484
        %v3552 = vpop.f32.mrb[0].mxu0
        %v3553 = vadd.f32 0.0, %v3552
        %v3554 = vpop.f32.mrb[0].mxu0
        %v3555 = vadd.f32 0.0, %v3554
        %3556 = vdwg.mxu0
        %v3557 = vsel %vm563, %v3448, 0
        %3559 = vmatprep.subr.mxu0 %v3450
        %3560 = vmatpush1.msra.mxu0 %v3449
        %3561 = vmatprep.subr.mxu0 %v3452
        %3562 = vmatpush1.msra.mxu0 %v3451
        %3563 = vmatprep.subr.mxu0 %v3454
        %3564 = vmatpush1.msra.mxu0 %v3453
        %3565 = vmatprep.subr.mxu0 %v3456
        %3566 = vmatpush1.msra.mxu0 %v3455
        %3567 = vmatprep.subr.mxu0 %v3458
        %3568 = vmatpush1.msra.mxu0 %v3457
        %3569 = vmatprep.subr.mxu0 %v3460
        %3570 = vmatpush1.msra.mxu0 %v3459
        %3571 = vmatprep.subr.mxu0 %v3462
        %3572 = vmatpush1.msra.mxu0 %v3461
        %3573 = vmatprep.subr.mxu0 %v3464
        %3574 = vmatpush1.msra.mxu0 %v3463
        %3575 = vmatprep.subr.mxu0 0.0
        %3576 = vmatpush1.msra.mxu0 0.0
        %3577 = vmatprep.subr.mxu0 0.0
        %3578 = vmatpush1.msra.mxu0 0.0
        %3579 = vmatprep.subr.mxu0 0.0
        %3580 = vmatpush1.msra.mxu0 0.0
        %3581 = vmatprep.subr.mxu0 0.0
        %3582 = vmatpush1.msra.mxu0 0.0
        %3583 = vmatprep.subr.mxu0 0.0
        %3584 = vmatpush1.msra.mxu0 0.0
        %3585 = vmatprep.subr.mxu0 0.0
        %3586 = vmatpush1.msra.mxu0 0.0
        %3587 = vmatprep.subr.mxu0 0.0
        %3588 = vmatpush1.msra.mxu0 0.0
        %3589 = vmatprep.subr.mxu0 0.0
        %3590 = vmatpush1.msra.mxu0 0.0
        %3591 = vmatprep.subr.mxu0 0.0
        %3592 = vmatpush1.msra.mxu0 0.0
        %3593 = vmatprep.subr.mxu0 0.0
        %3594 = vmatpush1.msra.mxu0 0.0
        %3595 = vmatprep.subr.mxu0 0.0
        %3596 = vmatpush1.msra.mxu0 0.0
        %3597 = vmatprep.subr.mxu0 0.0
        %3598 = vmatpush1.msra.mxu0 0.0
        %3599 = vmatprep.subr.mxu0 0.0
        %3600 = vmatpush1.msra.mxu0 0.0
        %3601 = vmatprep.subr.mxu0 0.0
        %3602 = vmatpush1.msra.mxu0 0.0
        %3603 = vmatprep.subr.mxu0 0.0
        %3604 = vmatpush1.msra.mxu0 0.0
        %3605 = vmatprep.subr.mxu0 0.0
        %3606 = vmatpush1.msra.mxu0 0.0
        %3607 = vmatprep.subr.mxu0 0.0
        %3608 = vmatpush1.msra.mxu0 0.0
        %3609 = vmatprep.subr.mxu0 0.0
        %3610 = vmatpush1.msra.mxu0 0.0
        %3611 = vmatprep.subr.mxu0 0.0
        %3612 = vmatpush1.msra.mxu0 0.0
        %3613 = vmatprep.subr.mxu0 0.0
        %3614 = vmatpush1.msra.mxu0 0.0
        %3615 = vmatprep.subr.mxu0 0.0
        %3616 = vmatpush1.msra.mxu0 0.0
        %3617 = vmatprep.subr.mxu0 0.0
        %3618 = vmatpush1.msra.mxu0 0.0
        %3619 = vmatprep.subr.mxu0 0.0
        %3620 = vmatpush1.msra.mxu0 0.0
        %3621 = vmatprep.subr.mxu0 0.0
        %3622 = vmatpush1.msra.mxu0 0.0
        %3623 = vmatprep.mubr.f32.mxu0 0.0
        %3624 = vmatmul.mubr.f32.gmra.mrb[0].mxu0 %v3557
        %v3625 = vpop.f32.mrb[0].mxu0
        %v3626 = vadd.f32 %v3553, %v3625
        %v3627 = vpop.f32.mrb[0].mxu0
        %v3628 = vadd.f32 %v3555, %v3627
        %3629 = vdwg.mxu0
        %s3630 = scalar_lea.vmem [#allocation10], 256
        %v3631 = vld [vmem:[%s3630] sm:$0xff]
        %v3632 = vld [vmem:[%s3630 + $0x8] sm:$0xff]
        %v3633 = vld [vmem:[%s3630 + $0x10] sm:$0xff]
        %v3634 = vld [vmem:[%s3630 + $0x18] sm:$0xff]
        %v3635 = vld [vmem:[%s3630 + $0x20] sm:$0xff]
        %v3636 = vld [vmem:[%s3630 + $0x28] sm:$0xff]
        %v3637 = vld [vmem:[%s3630 + $0x30] sm:$0xff]
        %v3638 = vld [vmem:[%s3630 + $0x38] sm:$0xff]
        %v3639 = vld [vmem:[%s3630 + $0x40] sm:$0xff]
        %v3640 = vld [vmem:[%s3630 + $0x48] sm:$0xff]
        %v3641 = vld [vmem:[%s3630 + $0x50] sm:$0xff]
        %v3642 = vld [vmem:[%s3630 + $0x58] sm:$0xff]
        %v3643 = vld [vmem:[%s3630 + $0x60] sm:$0xff]
        %v3644 = vld [vmem:[%s3630 + $0x68] sm:$0xff]
        %v3645 = vld [vmem:[%s3630 + $0x70] sm:$0xff]
        %v3646 = vld [vmem:[%s3630 + $0x78] sm:$0xff]
        %v3647 = vrot.slane %v3448, 2
        %v3648 = vsel %vm563, %v3647, 0
        %3650 = vmatprep.subr.mxu0 %v3632
        %3651 = vmatpush1.msra.mxu0 %v3631
        %3652 = vmatprep.subr.mxu0 %v3634
        %3653 = vmatpush1.msra.mxu0 %v3633
        %3654 = vmatprep.subr.mxu0 %v3636
        %3655 = vmatpush1.msra.mxu0 %v3635
        %3656 = vmatprep.subr.mxu0 %v3638
        %3657 = vmatpush1.msra.mxu0 %v3637
        %3658 = vmatprep.subr.mxu0 %v3640
        %3659 = vmatpush1.msra.mxu0 %v3639
        %3660 = vmatprep.subr.mxu0 %v3642
        %3661 = vmatpush1.msra.mxu0 %v3641
        %3662 = vmatprep.subr.mxu0 %v3644
        %3663 = vmatpush1.msra.mxu0 %v3643
        %3664 = vmatprep.subr.mxu0 %v3646
        %3665 = vmatpush1.msra.mxu0 %v3645
        %3666 = vmatprep.subr.mxu0 0.0
        %3667 = vmatpush1.msra.mxu0 0.0
        %3668 = vmatprep.subr.mxu0 0.0
        %3669 = vmatpush1.msra.mxu0 0.0
        %3670 = vmatprep.subr.mxu0 0.0
        %3671 = vmatpush1.msra.mxu0 0.0
        %3672 = vmatprep.subr.mxu0 0.0
        %3673 = vmatpush1.msra.mxu0 0.0
        %3674 = vmatprep.subr.mxu0 0.0
        %3675 = vmatpush1.msra.mxu0 0.0
        %3676 = vmatprep.subr.mxu0 0.0
        %3677 = vmatpush1.msra.mxu0 0.0
        %3678 = vmatprep.subr.mxu0 0.0
        %3679 = vmatpush1.msra.mxu0 0.0
        %3680 = vmatprep.subr.mxu0 0.0
        %3681 = vmatpush1.msra.mxu0 0.0
        %3682 = vmatprep.subr.mxu0 0.0
        %3683 = vmatpush1.msra.mxu0 0.0
        %3684 = vmatprep.subr.mxu0 0.0
        %3685 = vmatpush1.msra.mxu0 0.0
        %3686 = vmatprep.subr.mxu0 0.0
        %3687 = vmatpush1.msra.mxu0 0.0
        %3688 = vmatprep.subr.mxu0 0.0
        %3689 = vmatpush1.msra.mxu0 0.0
        %3690 = vmatprep.subr.mxu0 0.0
        %3691 = vmatpush1.msra.mxu0 0.0
        %3692 = vmatprep.subr.mxu0 0.0
        %3693 = vmatpush1.msra.mxu0 0.0
        %3694 = vmatprep.subr.mxu0 0.0
        %3695 = vmatpush1.msra.mxu0 0.0
        %3696 = vmatprep.subr.mxu0 0.0
        %3697 = vmatpush1.msra.mxu0 0.0
        %3698 = vmatprep.subr.mxu0 0.0
        %3699 = vmatpush1.msra.mxu0 0.0
        %3700 = vmatprep.subr.mxu0 0.0
        %3701 = vmatpush1.msra.mxu0 0.0
        %3702 = vmatprep.subr.mxu0 0.0
        %3703 = vmatpush1.msra.mxu0 0.0
        %3704 = vmatprep.subr.mxu0 0.0
        %3705 = vmatpush1.msra.mxu0 0.0
        %3706 = vmatprep.subr.mxu0 0.0
        %3707 = vmatpush1.msra.mxu0 0.0
        %3708 = vmatprep.subr.mxu0 0.0
        %3709 = vmatpush1.msra.mxu0 0.0
        %3710 = vmatprep.subr.mxu0 0.0
        %3711 = vmatpush1.msra.mxu0 0.0
        %3712 = vmatprep.subr.mxu0 0.0
        %3713 = vmatpush1.msra.mxu0 0.0
        %3714 = vmatprep.mubr.f32.mxu0 0.0
        %3715 = vmatmul.mubr.f32.gmra.mrb[0].mxu0 %v3648
        %v3716 = vpop.f32.mrb[0].mxu0
        %v3717 = vadd.f32 0.0, %v3716
        %v3718 = vpop.f32.mrb[0].mxu0
        %v3719 = vadd.f32 0.0, %v3718
        %3720 = vdwg.mxu0
        %v3721 = vadd.f32 %v3626, %v3717
        %v3722 = vadd.f32 %v3628, %v3719
        %s3723 = scalar_lea.vmem [#allocation10], 384
        %v3724 = vld [vmem:[%s3723] sm:$0xff]
        %v3725 = vld [vmem:[%s3723 + $0x8] sm:$0xff]
        %v3726 = vld [vmem:[%s3723 + $0x10] sm:$0xff]
        %v3727 = vld [vmem:[%s3723 + $0x18] sm:$0xff]
        %v3728 = vld [vmem:[%s3723 + $0x20] sm:$0xff]
        %v3729 = vld [vmem:[%s3723 + $0x28] sm:$0xff]
        %v3730 = vld [vmem:[%s3723 + $0x30] sm:$0xff]
        %v3731 = vld [vmem:[%s3723 + $0x38] sm:$0xff]
        %v3732 = vld [vmem:[%s3723 + $0x40] sm:$0xff]
        %v3733 = vld [vmem:[%s3723 + $0x48] sm:$0xff]
        %v3734 = vld [vmem:[%s3723 + $0x50] sm:$0xff]
        %v3735 = vld [vmem:[%s3723 + $0x58] sm:$0xff]
        %v3736 = vld [vmem:[%s3723 + $0x60] sm:$0xff]
        %v3737 = vld [vmem:[%s3723 + $0x68] sm:$0xff]
        %v3738 = vld [vmem:[%s3723 + $0x70] sm:$0xff]
        %v3739 = vld [vmem:[%s3723 + $0x78] sm:$0xff]
        %v3740 = vrot.slane %v3448, 3
        %v3741 = vsel %vm563, %v3740, 0
        %3743 = vmatprep.subr.mxu0 %v3725
        %3744 = vmatpush1.msra.mxu0 %v3724
        %3745 = vmatprep.subr.mxu0 %v3727
        %3746 = vmatpush1.msra.mxu0 %v3726
        %3747 = vmatprep.subr.mxu0 %v3729
        %3748 = vmatpush1.msra.mxu0 %v3728
        %3749 = vmatprep.subr.mxu0 %v3731
        %3750 = vmatpush1.msra.mxu0 %v3730
        %3751 = vmatprep.subr.mxu0 %v3733
        %3752 = vmatpush1.msra.mxu0 %v3732
        %3753 = vmatprep.subr.mxu0 %v3735
        %3754 = vmatpush1.msra.mxu0 %v3734
        %3755 = vmatprep.subr.mxu0 %v3737
        %3756 = vmatpush1.msra.mxu0 %v3736
        %3757 = vmatprep.subr.mxu0 %v3739
        %3758 = vmatpush1.msra.mxu0 %v3738
        %3759 = vmatprep.subr.mxu0 0.0
        %3760 = vmatpush1.msra.mxu0 0.0
        %3761 = vmatprep.subr.mxu0 0.0
        %3762 = vmatpush1.msra.mxu0 0.0
        %3763 = vmatprep.subr.mxu0 0.0
        %3764 = vmatpush1.msra.mxu0 0.0
        %3765 = vmatprep.subr.mxu0 0.0
        %3766 = vmatpush1.msra.mxu0 0.0
        %3767 = vmatprep.subr.mxu0 0.0
        %3768 = vmatpush1.msra.mxu0 0.0
        %3769 = vmatprep.subr.mxu0 0.0
        %3770 = vmatpush1.msra.mxu0 0.0
        %3771 = vmatprep.subr.mxu0 0.0
        %3772 = vmatpush1.msra.mxu0 0.0
        %3773 = vmatprep.subr.mxu0 0.0
        %3774 = vmatpush1.msra.mxu0 0.0
        %3775 = vmatprep.subr.mxu0 0.0
        %3776 = vmatpush1.msra.mxu0 0.0
        %3777 = vmatprep.subr.mxu0 0.0
        %3778 = vmatpush1.msra.mxu0 0.0
        %3779 = vmatprep.subr.mxu0 0.0
        %3780 = vmatpush1.msra.mxu0 0.0
        %3781 = vmatprep.subr.mxu0 0.0
        %3782 = vmatpush1.msra.mxu0 0.0
        %3783 = vmatprep.subr.mxu0 0.0
        %3784 = vmatpush1.msra.mxu0 0.0
        %3785 = vmatprep.subr.mxu0 0.0
        %3786 = vmatpush1.msra.mxu0 0.0
        %3787 = vmatprep.subr.mxu0 0.0
        %3788 = vmatpush1.msra.mxu0 0.0
        %3789 = vmatprep.subr.mxu0 0.0
        %3790 = vmatpush1.msra.mxu0 0.0
        %3791 = vmatprep.subr.mxu0 0.0
        %3792 = vmatpush1.msra.mxu0 0.0
        %3793 = vmatprep.subr.mxu0 0.0
        %3794 = vmatpush1.msra.mxu0 0.0
        %3795 = vmatprep.subr.mxu0 0.0
        %3796 = vmatpush1.msra.mxu0 0.0
        %3797 = vmatprep.subr.mxu0 0.0
        %3798 = vmatpush1.msra.mxu0 0.0
        %3799 = vmatprep.subr.mxu0 0.0
        %3800 = vmatpush1.msra.mxu0 0.0
        %3801 = vmatprep.subr.mxu0 0.0
        %3802 = vmatpush1.msra.mxu0 0.0
        %3803 = vmatprep.subr.mxu0 0.0
        %3804 = vmatpush1.msra.mxu0 0.0
        %3805 = vmatprep.subr.mxu0 0.0
        %3806 = vmatpush1.msra.mxu0 0.0
        %3807 = vmatprep.mubr.f32.mxu0 0.0
        %3808 = vmatmul.mubr.f32.gmra.mrb[0].mxu0 %v3741
        %v3809 = vpop.f32.mrb[0].mxu0
        %v3810 = vadd.f32 0.0, %v3809
        %v3811 = vpop.f32.mrb[0].mxu0
        %v3812 = vadd.f32 0.0, %v3811
        %3813 = vdwg.mxu0
        %v3814 = vadd.f32 %v3721, %v3810
        %v3815 = vadd.f32 %v3722, %v3812
        %v3816 = vld [vmem:[%s11] sm:$0x3]
        %v3818 = vlaneseq
        %v3819 = vshrl.u32 %v3818, 7
        %v3820 = vsub.s32 0, %v3819
        %v3821 = vrot.slane %v3816, %v3820
        %v3822 = vlaneseq
        %v3823 = vshrl.u32 %v3822, 7
        %v3824 = vsub.s32 1, %v3823
        %v3825 = vrot.slane %v3816, %v3824
        %v3828 = vadd.f32 %v3814, %v3821
        %v3829 = vadd.f32 %v3815, %v3825
        %v3830 = vmax.f32 %v3828, 0.0
        %v3831 = vmax.f32 %v3829, 0.0
        %v3832 = vld [vmem:[#allocation11] sm:$0xff]
        %v3833 = vld [vmem:[#allocation11 + $0x8] sm:$0xff]
        %v3834 = vld [vmem:[#allocation11 + $0x10] sm:$0xff]
        %v3835 = vld [vmem:[#allocation11 + $0x18] sm:$0xff]
        %v3836 = vld [vmem:[#allocation11 + $0x20] sm:$0xff]
        %v3837 = vld [vmem:[#allocation11 + $0x28] sm:$0xff]
        %v3838 = vld [vmem:[#allocation11 + $0x30] sm:$0xff]
        %v3839 = vld [vmem:[#allocation11 + $0x38] sm:$0xff]
        %v3840 = vld [vmem:[#allocation11 + $0x40] sm:$0xff]
        %v3841 = vld [vmem:[#allocation11 + $0x48] sm:$0xff]
        %v3842 = vld [vmem:[#allocation11 + $0x50] sm:$0xff]
        %v3843 = vld [vmem:[#allocation11 + $0x58] sm:$0xff]
        %v3844 = vld [vmem:[#allocation11 + $0x60] sm:$0xff]
        %v3845 = vld [vmem:[#allocation11 + $0x68] sm:$0xff]
        %v3846 = vld [vmem:[#allocation11 + $0x70] sm:$0xff]
        %v3847 = vld [vmem:[#allocation11 + $0x78] sm:$0xff]
        %v3848 = vld [vmem:[#allocation11 + $0x80] sm:$0xff]
        %v3849 = vld [vmem:[#allocation11 + $0x88] sm:$0xff]
        %v3850 = vld [vmem:[#allocation11 + $0x90] sm:$0xff]
        %v3851 = vld [vmem:[#allocation11 + $0x98] sm:$0xff]
        %v3852 = vld [vmem:[#allocation11 + $0xa0] sm:$0xff]
        %v3853 = vld [vmem:[#allocation11 + $0xa8] sm:$0xff]
        %v3854 = vld [vmem:[#allocation11 + $0xb0] sm:$0xff]
        %v3855 = vld [vmem:[#allocation11 + $0xb8] sm:$0xff]
        %v3856 = vld [vmem:[#allocation11 + $0xc0] sm:$0xff]
        %v3857 = vld [vmem:[#allocation11 + $0xc8] sm:$0xff]
        %v3858 = vld [vmem:[#allocation11 + $0xd0] sm:$0xff]
        %v3859 = vld [vmem:[#allocation11 + $0xd8] sm:$0xff]
        %v3860 = vld [vmem:[#allocation11 + $0xe0] sm:$0xff]
        %v3861 = vld [vmem:[#allocation11 + $0xe8] sm:$0xff]
        %v3862 = vld [vmem:[#allocation11 + $0xf0] sm:$0xff]
        %v3863 = vld [vmem:[#allocation11 + $0xf8] sm:$0xff]
        %v3864 = vld [vmem:[%s13] sm:$0x1]
        %3865 = vmatprep.subr.mxu0 0.0
        %3866 = vmatpush1.msra.mxu0 %v3832
        %3867 = vmatprep.subr.mxu0 0.0
        %3868 = vmatpush1.msra.mxu0 %v3833
        %3869 = vmatprep.subr.mxu0 0.0
        %3870 = vmatpush1.msra.mxu0 %v3834
        %3871 = vmatprep.subr.mxu0 0.0
        %3872 = vmatpush1.msra.mxu0 %v3835
        %3873 = vmatprep.subr.mxu0 0.0
        %3874 = vmatpush1.msra.mxu0 %v3836
        %3875 = vmatprep.subr.mxu0 0.0
        %3876 = vmatpush1.msra.mxu0 %v3837
        %3877 = vmatprep.subr.mxu0 0.0
        %3878 = vmatpush1.msra.mxu0 %v3838
        %3879 = vmatprep.subr.mxu0 0.0
        %3880 = vmatpush1.msra.mxu0 %v3839
        %3881 = vmatprep.subr.mxu0 0.0
        %3882 = vmatpush1.msra.mxu0 %v3840
        %3883 = vmatprep.subr.mxu0 0.0
        %3884 = vmatpush1.msra.mxu0 %v3841
        %3885 = vmatprep.subr.mxu0 0.0
        %3886 = vmatpush1.msra.mxu0 %v3842
        %3887 = vmatprep.subr.mxu0 0.0
        %3888 = vmatpush1.msra.mxu0 %v3843
        %3889 = vmatprep.subr.mxu0 0.0
        %3890 = vmatpush1.msra.mxu0 %v3844
        %3891 = vmatprep.subr.mxu0 0.0
        %3892 = vmatpush1.msra.mxu0 %v3845
        %3893 = vmatprep.subr.mxu0 0.0
        %3894 = vmatpush1.msra.mxu0 %v3846
        %3895 = vmatprep.subr.mxu0 0.0
        %3896 = vmatpush1.msra.mxu0 %v3847
        %3897 = vmatprep.subr.mxu0 0.0
        %3898 = vmatpush1.msra.mxu0 %v3848
        %3899 = vmatprep.subr.mxu0 0.0
        %3900 = vmatpush1.msra.mxu0 %v3849
        %3901 = vmatprep.subr.mxu0 0.0
        %3902 = vmatpush1.msra.mxu0 %v3850
        %3903 = vmatprep.subr.mxu0 0.0
        %3904 = vmatpush1.msra.mxu0 %v3851
        %3905 = vmatprep.subr.mxu0 0.0
        %3906 = vmatpush1.msra.mxu0 %v3852
        %3907 = vmatprep.subr.mxu0 0.0
        %3908 = vmatpush1.msra.mxu0 %v3853
        %3909 = vmatprep.subr.mxu0 0.0
        %3910 = vmatpush1.msra.mxu0 %v3854
        %3911 = vmatprep.subr.mxu0 0.0
        %3912 = vmatpush1.msra.mxu0 %v3855
        %3913 = vmatprep.subr.mxu0 0.0
        %3914 = vmatpush1.msra.mxu0 %v3856
        %3915 = vmatprep.subr.mxu0 0.0
        %3916 = vmatpush1.msra.mxu0 %v3857
        %3917 = vmatprep.subr.mxu0 0.0
        %3918 = vmatpush1.msra.mxu0 %v3858
        %3919 = vmatprep.subr.mxu0 0.0
        %3920 = vmatpush1.msra.mxu0 %v3859
        %3921 = vmatprep.subr.mxu0 0.0
        %3922 = vmatpush1.msra.mxu0 %v3860
        %3923 = vmatprep.subr.mxu0 0.0
        %3924 = vmatpush1.msra.mxu0 %v3861
        %3925 = vmatprep.subr.mxu0 0.0
        %3926 = vmatpush1.msra.mxu0 %v3862
        %3927 = vmatprep.subr.mxu0 0.0
        %3928 = vmatpush1.msra.mxu0 %v3863
        %3929 = vmatprep.mubr.f32.mxu0 %v3831
        %3930 = vmatmul.mubr.f32.gmra.mrb[0].mxu0 %v3830
        %v3931 = vpop.f32.mrb[0].mxu0
        %v3932 = vadd.f32 %v3864, %v3931
        %v3933 = vpop.f32.mrb[0].mxu0
        %3934 = vdwg.mxu0
        %v3935 = vlaneseq
        %v3936 = vand.u32 %v3935, 127
        %vm3937 = vcmp.lt.s32.totalorder %v3936, 6
        %v3938 = vsel %vm3937, 1, 0
        %v3939 = vcvt.s32.f32 %v3938
        %v3940 = vmul.f32 %v3932, %v3939
        %vm3941 = vcmp.eq.s32.totalorder %v3936, 6
        %v3942 = vsel %vm3941, %v3932, 0.0
        %vm3943 = vcmask 1040384
        %v3944 = vsel %vm3943, %v3942, 0.0
        %3945 = vadd.xlane.f32.xlu0 %v3944
        %v3946 = vpop.xlane.xlu0 %3945
        %v3947 = vsel %vm3943, %v3940, 0.0
        %3948 = vadd.xlane.f32.xlu0 %v3947
        %v3949 = vpop.xlane.xlu0 %3948
        %v3950 = vmul.f32 %v3949, 0.16666667
        %v3951 = vadd.f32 %v3940, %v3946
        %v3952 = vsub.f32 %v3951, %v3950
        %v3953 = vmul.f32 %v3939, %v3952
        %3954 = vst [vmem:[%s547] sm:$0x1] %v3953
        %s3955 = sand.u32 %s339, 1
        %s3956 = scalar_lea.sflag [#allocation4], %s3955
        %s3957 = sand.u32 %s339, 1
        %s3958 = scalar_lea.vmem [#allocation13], %s3957
        // Predicated region
        $region101: #{dueling_dqn_forward.1} parent=75 // pred_check
          %p3959 = pneg %p349
        $region102: #{dueling_dqn_forward.1} parent=75 // pred_check_branch
          %3961 = sbr.rel (%p3959) target = $region104
        $region103: #{dueling_dqn_forward.1} parent=75 // pred_region
          %s3963 = ssub.s32 16, 16
          %3964 = vsyncadd %s3956, %s3963
          %s3965 = smul.addr %s32, 16
          %s3966 = scalar_lea.hbm %s14, %s3965
          %s3968 = sshll.u32 %s3958, 4
          %s3969 = int_to_ptr.vmem [resolvable:$true] %s3968
          %3971 = dma.vmem_to_hbm [thread:$0]  %s3969, 16, %s3966, %s3956
        $region104: #{dueling_dqn_forward.1} parent=75 // pred_fallthru
          _
      $region76: #{dueling_dqn_forward.1} parent=5 // pred_fallthru
        _
      %p3972 = scmp.le.s32.totalorder 2, %s27
      // Predicated region
      $region105: #{dueling_dqn_forward.1} parent=5 // pred_check
        %p3973 = pneg %p3972
      $region106: #{dueling_dqn_forward.1} parent=5 // pred_check_branch
        %3975 = sbr.rel (%p3973) target = $region108
      $region107: #{dueling_dqn_forward.1} parent=5 // pred_region
        %s3976 = ssub.s32 %s27, 2
        // Predicated region
        $region109: #{dueling_dqn_forward.1} parent=107 // pred_check
          %p3977 = pneg %p355
        $region110: #{dueling_dqn_forward.1} parent=107 // pred_check_branch
          %3979 = sbr.rel (%p3977) target = $region112
        $region111: #{dueling_dqn_forward.1} parent=107 // pred_region
          %s3980 = sand.u32 %s340, 1
          %s3981 = scalar_lea.sflag [#allocation4], %s3980
          %s3982 = sand.u32 %s340, 1
          %s3983 = scalar_lea.vmem [#allocation13], %s3982
          %3984 = dma.done %s3981, 16
        $region112: #{dueling_dqn_forward.1} parent=107 // pred_fallthru
          _
      $region108: #{dueling_dqn_forward.1} parent=5 // pred_fallthru
        _
    $region6: #{dueling_dqn_forward.1} parent=1 // loop_footer
      %s31 = sadd.s32 1, %s27
    $region7: #{dueling_dqn_forward.1} parent=1 // loop_footer_branch
      %26 = sbr.rel target = $region3
    $region8: #{dueling_dqn_forward.1} parent=1 // loop_exit
      _
    %3985 = vsyncpa [#allocation3], 1
    %s3986 = scalar_lea.sflag [#allocation3], 1
    %3987 = vsyncpa %s3986, 1
    %3988 = vsyncpa [#allocation6], 1
    %3989 = vsyncpa [#allocation9], 1
    %3990 = vsyncpa [#allocation12], 1
    %3991 = vsyncpa [#allocation4], 1
    %s3992 = scalar_lea.sflag [#allocation4], 1
    %3993 = vsyncpa %s3992, 1

</llo_original>
